<compile_context>
chip_gen: v6e
topology: v6e:2x2x1
jax: 0.10.0
libtpu: 0.0.40
codegen_flags: <defaults>
</compile_context>

<pallas_src>
import math

import jax
import jax.numpy as jnp
import numpy as np
from jax import lax
from jax.experimental import pallas as pl
from jax.experimental.pallas import tpu as pltpu

# Fixed architecture constants from Decoder.__init__
MID = 15    # conv1 out channels
OUTC = 30   # conv2 out channels
K = 2       # kernel width (1, 2)


# ----------------------------------------------------------------------------
# Fused kernel.
#   lab  = onehot(c) routed through the label rows of the folded stage-1 weight
#   h1   = relu(z @ Wcz + lab + bc)          # Linear o conv1 folded   (B, MID*W1)
#   h2   = relu(h1 @ Wc2 + bc2)              # conv2 folded            (B, OUTC*W2)
#   x    = bout + sum_b (mask[b] * h2[b]) @ wperm[b]   # out-Linear with the NCHW
#                                            # .view(-1, hidden) permutation folded
#                                            # into per-sample masks + permuted wout
# ----------------------------------------------------------------------------
def _decoder_kernel(c_ref, z_ref, wcz_ref, wlab_ref, bc_ref,
                    wc2_ref, bc2_ref, mask_ref, wperm_ref, bout_ref, o_ref):
    B = z_ref.shape[0]
    num_labels = wlab_ref.shape[0]
    mw1 = wlab_ref.shape[1]

    # --- conditional path folded in (replaces wrapper one_hot + concat) ---------
    lab_contrib = jnp.zeros((B, mw1), jnp.float32)
    for lab in range(num_labels):                      # num_labels == 2, unrolled
        sel = (c_ref[...] == lab).astype(jnp.float32)  # (B, 1)
        lab_contrib = lab_contrib + sel * wlab_ref[lab:lab + 1, :]

    # --- stage 1: (Linear o conv1) as one matmul + ReLU --------------------------
    h1 = jnp.dot(z_ref[...], wcz_ref[...].astype(jnp.float32),
                 preferred_element_type=jnp.float32)
    h1 = jnp.maximum(h1 + lab_contrib + bc_ref[...], 0.0)          # (B, MID*W1)

    # --- stage 2: conv2 as one dense bf16 MXU matmul + ReLU ----------------------
    h2 = jnp.dot(h1.astype(jnp.bfloat16), wc2_ref[...],
                 preferred_element_type=jnp.float32)
    h2 = jnp.maximum(h2 + bc2_ref[...], 0.0)                       # (B, OUTC*W2)
    h2b = h2.astype(jnp.bfloat16)

    # --- stage 3: final Linear with the .view permutation via masks + wperm ------
    acc = jnp.zeros(o_ref.shape, jnp.float32) + bout_ref[...]      # (B, L1)
    for b in range(B):                                             # B tiny, unrolled
        masked = mask_ref[b] * h2b[b:b + 1, :]                     # (B, hidden) bf16
        acc = acc + jnp.dot(masked, wperm_ref[b],
                            preferred_element_type=jnp.float32)
    o_ref[...] = acc                                               # single store


# ----------------------------------------------------------------------------
# One-time host-side weight folding (numpy; outside the forward path).
# ----------------------------------------------------------------------------
def fold_params(params, batch_size, conditional, num_labels):
    w1 = np.asarray(params["w1"], np.float32)                  # (L0, in)
    b1 = np.asarray(params["b1"], np.float32)                  # (L0,)
    c1w = np.asarray(params["c1w"], np.float32).reshape(MID, K)
    c1b = np.asarray(params["c1b"], np.float32)
    c2w = np.asarray(params["c2w"], np.float32).reshape(OUTC, MID, K)
    c2b = np.asarray(params["c2b"], np.float32)
    wout = np.asarray(params["wout"], np.float32)               # (L1, hidden)
    bout = np.asarray(params["bout"], np.float32)               # (L1,)

    L0, in_size = w1.shape
    W1 = L0 - K + 1
    W2 = W1 - K + 1
    hidden = OUTC * W2
    L1 = bout.shape[0]
    B = batch_size
    latent = in_size - (num_labels if conditional else 0)

    # ---- Stage 1: Linear o conv1.  Columns channel-major: q1 = ic*W1 + w ----
    Wc = np.zeros((in_size, MID * W1), np.float32)
    bc = np.zeros((MID * W1,), np.float32)
    for ic in range(MID):
        for k in range(K):
            Wc[:, ic * W1:(ic + 1) * W1] += w1[k:k + W1, :].T * c1w[ic, k]
            bc[ic * W1:(ic + 1) * W1] += b1[k:k + W1] * c1w[ic, k]
        bc[ic * W1:(ic + 1) * W1] += c1b[ic]
    Wcz = Wc[:latent]
    Wlab = Wc[latent:] if conditional else np.zeros((1, MID * W1), np.float32)

    # ---- Stage 2: conv2 as a dense (MID*W1, OUTC*W2) matrix.  Cols q2 = oc*W2+w ----
    Wc2_4d = np.zeros((MID, W1, OUTC, W2), np.float32)
    for k in range(K):
        for w in range(W2):
            Wc2_4d[:, w + k, :, w] += c2w[:, :, k].T            # (MID, OUTC)
    Wc2 = Wc2_4d.reshape(MID * W1, OUTC * W2)
    bc2 = np.repeat(c2b, W2).astype(np.float32)                 # (OUTC*W2,), oc-major

    # ---- Stage 3: compact permuted wout + row-selection masks --------------------
    # h2[b, q2=(oc*W2+w)] is PyTorch h2[0, oc, b, w]; flat f = oc*B*W2 + b*W2 + w;
    # after .view(-1, hidden): row r = f // hidden, column = f % hidden.
    q2 = np.arange(hidden)
    oc = q2 // W2
    w = q2 % W2
    mask = np.zeros((B, B, hidden), np.float32)
    wperm = np.zeros((B, hidden, L1), np.float32)
    for b in range(B):
        f = oc * (B * W2) + b * W2 + w
        r = f // hidden
        col = f % hidden
        mask[b, r, q2] = 1.0
        wperm[b] = wout[:, col].T                               # (hidden, L1)

    return dict(
        Wcz=jnp.asarray(Wcz, jnp.bfloat16),
        Wlab=jnp.asarray(Wlab, jnp.float32),
        bc=jnp.asarray(bc[None, :], jnp.float32),
        Wc2=jnp.asarray(Wc2, jnp.bfloat16),
        bc2=jnp.asarray(bc2[None, :], jnp.float32),
        mask=jnp.asarray(mask, jnp.bfloat16),
        wperm=jnp.asarray(wperm, jnp.bfloat16),
        bout=jnp.asarray(bout[None, :], jnp.float32),
        L1=L1, B=B, latent=latent,
    )


# ----------------------------------------------------------------------------
# Python wrapper: one pallas_call, no extra XLA glue.
# ----------------------------------------------------------------------------
def decoder_forward(folded, z, c=None):
    B, latent = z.shape
    assert B == folded["B"], "stage-3 fold was built for a different batch size"
    assert latent == folded["latent"]
    if c is None:
        c_arr = jnp.zeros((B, 1), jnp.int32)
    else:
        c_arr = jnp.asarray(c, jnp.int32).reshape(B, 1)

    vmem = pl.BlockSpec(memory_space=pltpu.MemorySpace.VMEM)
    return pl.pallas_call(
        _decoder_kernel,
        out_shape=jax.ShapeDtypeStruct((B, folded["L1"]), jnp.float32),
        in_specs=[vmem] * 10,
        out_specs=vmem,
    )(c_arr, z.astype(jnp.float32),
      folded["Wcz"], folded["Wlab"], folded["bc"],
      folded["Wc2"], folded["bc2"],
      folded["mask"], folded["wperm"], folded["bout"])


# ----------------------------------------------------------------------------
# Deterministic parameter init (PyTorch-like uniform(-1/sqrt(fan_in), ...))
# ----------------------------------------------------------------------------
def init_params(key, layer_sizes, latent_size, conditional, num_labels):
    in_size = latent_size + (num_labels if conditional else 0)
    L0, L1 = layer_sizes
    hidden = OUTC * (L0 - 2)
    ks = jax.random.split(key, 8)

    def u(k, shape, fan_in):
        b = 1.0 / math.sqrt(fan_in)
        return jax.random.uniform(k, shape, jnp.float32, -b, b)

    return dict(
        w1=u(ks[0], (L0, in_size), in_size),
        b1=u(ks[1], (L0,), in_size),
        c1w=u(ks[2], (MID, 1, 1, K), K),
        c1b=u(ks[3], (MID,), K),
        c2w=u(ks[4], (OUTC, MID, 1, K), MID * K),
        c2b=u(ks[5], (OUTC,), MID * K),
        wout=u(ks[6], (L1, hidden), hidden),
        bout=u(ks[7], (L1,), hidden),
    )


# Pure-JAX reference (mirrors the PyTorch forward exactly) for validation.
def idx2onehot(idx, n=2):
    if idx.ndim == 1:
        idx = idx[:, None]
    return jax.nn.one_hot(idx[:, 0], n, dtype=jnp.float32)


def reference_forward(params, z, c, conditional=True):
    if conditional:
        z = jnp.concatenate([z, idx2onehot(c, 2)], axis=-1)
    h = jnp.dot(z, params["w1"].T,
                precision=lax.Precision.HIGHEST) + params["b1"]
    x = h[None, None]                               # (1, 1, B, L0) NCHW
    dn = ("NCHW", "OIHW", "NCHW")
    h1 = lax.conv_general_dilated(x, params["c1w"], (1, 1), "VALID",
                                  dimension_numbers=dn,
                                  precision=lax.Precision.HIGHEST)
    h1 = jnp.maximum(h1 + params["c1b"][None, :, None, None], 0.0)
    # F.max_pool2d with window (1, step=1) is the identity -> elided.
    h2 = lax.conv_general_dilated(h1, params["c2w"], (1, 1), "VALID",
                                  dimension_numbers=dn,
                                  precision=lax.Precision.HIGHEST)
    h2 = jnp.maximum(h2 + params["c2b"][None, :, None, None], 0.0)
    hidden = OUTC * (h.shape[1] - 2)
    h2f = h2.reshape(-1, hidden)
    return jnp.dot(h2f, params["wout"].T,
                   precision=lax.Precision.HIGHEST) + params["bout"]


if __name__ == "__main__":
    layer_sizes = [32, 16]
    latent_size = 8
    conditional = True
    num_labels = 2
    B = 4

    key = jax.random.PRNGKey(0)
    kp, kz, kc = jax.random.split(key, 3)
    params = init_params(kp, layer_sizes, latent_size, conditional, num_labels)
    folded = fold_params(params, B, conditional, num_labels)

    z = jax.random.normal(kz, (B, latent_size), jnp.float32)
    c = jax.random.randint(kc, (B,), 0, 2, jnp.int32)   # labels in {0, 1}

    out = decoder_forward(folded, z, c)
    out = jax.block_until_ready(out)

    ref = reference_forward(params, z, c, conditional=conditional)
    np.testing.assert_allclose(np.asarray(out), np.asarray(ref),
                               rtol=1e-2, atol=1e-2)

    print("KERNEL_OK")
</pallas_src>

<mosaic_0001>
module attributes {stable_mosaic.version = 11 : i64} {
  func.func @_decoder_kernel(%arg0: memref<4x1xi32, #tpu.memory_space<vmem>>, %arg1: memref<4x8xf32, #tpu.memory_space<vmem>>, %arg2: memref<8x465xbf16, #tpu.memory_space<vmem>>, %arg3: memref<2x465xf32, #tpu.memory_space<vmem>>, %arg4: memref<1x465xf32, #tpu.memory_space<vmem>>, %arg5: memref<465x900xbf16, #tpu.memory_space<vmem>>, %arg6: memref<1x900xf32, #tpu.memory_space<vmem>>, %arg7: memref<4x4x900xbf16, #tpu.memory_space<vmem>>, %arg8: memref<4x900x16xbf16, #tpu.memory_space<vmem>>, %arg9: memref<1x16xf32, #tpu.memory_space<vmem>>, %arg10: memref<4x16xf32, #tpu.memory_space<vmem>>) attributes {dimension_semantics = [], scalar_prefetch = 0 : i64, scratch_operands = 0 : i64, tpu.core_type = #tpu.core_type<tc>} {
    %cst = arith.constant 0.000000e+00 : f32
    %0 = vector.broadcast %cst : f32 to vector<4x465xf32>
    %c0 = arith.constant 0 : index
    %c0_0 = arith.constant 0 : index
    %1 = vector.load %arg0[%c0, %c0_0] : memref<4x1xi32, #tpu.memory_space<vmem>>, vector<4x1xi32>
    %c0_i32 = arith.constant 0 : i32
    %2 = vector.broadcast %c0_i32 : i32 to vector<4x1xi32>
    %3 = arith.cmpi eq, %1, %2 : vector<4x1xi32>
    %4 = arith.extui %3 : vector<4x1xi1> to vector<4x1xi32>
    %5 = arith.sitofp %4 : vector<4x1xi32> to vector<4x1xf32>
    %c0_1 = arith.constant 0 : index
    %c0_2 = arith.constant 0 : index
    %6 = vector.load %arg3[%c0_1, %c0_2] : memref<2x465xf32, #tpu.memory_space<vmem>>, vector<1x465xf32>
    %7 = vector.broadcast %5 : vector<4x1xf32> to vector<4x465xf32>
    %8 = vector.broadcast %6 : vector<1x465xf32> to vector<4x465xf32>
    %9 = arith.mulf %7, %8 : vector<4x465xf32>
    %10 = arith.addf %0, %9 : vector<4x465xf32>
    %c0_3 = arith.constant 0 : index
    %c0_4 = arith.constant 0 : index
    %11 = vector.load %arg0[%c0_3, %c0_4] : memref<4x1xi32, #tpu.memory_space<vmem>>, vector<4x1xi32>
    %c1_i32 = arith.constant 1 : i32
    %12 = vector.broadcast %c1_i32 : i32 to vector<4x1xi32>
    %13 = arith.cmpi eq, %11, %12 : vector<4x1xi32>
    %14 = arith.extui %13 : vector<4x1xi1> to vector<4x1xi32>
    %15 = arith.sitofp %14 : vector<4x1xi32> to vector<4x1xf32>
    %c1 = arith.constant 1 : index
    %c0_5 = arith.constant 0 : index
    %16 = vector.load %arg3[%c1, %c0_5] : memref<2x465xf32, #tpu.memory_space<vmem>>, vector<1x465xf32>
    %17 = vector.broadcast %15 : vector<4x1xf32> to vector<4x465xf32>
    %18 = vector.broadcast %16 : vector<1x465xf32> to vector<4x465xf32>
    %19 = arith.mulf %17, %18 : vector<4x465xf32>
    %20 = arith.addf %10, %19 : vector<4x465xf32>
    %c0_6 = arith.constant 0 : index
    %c0_7 = arith.constant 0 : index
    %21 = vector.load %arg1[%c0_6, %c0_7] : memref<4x8xf32, #tpu.memory_space<vmem>>, vector<4x8xf32>
    %c0_8 = arith.constant 0 : index
    %c0_9 = arith.constant 0 : index
    %22 = vector.load %arg2[%c0_8, %c0_9] : memref<8x465xbf16, #tpu.memory_space<vmem>>, vector<8x465xbf16>
    %23 = arith.extf %22 : vector<8x465xbf16> to vector<8x465xf32>
    %cst_10 = arith.constant dense<0.000000e+00> : vector<4x465xf32>
    %24 = tpu.matmul %21, %23, %cst_10 {dimension_numbers = #tpu.dot_dimension_numbers<[1], [0], [0], [1], [0, 0, 1, 1], [], []>} : vector<4x8xf32>, vector<8x465xf32>, vector<4x465xf32> -> vector<4x465xf32>
    %25 = arith.addf %24, %20 : vector<4x465xf32>
    %c0_11 = arith.constant 0 : index
    %c0_12 = arith.constant 0 : index
    %26 = vector.load %arg4[%c0_11, %c0_12] : memref<1x465xf32, #tpu.memory_space<vmem>>, vector<1x465xf32>
    %27 = vector.broadcast %26 : vector<1x465xf32> to vector<4x465xf32>
    %28 = arith.addf %25, %27 : vector<4x465xf32>
    %cst_13 = arith.constant 0.000000e+00 : f32
    %29 = vector.broadcast %cst_13 : f32 to vector<4x465xf32>
    %30 = arith.maximumf %28, %29 : vector<4x465xf32>
    %31 = arith.truncf %30 : vector<4x465xf32> to vector<4x465xbf16>
    %c0_14 = arith.constant 0 : index
    %c0_15 = arith.constant 0 : index
    %32 = vector.load %arg5[%c0_14, %c0_15] : memref<465x900xbf16, #tpu.memory_space<vmem>>, vector<465x900xbf16>
    %cst_16 = arith.constant dense<0.000000e+00> : vector<4x900xf32>
    %33 = tpu.matmul %31, %32, %cst_16 {dimension_numbers = #tpu.dot_dimension_numbers<[1], [0], [0], [1], [0, 0, 1, 1], [], []>} : vector<4x465xbf16>, vector<465x900xbf16>, vector<4x900xf32> -> vector<4x900xf32>
    %c0_17 = arith.constant 0 : index
    %c0_18 = arith.constant 0 : index
    %34 = vector.load %arg6[%c0_17, %c0_18] : memref<1x900xf32, #tpu.memory_space<vmem>>, vector<1x900xf32>
    %35 = vector.broadcast %34 : vector<1x900xf32> to vector<4x900xf32>
    %36 = arith.addf %33, %35 : vector<4x900xf32>
    %cst_19 = arith.constant 0.000000e+00 : f32
    %37 = vector.broadcast %cst_19 : f32 to vector<4x900xf32>
    %38 = arith.maximumf %36, %37 : vector<4x900xf32>
    %39 = arith.truncf %38 : vector<4x900xf32> to vector<4x900xbf16>
    %cst_20 = arith.constant 0.000000e+00 : f32
    %40 = vector.broadcast %cst_20 : f32 to vector<4x16xf32>
    %c0_21 = arith.constant 0 : index
    %c0_22 = arith.constant 0 : index
    %41 = vector.load %arg9[%c0_21, %c0_22] : memref<1x16xf32, #tpu.memory_space<vmem>>, vector<1x16xf32>
    %42 = vector.broadcast %41 : vector<1x16xf32> to vector<4x16xf32>
    %43 = arith.addf %40, %42 : vector<4x16xf32>
    %c0_23 = arith.constant 0 : index
    %c0_24 = arith.constant 0 : index
    %c0_25 = arith.constant 0 : index
    %44 = vector.load %arg7[%c0_23, %c0_24, %c0_25] : memref<4x4x900xbf16, #tpu.memory_space<vmem>>, vector<1x4x900xbf16>
    %45 = vector.shape_cast %44 : vector<1x4x900xbf16> to vector<4x900xbf16>
    %46 = vector.extract_strided_slice %39 {offsets = [0, 0], sizes = [1, 900], strides = [1, 1]} : vector<4x900xbf16> to vector<1x900xbf16>
    %47 = vector.broadcast %46 : vector<1x900xbf16> to vector<4x900xbf16>
    %48 = arith.mulf %45, %47 : vector<4x900xbf16>
    %c0_26 = arith.constant 0 : index
    %c0_27 = arith.constant 0 : index
    %c0_28 = arith.constant 0 : index
    %49 = vector.load %arg8[%c0_26, %c0_27, %c0_28] : memref<4x900x16xbf16, #tpu.memory_space<vmem>>, vector<1x900x16xbf16>
    %50 = vector.shape_cast %49 : vector<1x900x16xbf16> to vector<900x16xbf16>
    %cst_29 = arith.constant dense<0.000000e+00> : vector<4x16xf32>
    %51 = tpu.matmul %48, %50, %cst_29 {dimension_numbers = #tpu.dot_dimension_numbers<[1], [0], [0], [1], [0, 0, 1, 1], [], []>} : vector<4x900xbf16>, vector<900x16xbf16>, vector<4x16xf32> -> vector<4x16xf32>
    %52 = arith.addf %43, %51 : vector<4x16xf32>
    %c1_30 = arith.constant 1 : index
    %c0_31 = arith.constant 0 : index
    %c0_32 = arith.constant 0 : index
    %53 = vector.load %arg7[%c1_30, %c0_31, %c0_32] : memref<4x4x900xbf16, #tpu.memory_space<vmem>>, vector<1x4x900xbf16>
    %54 = vector.shape_cast %53 : vector<1x4x900xbf16> to vector<4x900xbf16>
    %55 = vector.extract_strided_slice %39 {offsets = [1, 0], sizes = [1, 900], strides = [1, 1]} : vector<4x900xbf16> to vector<1x900xbf16>
    %56 = vector.broadcast %55 : vector<1x900xbf16> to vector<4x900xbf16>
    %57 = arith.mulf %54, %56 : vector<4x900xbf16>
    %c1_33 = arith.constant 1 : index
    %c0_34 = arith.constant 0 : index
    %c0_35 = arith.constant 0 : index
    %58 = vector.load %arg8[%c1_33, %c0_34, %c0_35] : memref<4x900x16xbf16, #tpu.memory_space<vmem>>, vector<1x900x16xbf16>
    %59 = vector.shape_cast %58 : vector<1x900x16xbf16> to vector<900x16xbf16>
    %cst_36 = arith.constant dense<0.000000e+00> : vector<4x16xf32>
    %60 = tpu.matmul %57, %59, %cst_36 {dimension_numbers = #tpu.dot_dimension_numbers<[1], [0], [0], [1], [0, 0, 1, 1], [], []>} : vector<4x900xbf16>, vector<900x16xbf16>, vector<4x16xf32> -> vector<4x16xf32>
    %61 = arith.addf %52, %60 : vector<4x16xf32>
    %c2 = arith.constant 2 : index
    %c0_37 = arith.constant 0 : index
    %c0_38 = arith.constant 0 : index
    %62 = vector.load %arg7[%c2, %c0_37, %c0_38] : memref<4x4x900xbf16, #tpu.memory_space<vmem>>, vector<1x4x900xbf16>
    %63 = vector.shape_cast %62 : vector<1x4x900xbf16> to vector<4x900xbf16>
    %64 = vector.extract_strided_slice %39 {offsets = [2, 0], sizes = [1, 900], strides = [1, 1]} : vector<4x900xbf16> to vector<1x900xbf16>
    %65 = vector.broadcast %64 : vector<1x900xbf16> to vector<4x900xbf16>
    %66 = arith.mulf %63, %65 : vector<4x900xbf16>
    %c2_39 = arith.constant 2 : index
    %c0_40 = arith.constant 0 : index
    %c0_41 = arith.constant 0 : index
    %67 = vector.load %arg8[%c2_39, %c0_40, %c0_41] : memref<4x900x16xbf16, #tpu.memory_space<vmem>>, vector<1x900x16xbf16>
    %68 = vector.shape_cast %67 : vector<1x900x16xbf16> to vector<900x16xbf16>
    %cst_42 = arith.constant dense<0.000000e+00> : vector<4x16xf32>
    %69 = tpu.matmul %66, %68, %cst_42 {dimension_numbers = #tpu.dot_dimension_numbers<[1], [0], [0], [1], [0, 0, 1, 1], [], []>} : vector<4x900xbf16>, vector<900x16xbf16>, vector<4x16xf32> -> vector<4x16xf32>
    %70 = arith.addf %61, %69 : vector<4x16xf32>
    %c3 = arith.constant 3 : index
    %c0_43 = arith.constant 0 : index
    %c0_44 = arith.constant 0 : index
    %71 = vector.load %arg7[%c3, %c0_43, %c0_44] : memref<4x4x900xbf16, #tpu.memory_space<vmem>>, vector<1x4x900xbf16>
    %72 = vector.shape_cast %71 : vector<1x4x900xbf16> to vector<4x900xbf16>
    %73 = vector.extract_strided_slice %39 {offsets = [3, 0], sizes = [1, 900], strides = [1, 1]} : vector<4x900xbf16> to vector<1x900xbf16>
    %74 = vector.broadcast %73 : vector<1x900xbf16> to vector<4x900xbf16>
    %75 = arith.mulf %72, %74 : vector<4x900xbf16>
    %c3_45 = arith.constant 3 : index
    %c0_46 = arith.constant 0 : index
    %c0_47 = arith.constant 0 : index
    %76 = vector.load %arg8[%c3_45, %c0_46, %c0_47] : memref<4x900x16xbf16, #tpu.memory_space<vmem>>, vector<1x900x16xbf16>
    %77 = vector.shape_cast %76 : vector<1x900x16xbf16> to vector<900x16xbf16>
    %cst_48 = arith.constant dense<0.000000e+00> : vector<4x16xf32>
    %78 = tpu.matmul %75, %77, %cst_48 {dimension_numbers = #tpu.dot_dimension_numbers<[1], [0], [0], [1], [0, 0, 1, 1], [], []>} : vector<4x900xbf16>, vector<900x16xbf16>, vector<4x16xf32> -> vector<4x16xf32>
    %79 = arith.addf %70, %78 : vector<4x16xf32>
    %c0_49 = arith.constant 0 : index
    %c0_50 = arith.constant 0 : index
    %80 = vector.load %arg10[%c0_49, %c0_50] : memref<4x16xf32, #tpu.memory_space<vmem>>, vector<4x16xf32>
    tpu.vector_store %arg10[%c0_49, %c0_50], %79 {strides = array<i32>} : memref<4x16xf32, #tpu.memory_space<vmem>>, vector<4x16xf32>,
    return
  }
}

</mosaic_0001>

<llo_original>
// kernel: tpu_custom_call.1
$region0: #{tpu_custom_call.1}
  #allocation0 [shape = 'u32[]', space=smem, size = 0x4, offset = 0x4, fixed_abs, tag = 'smem constant byte address 0x4 - core index']
  #allocation1 [shape = 'u32[144,128]{1,0:T(1,128)}', space=vmem, size = 0x12000, scoped, tag = 'internal scratch']
  %s0 = inlined_call_operand.vmem [shape: s32[4,1], index: 0, kind: input, shape index: {}]
  %s1 = inlined_call_operand.vmem [shape: f32[4,8], index: 1, kind: input, shape index: {}]
  %s2 = inlined_call_operand.vmem [shape: bf16[8,465], index: 2, kind: input, shape index: {}]
  %s3 = inlined_call_operand.vmem [shape: f32[2,465], index: 3, kind: input, shape index: {}]
  %s4 = inlined_call_operand.vmem [shape: f32[1,465], index: 4, kind: input, shape index: {}]
  %s5 = inlined_call_operand.vmem [shape: bf16[465,900], index: 5, kind: input, shape index: {}]
  %s6 = inlined_call_operand.vmem [shape: f32[1,900], index: 6, kind: input, shape index: {}]
  %s7 = inlined_call_operand.vmem [shape: bf16[4,4,900], index: 7, kind: input, shape index: {}]
  %s8 = inlined_call_operand.vmem [shape: bf16[4,900,16], index: 8, kind: input, shape index: {}]
  %s9 = inlined_call_operand.vmem [shape: f32[1,16], index: 9, kind: input, shape index: {}]
  %s10 = inlined_call_operand.hbm [shape: f32[4,16], index: 10, kind: output, shape index: {}]
  %s11 = sld [smem:[#allocation0]]
  $region50: #{tpu_custom_call.1} parent=0
    _
  %s13 = ssub.s32 1, %s11
  %s14 = scalar_select 0, %s13, %s11
  $region1: #{tpu_custom_call.1} parent=0
    #allocation2 [shape = 'u8[2048]{0}', space=vmem, size = 0x800, scoped, tag = 'output window, operand 0, single buffered']
    #allocation3 [shape = 's32[1]{0}', space=sflag, size = 0x4, scoped, tag = 'scoped memory for tpu_custom_call.1']
    %15 = vsyncpa [#allocation3], 0
    // Predicated region
    $region2: #{tpu_custom_call.1} parent=1 // pred_check
      _
    $region3: #{tpu_custom_call.1} parent=1 // pred_check_branch
      %17 = sbr.rel (0) target = $region5
    $region4: #{tpu_custom_call.1} parent=1 // pred_region
      _
    $region5: #{tpu_custom_call.1} parent=1 // pred_fallthru
      _
    // Predicated region
    $region6: #{tpu_custom_call.1} parent=1 // pred_check
      _
    $region7: #{tpu_custom_call.1} parent=1 // pred_check_branch
      %19 = sbr.rel (0) target = $region9
    $region8: #{tpu_custom_call.1} parent=1 // pred_region
      _
    $region9: #{tpu_custom_call.1} parent=1 // pred_fallthru
      _
    // Predicated region
    $region10: #{tpu_custom_call.1} parent=1 // pred_check
      _
    $region11: #{tpu_custom_call.1} parent=1 // pred_check_branch
      %21 = sbr.rel (0) target = $region13
    $region12: #{tpu_custom_call.1} parent=1 // pred_region
      _
    $region13: #{tpu_custom_call.1} parent=1 // pred_fallthru
      _
    // Predicated region
    $region14: #{tpu_custom_call.1} parent=1 // pred_check
      _
    $region15: #{tpu_custom_call.1} parent=1 // pred_check_branch
      %23 = sbr.rel (0) target = $region17
    $region16: #{tpu_custom_call.1} parent=1 // pred_region
      _
    $region17: #{tpu_custom_call.1} parent=1 // pred_fallthru
      _
    // Predicated region
    $region18: #{tpu_custom_call.1} parent=1 // pred_check
      _
    $region19: #{tpu_custom_call.1} parent=1 // pred_check_branch
      %25 = sbr.rel (0) target = $region21
    $region20: #{tpu_custom_call.1} parent=1 // pred_region
      _
    $region21: #{tpu_custom_call.1} parent=1 // pred_fallthru
      _
    // Predicated region
    $region22: #{tpu_custom_call.1} parent=1 // pred_check
      _
    $region23: #{tpu_custom_call.1} parent=1 // pred_check_branch
      %27 = sbr.rel (0) target = $region25
    $region24: #{tpu_custom_call.1} parent=1 // pred_region
      _
    $region25: #{tpu_custom_call.1} parent=1 // pred_fallthru
      _
    // Predicated region
    $region26: #{tpu_custom_call.1} parent=1 // pred_check
      _
    $region27: #{tpu_custom_call.1} parent=1 // pred_check_branch
      %29 = sbr.rel (0) target = $region29
    $region28: #{tpu_custom_call.1} parent=1 // pred_region
      _
    $region29: #{tpu_custom_call.1} parent=1 // pred_fallthru
      _
    // Predicated region
    $region30: #{tpu_custom_call.1} parent=1 // pred_check
      _
    $region31: #{tpu_custom_call.1} parent=1 // pred_check_branch
      %31 = sbr.rel (0) target = $region33
    $region32: #{tpu_custom_call.1} parent=1 // pred_region
      _
    $region33: #{tpu_custom_call.1} parent=1 // pred_fallthru
      _
    // Predicated region
    $region34: #{tpu_custom_call.1} parent=1 // pred_check
      _
    $region35: #{tpu_custom_call.1} parent=1 // pred_check_branch
      %33 = sbr.rel (0) target = $region37
    $region36: #{tpu_custom_call.1} parent=1 // pred_region
      _
    $region37: #{tpu_custom_call.1} parent=1 // pred_fallthru
      _
    // Predicated region
    $region38: #{tpu_custom_call.1} parent=1 // pred_check
      _
    $region39: #{tpu_custom_call.1} parent=1 // pred_check_branch
      %35 = sbr.rel (0) target = $region41
    $region40: #{tpu_custom_call.1} parent=1 // pred_region
      _
    $region41: #{tpu_custom_call.1} parent=1 // pred_fallthru
      _
    %v37 = vld [vmem:[%s0] sm:$0xf]
    %vm38 = vcmp.eq.s32.totalorder %v37, 0
    %v39 = vsel %vm38, 1, 0
    %v40 = vcvt.s32.f32 %v39
    %v41 = vld [vmem:[%s3] ss:$2 sm:$0xf]
    %43 = vset.pattern.permute.xlu0 0
    %44 = vperm.xlu0 %43, %v40
    %v45 = vpop.permute.xlu0 %44
    %v48 = vlaneseq
    %v49 = vshrl.u32 %v48, 7
    %v50 = vsub.s32 0, %v49
    %v51 = vrot.slane %v41, %v50
    %v52 = vlaneseq
    %v53 = vshrl.u32 %v52, 7
    %v54 = vsub.s32 1, %v53
    %v55 = vrot.slane %v41, %v54
    %v56 = vlaneseq
    %v57 = vshrl.u32 %v56, 7
    %v58 = vsub.s32 2, %v57
    %v59 = vrot.slane %v41, %v58
    %v60 = vlaneseq
    %v61 = vshrl.u32 %v60, 7
    %v62 = vsub.s32 3, %v61
    %v63 = vrot.slane %v41, %v62
    %v68 = vmul.f32 %v45, %v51
    %v69 = vmul.f32 %v45, %v55
    %v70 = vmul.f32 %v45, %v59
    %v71 = vmul.f32 %v45, %v63
    %v72 = vadd.f32 %v68, 0.0
    %v73 = vadd.f32 %v69, 0.0
    %v74 = vadd.f32 %v70, 0.0
    %v75 = vadd.f32 %v71, 0.0
    %vm76 = vcmp.eq.s32.totalorder %v37, 1
    %v77 = vsel %vm76, 1, 0
    %v78 = vcvt.s32.f32 %v77
    %s79 = scalar_lea.vmem %s3, 1
    %v80 = vld [vmem:[%s79] ss:$2 sm:$0xf]
    %82 = vset.pattern.permute.xlu0 0
    %83 = vperm.xlu0 %82, %v78
    %v84 = vpop.permute.xlu0 %83
    %v87 = vlaneseq
    %v88 = vshrl.u32 %v87, 7
    %v89 = vsub.s32 0, %v88
    %v90 = vrot.slane %v80, %v89
    %v91 = vlaneseq
    %v92 = vshrl.u32 %v91, 7
    %v93 = vsub.s32 1, %v92
    %v94 = vrot.slane %v80, %v93
    %v95 = vlaneseq
    %v96 = vshrl.u32 %v95, 7
    %v97 = vsub.s32 2, %v96
    %v98 = vrot.slane %v80, %v97
    %v99 = vlaneseq
    %v100 = vshrl.u32 %v99, 7
    %v101 = vsub.s32 3, %v100
    %v102 = vrot.slane %v80, %v101
    %v107 = vmul.f32 %v84, %v90
    %v108 = vmul.f32 %v84, %v94
    %v109 = vmul.f32 %v84, %v98
    %v110 = vmul.f32 %v84, %v102
    %v111 = vadd.f32 %v72, %v107
    %v112 = vadd.f32 %v73, %v108
    %v113 = vadd.f32 %v74, %v109
    %v114 = vadd.f32 %v75, %v110
    %v115 = vld [vmem:[%s1] sm:$0xf]
    %v116 = vld [vmem:[%s2] sm:$0xff]
    %v117 = vld [vmem:[%s2 + $0x8] sm:$0xff]
    %v118 = vunpack.c.l.bf16 %v116
    %v119 = vunpack.c.h.bf16 %v116
    %v120 = vunpack.c.l.bf16 %v117
    %v121 = vunpack.c.h.bf16 %v117
    %vm122 = vcmask 64512
    %v124 = vsel %vm122, %v115, 0
    %126 = vmatprep.subr.mxu0 0.0
    %127 = vmatpush1.msra.mxu0 0.0
    %128 = vmatprep.subr.mxu0 0.0
    %129 = vmatpush1.msra.mxu0 0.0
    %130 = vmatprep.subr.mxu0 0.0
    %131 = vmatpush1.msra.mxu0 0.0
    %132 = vmatprep.subr.mxu0 0.0
    %133 = vmatpush1.msra.mxu0 0.0
    %134 = vmatprep.subr.mxu0 0.0
    %135 = vmatpush1.msra.mxu0 0.0
    %136 = vmatprep.subr.mxu0 0.0
    %137 = vmatpush1.msra.mxu0 0.0
    %138 = vmatprep.subr.mxu0 0.0
    %139 = vmatpush1.msra.mxu0 0.0
    %140 = vmatprep.subr.mxu0 0.0
    %141 = vmatpush1.msra.mxu0 0.0
    %142 = vmatprep.subr.mxu0 0.0
    %143 = vmatpush1.msra.mxu0 0.0
    %144 = vmatprep.subr.mxu0 0.0
    %145 = vmatpush1.msra.mxu0 0.0
    %146 = vmatprep.subr.mxu0 0.0
    %147 = vmatpush1.msra.mxu0 0.0
    %148 = vmatprep.subr.mxu0 0.0
    %149 = vmatpush1.msra.mxu0 0.0
    %150 = vmatprep.subr.mxu0 0.0
    %151 = vmatpush1.msra.mxu0 0.0
    %152 = vmatprep.subr.mxu0 0.0
    %153 = vmatpush1.msra.mxu0 0.0
    %154 = vmatprep.subr.mxu0 0.0
    %155 = vmatpush1.msra.mxu0 0.0
    %156 = vmatprep.subr.mxu0 %v119
    %157 = vmatpush1.msra.mxu0 %v118
    %158 = vmatprep.subr.mxu0 0.0
    %159 = vmatpush2.msra.mxu0 0.0
    %160 = vmatprep.subr.mxu0 0.0
    %161 = vmatpush2.msra.mxu0 0.0
    %162 = vmatprep.subr.mxu0 0.0
    %163 = vmatpush2.msra.mxu0 0.0
    %164 = vmatprep.subr.mxu0 0.0
    %165 = vmatpush2.msra.mxu0 0.0
    %166 = vmatprep.subr.mxu0 0.0
    %167 = vmatpush2.msra.mxu0 0.0
    %168 = vmatprep.subr.mxu0 0.0
    %169 = vmatpush2.msra.mxu0 0.0
    %170 = vmatprep.subr.mxu0 0.0
    %171 = vmatpush2.msra.mxu0 0.0
    %172 = vmatprep.subr.mxu0 0.0
    %173 = vmatpush2.msra.mxu0 0.0
    %174 = vmatprep.subr.mxu0 0.0
    %175 = vmatpush2.msra.mxu0 0.0
    %176 = vmatprep.subr.mxu0 0.0
    %177 = vmatpush2.msra.mxu0 0.0
    %178 = vmatprep.subr.mxu0 0.0
    %179 = vmatpush2.msra.mxu0 0.0
    %180 = vmatprep.subr.mxu0 0.0
    %181 = vmatpush2.msra.mxu0 0.0
    %182 = vmatprep.subr.mxu0 0.0
    %183 = vmatpush2.msra.mxu0 0.0
    %184 = vmatprep.subr.mxu0 0.0
    %185 = vmatpush2.msra.mxu0 0.0
    %186 = vmatprep.subr.mxu0 0.0
    %187 = vmatpush2.msra.mxu0 0.0
    %188 = vmatprep.subr.mxu0 0.0
    %189 = vmatpush2.msra.mxu0 0.0
    %190 = vmatprep.mubr.f32.mxu0 0.0
    %191 = vmatmul.mubr.f32.gmra.mxu0 %v124
    %v192 = vpop.f32.mrf.mxu0
    %v193 = vadd.f32 %v111, %v192
    %v194 = vpop.f32.mrf.mxu0
    %v195 = vadd.f32 %v112, %v194
    %196 = vdwg.mxu0
    %197 = vmatprep.subr.mxu0 0.0
    %198 = vmatpush1.msra.mxu0 0.0
    %199 = vmatprep.subr.mxu0 0.0
    %200 = vmatpush1.msra.mxu0 0.0
    %201 = vmatprep.subr.mxu0 0.0
    %202 = vmatpush1.msra.mxu0 0.0
    %203 = vmatprep.subr.mxu0 0.0
    %204 = vmatpush1.msra.mxu0 0.0
    %205 = vmatprep.subr.mxu0 0.0
    %206 = vmatpush1.msra.mxu0 0.0
    %207 = vmatprep.subr.mxu0 0.0
    %208 = vmatpush1.msra.mxu0 0.0
    %209 = vmatprep.subr.mxu0 0.0
    %210 = vmatpush1.msra.mxu0 0.0
    %211 = vmatprep.subr.mxu0 0.0
    %212 = vmatpush1.msra.mxu0 0.0
    %213 = vmatprep.subr.mxu0 0.0
    %214 = vmatpush1.msra.mxu0 0.0
    %215 = vmatprep.subr.mxu0 0.0
    %216 = vmatpush1.msra.mxu0 0.0
    %217 = vmatprep.subr.mxu0 0.0
    %218 = vmatpush1.msra.mxu0 0.0
    %219 = vmatprep.subr.mxu0 0.0
    %220 = vmatpush1.msra.mxu0 0.0
    %221 = vmatprep.subr.mxu0 0.0
    %222 = vmatpush1.msra.mxu0 0.0
    %223 = vmatprep.subr.mxu0 0.0
    %224 = vmatpush1.msra.mxu0 0.0
    %225 = vmatprep.subr.mxu0 0.0
    %226 = vmatpush1.msra.mxu0 0.0
    %227 = vmatprep.subr.mxu0 %v121
    %228 = vmatpush1.msra.mxu0 %v120
    %229 = vmatprep.subr.mxu0 0.0
    %230 = vmatpush2.msra.mxu0 0.0
    %231 = vmatprep.subr.mxu0 0.0
    %232 = vmatpush2.msra.mxu0 0.0
    %233 = vmatprep.subr.mxu0 0.0
    %234 = vmatpush2.msra.mxu0 0.0
    %235 = vmatprep.subr.mxu0 0.0
    %236 = vmatpush2.msra.mxu0 0.0
    %237 = vmatprep.subr.mxu0 0.0
    %238 = vmatpush2.msra.mxu0 0.0
    %239 = vmatprep.subr.mxu0 0.0
    %240 = vmatpush2.msra.mxu0 0.0
    %241 = vmatprep.subr.mxu0 0.0
    %242 = vmatpush2.msra.mxu0 0.0
    %243 = vmatprep.subr.mxu0 0.0
    %244 = vmatpush2.msra.mxu0 0.0
    %245 = vmatprep.subr.mxu0 0.0
    %246 = vmatpush2.msra.mxu0 0.0
    %247 = vmatprep.subr.mxu0 0.0
    %248 = vmatpush2.msra.mxu0 0.0
    %249 = vmatprep.subr.mxu0 0.0
    %250 = vmatpush2.msra.mxu0 0.0
    %251 = vmatprep.subr.mxu0 0.0
    %252 = vmatpush2.msra.mxu0 0.0
    %253 = vmatprep.subr.mxu0 0.0
    %254 = vmatpush2.msra.mxu0 0.0
    %255 = vmatprep.subr.mxu0 0.0
    %256 = vmatpush2.msra.mxu0 0.0
    %257 = vmatprep.subr.mxu0 0.0
    %258 = vmatpush2.msra.mxu0 0.0
    %259 = vmatprep.subr.mxu0 0.0
    %260 = vmatpush2.msra.mxu0 0.0
    %261 = vmatprep.mubr.f32.mxu0 0.0
    %262 = vmatmul.mubr.f32.gmra.mxu0 %v124
    %v263 = vpop.f32.mrf.mxu0
    %v264 = vadd.f32 %v113, %v263
    %v265 = vpop.f32.mrf.mxu0
    %v266 = vadd.f32 %v114, %v265
    %267 = vdwg.mxu0
    %v268 = vld [vmem:[%s4] sm:$0xf]
    %v270 = vlaneseq
    %v271 = vshrl.u32 %v270, 7
    %v272 = vsub.s32 0, %v271
    %v273 = vrot.slane %v268, %v272
    %v274 = vlaneseq
    %v275 = vshrl.u32 %v274, 7
    %v276 = vsub.s32 1, %v275
    %v277 = vrot.slane %v268, %v276
    %v278 = vlaneseq
    %v279 = vshrl.u32 %v278, 7
    %v280 = vsub.s32 2, %v279
    %v281 = vrot.slane %v268, %v280
    %v282 = vlaneseq
    %v283 = vshrl.u32 %v282, 7
    %v284 = vsub.s32 3, %v283
    %v285 = vrot.slane %v268, %v284
    %v290 = vadd.f32 %v193, %v273
    %v291 = vadd.f32 %v195, %v277
    %v292 = vadd.f32 %v264, %v281
    %v293 = vadd.f32 %v266, %v285
    %v294 = vmax.f32 %v290, 0.0
    %v295 = vmax.f32 %v291, 0.0
    %v296 = vmax.f32 %v292, 0.0
    %v297 = vmax.f32 %v293, 0.0
    %v298 = vpack.c.bf16 %v294, %v294
    %v299 = vpack.c.bf16 %v295, %v295
    %v300 = vpack.c.bf16 %v296, %v296
    %v301 = vpack.c.bf16 %v297, %v297
    %v302 = vld [vmem:[%s5] sm:$0xff]
    %v303 = vld [vmem:[%s5 + $0x8] sm:$0xff]
    %v304 = vld [vmem:[%s5 + $0x10] sm:$0xff]
    %v305 = vld [vmem:[%s5 + $0x18] sm:$0xff]
    %v306 = vld [vmem:[%s5 + $0x20] sm:$0xff]
    %v307 = vld [vmem:[%s5 + $0x28] sm:$0xff]
    %v308 = vld [vmem:[%s5 + $0x30] sm:$0xff]
    %v309 = vld [vmem:[%s5 + $0x38] sm:$0xff]
    %v310 = vld [vmem:[%s5 + $0x40] sm:$0xff]
    %v311 = vld [vmem:[%s5 + $0x48] sm:$0xff]
    %v312 = vld [vmem:[%s5 + $0x50] sm:$0xff]
    %v313 = vld [vmem:[%s5 + $0x58] sm:$0xff]
    %v314 = vld [vmem:[%s5 + $0x60] sm:$0xff]
    %v315 = vld [vmem:[%s5 + $0x68] sm:$0xff]
    %v316 = vld [vmem:[%s5 + $0x70] sm:$0xff]
    %v317 = vld [vmem:[%s5 + $0x78] sm:$0xff]
    %v318 = vld [vmem:[%s5 + $0x80] sm:$0xff]
    %v319 = vld [vmem:[%s5 + $0x88] sm:$0xff]
    %v320 = vld [vmem:[%s5 + $0x90] sm:$0xff]
    %v321 = vld [vmem:[%s5 + $0x98] sm:$0xff]
    %v322 = vld [vmem:[%s5 + $0xa0] sm:$0xff]
    %v323 = vld [vmem:[%s5 + $0xa8] sm:$0xff]
    %v324 = vld [vmem:[%s5 + $0xb0] sm:$0xff]
    %v325 = vld [vmem:[%s5 + $0xb8] sm:$0xff]
    %v326 = vld [vmem:[%s5 + $0xc0] sm:$0xff]
    %v327 = vld [vmem:[%s5 + $0xc8] sm:$0xff]
    %v328 = vld [vmem:[%s5 + $0xd0] sm:$0xff]
    %v329 = vld [vmem:[%s5 + $0xd8] sm:$0xff]
    %v330 = vld [vmem:[%s5 + $0xe0] sm:$0xff]
    %v331 = vld [vmem:[%s5 + $0xe8] sm:$0xff]
    %v332 = vld [vmem:[%s5 + $0xf0] sm:$0xff]
    %v333 = vld [vmem:[%s5 + $0xf8] sm:$0xff]
    %v334 = vld [vmem:[%s5 + $0x100] sm:$0xff]
    %v335 = vld [vmem:[%s5 + $0x108] sm:$0xff]
    %v336 = vld [vmem:[%s5 + $0x110] sm:$0xff]
    %v337 = vld [vmem:[%s5 + $0x118] sm:$0xff]
    %v338 = vld [vmem:[%s5 + $0x120] sm:$0xff]
    %v339 = vld [vmem:[%s5 + $0x128] sm:$0xff]
    %v340 = vld [vmem:[%s5 + $0x130] sm:$0xff]
    %v341 = vld [vmem:[%s5 + $0x138] sm:$0xff]
    %v342 = vld [vmem:[%s5 + $0x140] sm:$0xff]
    %v343 = vld [vmem:[%s5 + $0x148] sm:$0xff]
    %v344 = vld [vmem:[%s5 + $0x150] sm:$0xff]
    %v345 = vld [vmem:[%s5 + $0x158] sm:$0xff]
    %v346 = vld [vmem:[%s5 + $0x160] sm:$0xff]
    %v347 = vld [vmem:[%s5 + $0x168] sm:$0xff]
    %v348 = vld [vmem:[%s5 + $0x170] sm:$0xff]
    %v349 = vld [vmem:[%s5 + $0x178] sm:$0xff]
    %v350 = vld [vmem:[%s5 + $0x180] sm:$0xff]
    %v351 = vld [vmem:[%s5 + $0x188] sm:$0xff]
    %v352 = vld [vmem:[%s5 + $0x190] sm:$0xff]
    %v353 = vld [vmem:[%s5 + $0x198] sm:$0xff]
    %v354 = vld [vmem:[%s5 + $0x1a0] sm:$0xff]
    %v355 = vld [vmem:[%s5 + $0x1a8] sm:$0xff]
    %v356 = vld [vmem:[%s5 + $0x1b0] sm:$0xff]
    %v357 = vld [vmem:[%s5 + $0x1b8] sm:$0xff]
    %v358 = vld [vmem:[%s5 + $0x1c0] sm:$0xff]
    %v359 = vld [vmem:[%s5 + $0x1c8] sm:$0xff]
    %v360 = vld [vmem:[%s5 + $0x1d0] sm:$0xff]
    %v361 = vld [vmem:[%s5 + $0x1d8] sm:$0xff]
    %v362 = vld [vmem:[%s5 + $0x1e0] sm:$0xff]
    %v363 = vld [vmem:[%s5 + $0x1e8] sm:$0xff]
    %v364 = vld [vmem:[%s5 + $0x1f0] sm:$0xff]
    %v365 = vld [vmem:[%s5 + $0x1f8] sm:$0xff]
    %v366 = vld [vmem:[%s5 + $0x200] sm:$0xff]
    %v367 = vld [vmem:[%s5 + $0x208] sm:$0xff]
    %v368 = vld [vmem:[%s5 + $0x210] sm:$0xff]
    %v369 = vld [vmem:[%s5 + $0x218] sm:$0xff]
    %v370 = vld [vmem:[%s5 + $0x220] sm:$0xff]
    %v371 = vld [vmem:[%s5 + $0x228] sm:$0xff]
    %v372 = vld [vmem:[%s5 + $0x230] sm:$0xff]
    %v373 = vld [vmem:[%s5 + $0x238] sm:$0xff]
    %v374 = vld [vmem:[%s5 + $0x240] sm:$0xff]
    %v375 = vld [vmem:[%s5 + $0x248] sm:$0xff]
    %v376 = vld [vmem:[%s5 + $0x250] sm:$0xff]
    %v377 = vld [vmem:[%s5 + $0x258] sm:$0xff]
    %v378 = vld [vmem:[%s5 + $0x260] sm:$0xff]
    %v379 = vld [vmem:[%s5 + $0x268] sm:$0xff]
    %v380 = vld [vmem:[%s5 + $0x270] sm:$0xff]
    %v381 = vld [vmem:[%s5 + $0x278] sm:$0xff]
    %v382 = vld [vmem:[%s5 + $0x280] sm:$0xff]
    %v383 = vld [vmem:[%s5 + $0x288] sm:$0xff]
    %v384 = vld [vmem:[%s5 + $0x290] sm:$0xff]
    %v385 = vld [vmem:[%s5 + $0x298] sm:$0xff]
    %v386 = vld [vmem:[%s5 + $0x2a0] sm:$0xff]
    %v387 = vld [vmem:[%s5 + $0x2a8] sm:$0xff]
    %v388 = vld [vmem:[%s5 + $0x2b0] sm:$0xff]
    %v389 = vld [vmem:[%s5 + $0x2b8] sm:$0xff]
    %v390 = vld [vmem:[%s5 + $0x2c0] sm:$0xff]
    %v391 = vld [vmem:[%s5 + $0x2c8] sm:$0xff]
    %v392 = vld [vmem:[%s5 + $0x2d0] sm:$0xff]
    %v393 = vld [vmem:[%s5 + $0x2d8] sm:$0xff]
    %v394 = vld [vmem:[%s5 + $0x2e0] sm:$0xff]
    %v395 = vld [vmem:[%s5 + $0x2e8] sm:$0xff]
    %v396 = vld [vmem:[%s5 + $0x2f0] sm:$0xff]
    %v397 = vld [vmem:[%s5 + $0x2f8] sm:$0xff]
    %v398 = vld [vmem:[%s5 + $0x300] sm:$0xff]
    %v399 = vld [vmem:[%s5 + $0x308] sm:$0xff]
    %v400 = vld [vmem:[%s5 + $0x310] sm:$0xff]
    %v401 = vld [vmem:[%s5 + $0x318] sm:$0xff]
    %v402 = vld [vmem:[%s5 + $0x320] sm:$0xff]
    %v403 = vld [vmem:[%s5 + $0x328] sm:$0xff]
    %v404 = vld [vmem:[%s5 + $0x330] sm:$0xff]
    %v405 = vld [vmem:[%s5 + $0x338] sm:$0xff]
    %v406 = vld [vmem:[%s5 + $0x340] sm:$0xff]
    %v407 = vld [vmem:[%s5 + $0x348] sm:$0xff]
    %v408 = vld [vmem:[%s5 + $0x350] sm:$0xff]
    %v409 = vld [vmem:[%s5 + $0x358] sm:$0xff]
    %v410 = vld [vmem:[%s5 + $0x360] sm:$0xff]
    %v411 = vld [vmem:[%s5 + $0x368] sm:$0xff]
    %v412 = vld [vmem:[%s5 + $0x370] sm:$0xff]
    %v413 = vld [vmem:[%s5 + $0x378] sm:$0xff]
    %v414 = vld [vmem:[%s5 + $0x380] sm:$0xff]
    %v415 = vld [vmem:[%s5 + $0x388] sm:$0xff]
    %v416 = vld [vmem:[%s5 + $0x390] sm:$0xff]
    %v417 = vld [vmem:[%s5 + $0x398] sm:$0xff]
    %v418 = vld [vmem:[%s5 + $0x3a0] sm:$0xff]
    %v419 = vld [vmem:[%s5 + $0x3a8] sm:$0xff]
    %v420 = vld [vmem:[%s5 + $0x3b0] sm:$0xff]
    %v421 = vld [vmem:[%s5 + $0x3b8] sm:$0xff]
    %v422 = vld [vmem:[%s5 + $0x3c0] sm:$0xff]
    %v423 = vld [vmem:[%s5 + $0x3c8] sm:$0xff]
    %v424 = vld [vmem:[%s5 + $0x3d0] sm:$0xff]
    %v425 = vld [vmem:[%s5 + $0x3d8] sm:$0xff]
    %v426 = vld [vmem:[%s5 + $0x3e0] sm:$0xff]
    %v427 = vld [vmem:[%s5 + $0x3e8] sm:$0xff]
    %v428 = vld [vmem:[%s5 + $0x3f0] sm:$0xff]
    %v429 = vld [vmem:[%s5 + $0x3f8] sm:$0xff]
    %v430 = vld [vmem:[%s5 + $0x400] sm:$0xff]
    %v431 = vld [vmem:[%s5 + $0x408] sm:$0xff]
    %v432 = vld [vmem:[%s5 + $0x410] sm:$0xff]
    %v433 = vld [vmem:[%s5 + $0x418] sm:$0xff]
    %v434 = vld [vmem:[%s5 + $0x420] sm:$0xff]
    %v435 = vld [vmem:[%s5 + $0x428] sm:$0xff]
    %v436 = vld [vmem:[%s5 + $0x430] sm:$0xff]
    %v437 = vld [vmem:[%s5 + $0x438] sm:$0xff]
    %v438 = vld [vmem:[%s5 + $0x440] sm:$0xff]
    %v439 = vld [vmem:[%s5 + $0x448] sm:$0xff]
    %v440 = vld [vmem:[%s5 + $0x450] sm:$0xff]
    %v441 = vld [vmem:[%s5 + $0x458] sm:$0xff]
    %v442 = vld [vmem:[%s5 + $0x460] sm:$0xff]
    %v443 = vld [vmem:[%s5 + $0x468] sm:$0xff]
    %v444 = vld [vmem:[%s5 + $0x470] sm:$0xff]
    %v445 = vld [vmem:[%s5 + $0x478] sm:$0xff]
    %v446 = vld [vmem:[%s5 + $0x480] sm:$0xff]
    %v447 = vld [vmem:[%s5 + $0x488] sm:$0xff]
    %v448 = vld [vmem:[%s5 + $0x490] sm:$0xff]
    %v449 = vld [vmem:[%s5 + $0x498] sm:$0xff]
    %v450 = vld [vmem:[%s5 + $0x4a0] sm:$0xff]
    %v451 = vld [vmem:[%s5 + $0x4a8] sm:$0xff]
    %v452 = vld [vmem:[%s5 + $0x4b0] sm:$0xff]
    %v453 = vld [vmem:[%s5 + $0x4b8] sm:$0xff]
    %v454 = vld [vmem:[%s5 + $0x4c0] sm:$0xff]
    %v455 = vld [vmem:[%s5 + $0x4c8] sm:$0xff]
    %v456 = vld [vmem:[%s5 + $0x4d0] sm:$0xff]
    %v457 = vld [vmem:[%s5 + $0x4d8] sm:$0xff]
    %v458 = vld [vmem:[%s5 + $0x4e0] sm:$0xff]
    %v459 = vld [vmem:[%s5 + $0x4e8] sm:$0xff]
    %v460 = vld [vmem:[%s5 + $0x4f0] sm:$0xff]
    %v461 = vld [vmem:[%s5 + $0x4f8] sm:$0xff]
    %v462 = vld [vmem:[%s5 + $0x500] sm:$0xff]
    %v463 = vld [vmem:[%s5 + $0x508] sm:$0xff]
    %v464 = vld [vmem:[%s5 + $0x510] sm:$0xff]
    %v465 = vld [vmem:[%s5 + $0x518] sm:$0xff]
    %v466 = vld [vmem:[%s5 + $0x520] sm:$0xff]
    %v467 = vld [vmem:[%s5 + $0x528] sm:$0xff]
    %v468 = vld [vmem:[%s5 + $0x530] sm:$0xff]
    %v469 = vld [vmem:[%s5 + $0x538] sm:$0xff]
    %v470 = vld [vmem:[%s5 + $0x540] sm:$0xff]
    %v471 = vld [vmem:[%s5 + $0x548] sm:$0xff]
    %v472 = vld [vmem:[%s5 + $0x550] sm:$0xff]
    %v473 = vld [vmem:[%s5 + $0x558] sm:$0xff]
    %v474 = vld [vmem:[%s5 + $0x560] sm:$0xff]
    %v475 = vld [vmem:[%s5 + $0x568] sm:$0xff]
    %v476 = vld [vmem:[%s5 + $0x570] sm:$0xff]
    %v477 = vld [vmem:[%s5 + $0x578] sm:$0xff]
    %v478 = vld [vmem:[%s5 + $0x580] sm:$0xff]
    %v479 = vld [vmem:[%s5 + $0x588] sm:$0xff]
    %v480 = vld [vmem:[%s5 + $0x590] sm:$0xff]
    %v481 = vld [vmem:[%s5 + $0x598] sm:$0xff]
    %v482 = vld [vmem:[%s5 + $0x5a0] sm:$0xff]
    %v483 = vld [vmem:[%s5 + $0x5a8] sm:$0xff]
    %v484 = vld [vmem:[%s5 + $0x5b0] sm:$0xff]
    %v485 = vld [vmem:[%s5 + $0x5b8] sm:$0xff]
    %v486 = vld [vmem:[%s5 + $0x5c0] sm:$0xff]
    %v487 = vld [vmem:[%s5 + $0x5c8] sm:$0xff]
    %v488 = vld [vmem:[%s5 + $0x5d0] sm:$0xff]
    %v489 = vld [vmem:[%s5 + $0x5d8] sm:$0xff]
    %v490 = vld [vmem:[%s5 + $0x5e0] sm:$0xff]
    %v491 = vld [vmem:[%s5 + $0x5e8] sm:$0xff]
    %v492 = vld [vmem:[%s5 + $0x5f0] sm:$0xff]
    %v493 = vld [vmem:[%s5 + $0x5f8] sm:$0xff]
    %v494 = vld [vmem:[%s5 + $0x600] sm:$0xff]
    %v495 = vld [vmem:[%s5 + $0x608] sm:$0xff]
    %v496 = vld [vmem:[%s5 + $0x610] sm:$0xff]
    %v497 = vld [vmem:[%s5 + $0x618] sm:$0xff]
    %v498 = vld [vmem:[%s5 + $0x620] sm:$0xff]
    %v499 = vld [vmem:[%s5 + $0x628] sm:$0xff]
    %v500 = vld [vmem:[%s5 + $0x630] sm:$0xff]
    %v501 = vld [vmem:[%s5 + $0x638] sm:$0xff]
    %v502 = vld [vmem:[%s5 + $0x640] sm:$0xff]
    %v503 = vld [vmem:[%s5 + $0x648] sm:$0xff]
    %v504 = vld [vmem:[%s5 + $0x650] sm:$0xff]
    %v505 = vld [vmem:[%s5 + $0x658] sm:$0xff]
    %v506 = vld [vmem:[%s5 + $0x660] sm:$0xff]
    %v507 = vld [vmem:[%s5 + $0x668] sm:$0xff]
    %v508 = vld [vmem:[%s5 + $0x670] sm:$0xff]
    %v509 = vld [vmem:[%s5 + $0x678] sm:$0xff]
    %v510 = vld [vmem:[%s5 + $0x680] sm:$0xff]
    %v511 = vld [vmem:[%s5 + $0x688] sm:$0xff]
    %v512 = vld [vmem:[%s5 + $0x690] sm:$0xff]
    %v513 = vld [vmem:[%s5 + $0x698] sm:$0xff]
    %v514 = vld [vmem:[%s5 + $0x6a0] sm:$0xff]
    %v515 = vld [vmem:[%s5 + $0x6a8] sm:$0xff]
    %v516 = vld [vmem:[%s5 + $0x6b0] sm:$0xff]
    %v517 = vld [vmem:[%s5 + $0x6b8] sm:$0xff]
    %v518 = vld [vmem:[%s5 + $0x6c0] sm:$0xff]
    %v519 = vld [vmem:[%s5 + $0x6c8] sm:$0xff]
    %v520 = vld [vmem:[%s5 + $0x6d0] sm:$0xff]
    %v521 = vld [vmem:[%s5 + $0x6d8] sm:$0xff]
    %v522 = vld [vmem:[%s5 + $0x6e0] sm:$0xff]
    %v523 = vld [vmem:[%s5 + $0x6e8] sm:$0xff]
    %v524 = vld [vmem:[%s5 + $0x6f0] sm:$0xff]
    %v525 = vld [vmem:[%s5 + $0x6f8] sm:$0xff]
    %v526 = vld [vmem:[%s5 + $0x700] sm:$0xff]
    %v527 = vld [vmem:[%s5 + $0x708] sm:$0xff]
    %v528 = vld [vmem:[%s5 + $0x710] sm:$0xff]
    %v529 = vld [vmem:[%s5 + $0x718] sm:$0xff]
    %v530 = vld [vmem:[%s5 + $0x720] sm:$0xff]
    %v531 = vld [vmem:[%s5 + $0x728] sm:$0xff]
    %v532 = vld [vmem:[%s5 + $0x730] sm:$0xff]
    %v533 = vld [vmem:[%s5 + $0x738] sm:$0xff]
    %v534 = vld [vmem:[%s5 + $0x740] sm:$0x11]
    %v535 = vld [vmem:[%s5 + $0x748] sm:$0x11]
    %v536 = vld [vmem:[%s5 + $0x750] sm:$0x11]
    %v537 = vld [vmem:[%s5 + $0x758] sm:$0x11]
    %v538 = vld [vmem:[%s6] sm:$0xff]
    %v540 = vlaneseq
    %v541 = vshrl.u32 %v540, 7
    %v542 = vsub.s32 0, %v541
    %v543 = vrot.slane %v538, %v542
    %v544 = vlaneseq
    %v545 = vshrl.u32 %v544, 7
    %v546 = vsub.s32 1, %v545
    %v547 = vrot.slane %v538, %v546
    %v548 = vlaneseq
    %v549 = vshrl.u32 %v548, 7
    %v550 = vsub.s32 2, %v549
    %v551 = vrot.slane %v538, %v550
    %v552 = vlaneseq
    %v553 = vshrl.u32 %v552, 7
    %v554 = vsub.s32 3, %v553
    %v555 = vrot.slane %v538, %v554
    %v556 = vlaneseq
    %v557 = vshrl.u32 %v556, 7
    %v558 = vsub.s32 4, %v557
    %v559 = vrot.slane %v538, %v558
    %v560 = vlaneseq
    %v561 = vshrl.u32 %v560, 7
    %v562 = vsub.s32 5, %v561
    %v563 = vrot.slane %v538, %v562
    %v564 = vlaneseq
    %v565 = vshrl.u32 %v564, 7
    %v566 = vsub.s32 6, %v565
    %v567 = vrot.slane %v538, %v566
    %v568 = vlaneseq
    %v569 = vshrl.u32 %v568, 7
    %v570 = vsub.s32 7, %v569
    %v571 = vrot.slane %v538, %v570
    %v816 = vunpack.c.l.b16 %v302
    %v817 = vunpack.c.h.b16 %v302
    %v818 = vunpack.c.l.b16 %v303
    %v819 = vunpack.c.h.b16 %v303
    %v820 = vunpack.c.l.b16 %v304
    %v821 = vunpack.c.h.b16 %v304
    %v822 = vunpack.c.l.b16 %v305
    %v823 = vunpack.c.h.b16 %v305
    %v824 = vunpack.c.l.b16 %v306
    %v825 = vunpack.c.h.b16 %v306
    %v826 = vunpack.c.l.b16 %v307
    %v827 = vunpack.c.h.b16 %v307
    %v828 = vunpack.c.l.b16 %v308
    %v829 = vunpack.c.h.b16 %v308
    %v830 = vunpack.c.l.b16 %v309
    %v831 = vunpack.c.h.b16 %v309
    %v832 = vunpack.c.l.b16 %v310
    %v833 = vunpack.c.h.b16 %v310
    %v834 = vunpack.c.l.b16 %v311
    %v835 = vunpack.c.h.b16 %v311
    %v836 = vunpack.c.l.b16 %v312
    %v837 = vunpack.c.h.b16 %v312
    %v838 = vunpack.c.l.b16 %v313
    %v839 = vunpack.c.h.b16 %v313
    %v840 = vunpack.c.l.b16 %v314
    %v841 = vunpack.c.h.b16 %v314
    %v842 = vunpack.c.l.b16 %v315
    %v843 = vunpack.c.h.b16 %v315
    %v844 = vunpack.c.l.b16 %v316
    %v845 = vunpack.c.h.b16 %v316
    %v846 = vunpack.c.l.b16 %v317
    %v847 = vunpack.c.h.b16 %v317
    %v848 = vunpack.c.l.b16 %v318
    %v849 = vunpack.c.h.b16 %v318
    %v850 = vunpack.c.l.b16 %v319
    %v851 = vunpack.c.h.b16 %v319
    %v852 = vunpack.c.l.b16 %v320
    %v853 = vunpack.c.h.b16 %v320
    %v854 = vunpack.c.l.b16 %v321
    %v855 = vunpack.c.h.b16 %v321
    %v856 = vunpack.c.l.b16 %v322
    %v857 = vunpack.c.h.b16 %v322
    %v858 = vunpack.c.l.b16 %v323
    %v859 = vunpack.c.h.b16 %v323
    %v860 = vunpack.c.l.b16 %v324
    %v861 = vunpack.c.h.b16 %v324
    %v862 = vunpack.c.l.b16 %v325
    %v863 = vunpack.c.h.b16 %v325
    %v864 = vunpack.c.l.b16 %v326
    %v865 = vunpack.c.h.b16 %v326
    %v866 = vunpack.c.l.b16 %v327
    %v867 = vunpack.c.h.b16 %v327
    %v868 = vunpack.c.l.b16 %v328
    %v869 = vunpack.c.h.b16 %v328
    %v870 = vunpack.c.l.b16 %v329
    %v871 = vunpack.c.h.b16 %v329
    %v872 = vunpack.c.l.b16 %v330
    %v873 = vunpack.c.h.b16 %v330
    %v874 = vunpack.c.l.b16 %v331
    %v875 = vunpack.c.h.b16 %v331
    %v876 = vunpack.c.l.b16 %v332
    %v877 = vunpack.c.h.b16 %v332
    %v878 = vunpack.c.l.b16 %v333
    %v879 = vunpack.c.h.b16 %v333
    %v880 = vunpack.c.l.b16 %v334
    %v881 = vunpack.c.h.b16 %v334
    %v882 = vunpack.c.l.b16 %v335
    %v883 = vunpack.c.h.b16 %v335
    %v884 = vunpack.c.l.b16 %v336
    %v885 = vunpack.c.h.b16 %v336
    %v886 = vunpack.c.l.b16 %v337
    %v887 = vunpack.c.h.b16 %v337
    %v888 = vunpack.c.l.b16 %v338
    %v889 = vunpack.c.h.b16 %v338
    %v890 = vunpack.c.l.b16 %v339
    %v891 = vunpack.c.h.b16 %v339
    %v892 = vunpack.c.l.b16 %v340
    %v893 = vunpack.c.h.b16 %v340
    %v894 = vunpack.c.l.b16 %v341
    %v895 = vunpack.c.h.b16 %v341
    %v896 = vunpack.c.l.b16 %v342
    %v897 = vunpack.c.h.b16 %v342
    %v898 = vunpack.c.l.b16 %v343
    %v899 = vunpack.c.h.b16 %v343
    %v900 = vunpack.c.l.b16 %v344
    %v901 = vunpack.c.h.b16 %v344
    %v902 = vunpack.c.l.b16 %v345
    %v903 = vunpack.c.h.b16 %v345
    %v904 = vunpack.c.l.b16 %v346
    %v905 = vunpack.c.h.b16 %v346
    %v906 = vunpack.c.l.b16 %v347
    %v907 = vunpack.c.h.b16 %v347
    %v908 = vunpack.c.l.b16 %v348
    %v909 = vunpack.c.h.b16 %v348
    %v910 = vunpack.c.l.b16 %v349
    %v911 = vunpack.c.h.b16 %v349
    %v912 = vunpack.c.l.b16 %v350
    %v913 = vunpack.c.h.b16 %v350
    %v914 = vunpack.c.l.b16 %v351
    %v915 = vunpack.c.h.b16 %v351
    %v916 = vunpack.c.l.b16 %v352
    %v917 = vunpack.c.h.b16 %v352
    %v918 = vunpack.c.l.b16 %v353
    %v919 = vunpack.c.h.b16 %v353
    %v920 = vunpack.c.l.b16 %v354
    %v921 = vunpack.c.h.b16 %v354
    %v922 = vunpack.c.l.b16 %v355
    %v923 = vunpack.c.h.b16 %v355
    %v924 = vunpack.c.l.b16 %v356
    %v925 = vunpack.c.h.b16 %v356
    %v926 = vunpack.c.l.b16 %v357
    %v927 = vunpack.c.h.b16 %v357
    %v928 = vunpack.c.l.b16 %v358
    %v929 = vunpack.c.h.b16 %v358
    %v930 = vunpack.c.l.b16 %v359
    %v931 = vunpack.c.h.b16 %v359
    %v932 = vunpack.c.l.b16 %v360
    %v933 = vunpack.c.h.b16 %v360
    %v934 = vunpack.c.l.b16 %v361
    %v935 = vunpack.c.h.b16 %v361
    %v936 = vunpack.c.l.b16 %v362
    %v937 = vunpack.c.h.b16 %v362
    %v938 = vunpack.c.l.b16 %v363
    %v939 = vunpack.c.h.b16 %v363
    %v940 = vunpack.c.l.b16 %v364
    %v941 = vunpack.c.h.b16 %v364
    %v942 = vunpack.c.l.b16 %v365
    %v943 = vunpack.c.h.b16 %v365
    %v944 = vunpack.c.l.b16 %v366
    %v945 = vunpack.c.h.b16 %v366
    %v946 = vunpack.c.l.b16 %v367
    %v947 = vunpack.c.h.b16 %v367
    %v948 = vunpack.c.l.b16 %v368
    %v949 = vunpack.c.h.b16 %v368
    %v950 = vunpack.c.l.b16 %v369
    %v951 = vunpack.c.h.b16 %v369
    %v952 = vunpack.c.l.b16 %v370
    %v953 = vunpack.c.h.b16 %v370
    %v954 = vunpack.c.l.b16 %v371
    %v955 = vunpack.c.h.b16 %v371
    %v956 = vunpack.c.l.b16 %v372
    %v957 = vunpack.c.h.b16 %v372
    %v958 = vunpack.c.l.b16 %v373
    %v959 = vunpack.c.h.b16 %v373
    %v960 = vunpack.c.l.b16 %v374
    %v961 = vunpack.c.h.b16 %v374
    %v962 = vunpack.c.l.b16 %v375
    %v963 = vunpack.c.h.b16 %v375
    %v964 = vunpack.c.l.b16 %v376
    %v965 = vunpack.c.h.b16 %v376
    %v966 = vunpack.c.l.b16 %v377
    %v967 = vunpack.c.h.b16 %v377
    %v968 = vunpack.c.l.b16 %v378
    %v969 = vunpack.c.h.b16 %v378
    %v970 = vunpack.c.l.b16 %v379
    %v971 = vunpack.c.h.b16 %v379
    %v972 = vunpack.c.l.b16 %v380
    %v973 = vunpack.c.h.b16 %v380
    %v974 = vunpack.c.l.b16 %v381
    %v975 = vunpack.c.h.b16 %v381
    %v976 = vunpack.c.l.b16 %v382
    %v977 = vunpack.c.h.b16 %v382
    %v978 = vunpack.c.l.b16 %v383
    %v979 = vunpack.c.h.b16 %v383
    %v980 = vunpack.c.l.b16 %v384
    %v981 = vunpack.c.h.b16 %v384
    %v982 = vunpack.c.l.b16 %v385
    %v983 = vunpack.c.h.b16 %v385
    %v984 = vunpack.c.l.b16 %v386
    %v985 = vunpack.c.h.b16 %v386
    %v986 = vunpack.c.l.b16 %v387
    %v987 = vunpack.c.h.b16 %v387
    %v988 = vunpack.c.l.b16 %v388
    %v989 = vunpack.c.h.b16 %v388
    %v990 = vunpack.c.l.b16 %v389
    %v991 = vunpack.c.h.b16 %v389
    %v992 = vunpack.c.l.b16 %v390
    %v993 = vunpack.c.h.b16 %v390
    %v994 = vunpack.c.l.b16 %v391
    %v995 = vunpack.c.h.b16 %v391
    %v996 = vunpack.c.l.b16 %v392
    %v997 = vunpack.c.h.b16 %v392
    %v998 = vunpack.c.l.b16 %v393
    %v999 = vunpack.c.h.b16 %v393
    %v1000 = vunpack.c.l.b16 %v394
    %v1001 = vunpack.c.h.b16 %v394
    %v1002 = vunpack.c.l.b16 %v395
    %v1003 = vunpack.c.h.b16 %v395
    %v1004 = vunpack.c.l.b16 %v396
    %v1005 = vunpack.c.h.b16 %v396
    %v1006 = vunpack.c.l.b16 %v397
    %v1007 = vunpack.c.h.b16 %v397
    %v1008 = vunpack.c.l.b16 %v398
    %v1009 = vunpack.c.h.b16 %v398
    %v1010 = vunpack.c.l.b16 %v399
    %v1011 = vunpack.c.h.b16 %v399
    %v1012 = vunpack.c.l.b16 %v400
    %v1013 = vunpack.c.h.b16 %v400
    %v1014 = vunpack.c.l.b16 %v401
    %v1015 = vunpack.c.h.b16 %v401
    %v1016 = vunpack.c.l.b16 %v402
    %v1017 = vunpack.c.h.b16 %v402
    %v1018 = vunpack.c.l.b16 %v403
    %v1019 = vunpack.c.h.b16 %v403
    %v1020 = vunpack.c.l.b16 %v404
    %v1021 = vunpack.c.h.b16 %v404
    %v1022 = vunpack.c.l.b16 %v405
    %v1023 = vunpack.c.h.b16 %v405
    %v1024 = vunpack.c.l.b16 %v406
    %v1025 = vunpack.c.h.b16 %v406
    %v1026 = vunpack.c.l.b16 %v407
    %v1027 = vunpack.c.h.b16 %v407
    %v1028 = vunpack.c.l.b16 %v408
    %v1029 = vunpack.c.h.b16 %v408
    %v1030 = vunpack.c.l.b16 %v409
    %v1031 = vunpack.c.h.b16 %v409
    %v1032 = vunpack.c.l.b16 %v410
    %v1033 = vunpack.c.h.b16 %v410
    %v1034 = vunpack.c.l.b16 %v411
    %v1035 = vunpack.c.h.b16 %v411
    %v1036 = vunpack.c.l.b16 %v412
    %v1037 = vunpack.c.h.b16 %v412
    %v1038 = vunpack.c.l.b16 %v413
    %v1039 = vunpack.c.h.b16 %v413
    %v1040 = vunpack.c.l.b16 %v414
    %v1041 = vunpack.c.h.b16 %v414
    %v1042 = vunpack.c.l.b16 %v415
    %v1043 = vunpack.c.h.b16 %v415
    %v1044 = vunpack.c.l.b16 %v416
    %v1045 = vunpack.c.h.b16 %v416
    %v1046 = vunpack.c.l.b16 %v417
    %v1047 = vunpack.c.h.b16 %v417
    %v1048 = vunpack.c.l.b16 %v418
    %v1049 = vunpack.c.h.b16 %v418
    %v1050 = vunpack.c.l.b16 %v419
    %v1051 = vunpack.c.h.b16 %v419
    %v1052 = vunpack.c.l.b16 %v420
    %v1053 = vunpack.c.h.b16 %v420
    %v1054 = vunpack.c.l.b16 %v421
    %v1055 = vunpack.c.h.b16 %v421
    %v1056 = vunpack.c.l.b16 %v422
    %v1057 = vunpack.c.h.b16 %v422
    %v1058 = vunpack.c.l.b16 %v423
    %v1059 = vunpack.c.h.b16 %v423
    %v1060 = vunpack.c.l.b16 %v424
    %v1061 = vunpack.c.h.b16 %v424
    %v1062 = vunpack.c.l.b16 %v425
    %v1063 = vunpack.c.h.b16 %v425
    %v1064 = vunpack.c.l.b16 %v426
    %v1065 = vunpack.c.h.b16 %v426
    %v1066 = vunpack.c.l.b16 %v427
    %v1067 = vunpack.c.h.b16 %v427
    %v1068 = vunpack.c.l.b16 %v428
    %v1069 = vunpack.c.h.b16 %v428
    %v1070 = vunpack.c.l.b16 %v429
    %v1071 = vunpack.c.h.b16 %v429
    %v1072 = vunpack.c.l.b16 %v430
    %v1073 = vunpack.c.h.b16 %v430
    %v1074 = vunpack.c.l.b16 %v431
    %v1075 = vunpack.c.h.b16 %v431
    %v1076 = vunpack.c.l.b16 %v432
    %v1077 = vunpack.c.h.b16 %v432
    %v1078 = vunpack.c.l.b16 %v433
    %v1079 = vunpack.c.h.b16 %v433
    %v1080 = vunpack.c.l.b16 %v434
    %v1081 = vunpack.c.h.b16 %v434
    %v1082 = vunpack.c.l.b16 %v435
    %v1083 = vunpack.c.h.b16 %v435
    %v1084 = vunpack.c.l.b16 %v436
    %v1085 = vunpack.c.h.b16 %v436
    %v1086 = vunpack.c.l.b16 %v437
    %v1087 = vunpack.c.h.b16 %v437
    %v1088 = vunpack.c.l.b16 %v438
    %v1089 = vunpack.c.h.b16 %v438
    %v1090 = vunpack.c.l.b16 %v439
    %v1091 = vunpack.c.h.b16 %v439
    %v1092 = vunpack.c.l.b16 %v440
    %v1093 = vunpack.c.h.b16 %v440
    %v1094 = vunpack.c.l.b16 %v441
    %v1095 = vunpack.c.h.b16 %v441
    %v1096 = vunpack.c.l.b16 %v442
    %v1097 = vunpack.c.h.b16 %v442
    %v1098 = vunpack.c.l.b16 %v443
    %v1099 = vunpack.c.h.b16 %v443
    %v1100 = vunpack.c.l.b16 %v444
    %v1101 = vunpack.c.h.b16 %v444
    %v1102 = vunpack.c.l.b16 %v445
    %v1103 = vunpack.c.h.b16 %v445
    %v1104 = vunpack.c.l.b16 %v446
    %v1105 = vunpack.c.h.b16 %v446
    %v1106 = vunpack.c.l.b16 %v447
    %v1107 = vunpack.c.h.b16 %v447
    %v1108 = vunpack.c.l.b16 %v448
    %v1109 = vunpack.c.h.b16 %v448
    %v1110 = vunpack.c.l.b16 %v449
    %v1111 = vunpack.c.h.b16 %v449
    %v1112 = vunpack.c.l.b16 %v450
    %v1113 = vunpack.c.h.b16 %v450
    %v1114 = vunpack.c.l.b16 %v451
    %v1115 = vunpack.c.h.b16 %v451
    %v1116 = vunpack.c.l.b16 %v452
    %v1117 = vunpack.c.h.b16 %v452
    %v1118 = vunpack.c.l.b16 %v453
    %v1119 = vunpack.c.h.b16 %v453
    %v1120 = vunpack.c.l.b16 %v454
    %v1121 = vunpack.c.h.b16 %v454
    %v1122 = vunpack.c.l.b16 %v455
    %v1123 = vunpack.c.h.b16 %v455
    %v1124 = vunpack.c.l.b16 %v456
    %v1125 = vunpack.c.h.b16 %v456
    %v1126 = vunpack.c.l.b16 %v457
    %v1127 = vunpack.c.h.b16 %v457
    %v1128 = vunpack.c.l.b16 %v458
    %v1129 = vunpack.c.h.b16 %v458
    %v1130 = vunpack.c.l.b16 %v459
    %v1131 = vunpack.c.h.b16 %v459
    %v1132 = vunpack.c.l.b16 %v460
    %v1133 = vunpack.c.h.b16 %v460
    %v1134 = vunpack.c.l.b16 %v461
    %v1135 = vunpack.c.h.b16 %v461
    %v1136 = vunpack.c.l.b16 %v462
    %v1137 = vunpack.c.h.b16 %v462
    %v1138 = vunpack.c.l.b16 %v463
    %v1139 = vunpack.c.h.b16 %v463
    %v1140 = vunpack.c.l.b16 %v464
    %v1141 = vunpack.c.h.b16 %v464
    %v1142 = vunpack.c.l.b16 %v465
    %v1143 = vunpack.c.h.b16 %v465
    %v1144 = vunpack.c.l.b16 %v466
    %v1145 = vunpack.c.h.b16 %v466
    %v1146 = vunpack.c.l.b16 %v467
    %v1147 = vunpack.c.h.b16 %v467
    %v1148 = vunpack.c.l.b16 %v468
    %v1149 = vunpack.c.h.b16 %v468
    %v1150 = vunpack.c.l.b16 %v469
    %v1151 = vunpack.c.h.b16 %v469
    %v1152 = vunpack.c.l.b16 %v470
    %v1153 = vunpack.c.h.b16 %v470
    %v1154 = vunpack.c.l.b16 %v471
    %v1155 = vunpack.c.h.b16 %v471
    %v1156 = vunpack.c.l.b16 %v472
    %v1157 = vunpack.c.h.b16 %v472
    %v1158 = vunpack.c.l.b16 %v473
    %v1159 = vunpack.c.h.b16 %v473
    %v1160 = vunpack.c.l.b16 %v474
    %v1161 = vunpack.c.h.b16 %v474
    %v1162 = vunpack.c.l.b16 %v475
    %v1163 = vunpack.c.h.b16 %v475
    %v1164 = vunpack.c.l.b16 %v476
    %v1165 = vunpack.c.h.b16 %v476
    %v1166 = vunpack.c.l.b16 %v477
    %v1167 = vunpack.c.h.b16 %v477
    %v1168 = vunpack.c.l.b16 %v478
    %v1169 = vunpack.c.h.b16 %v478
    %v1170 = vunpack.c.l.b16 %v479
    %v1171 = vunpack.c.h.b16 %v479
    %v1172 = vunpack.c.l.b16 %v480
    %v1173 = vunpack.c.h.b16 %v480
    %v1174 = vunpack.c.l.b16 %v481
    %v1175 = vunpack.c.h.b16 %v481
    %v1176 = vunpack.c.l.b16 %v482
    %v1177 = vunpack.c.h.b16 %v482
    %v1178 = vunpack.c.l.b16 %v483
    %v1179 = vunpack.c.h.b16 %v483
    %v1180 = vunpack.c.l.b16 %v484
    %v1181 = vunpack.c.h.b16 %v484
    %v1182 = vunpack.c.l.b16 %v485
    %v1183 = vunpack.c.h.b16 %v485
    %v1184 = vunpack.c.l.b16 %v486
    %v1185 = vunpack.c.h.b16 %v486
    %v1186 = vunpack.c.l.b16 %v487
    %v1187 = vunpack.c.h.b16 %v487
    %v1188 = vunpack.c.l.b16 %v488
    %v1189 = vunpack.c.h.b16 %v488
    %v1190 = vunpack.c.l.b16 %v489
    %v1191 = vunpack.c.h.b16 %v489
    %v1192 = vunpack.c.l.b16 %v490
    %v1193 = vunpack.c.h.b16 %v490
    %v1194 = vunpack.c.l.b16 %v491
    %v1195 = vunpack.c.h.b16 %v491
    %v1196 = vunpack.c.l.b16 %v492
    %v1197 = vunpack.c.h.b16 %v492
    %v1198 = vunpack.c.l.b16 %v493
    %v1199 = vunpack.c.h.b16 %v493
    %v1200 = vunpack.c.l.b16 %v494
    %v1201 = vunpack.c.h.b16 %v494
    %v1202 = vunpack.c.l.b16 %v495
    %v1203 = vunpack.c.h.b16 %v495
    %v1204 = vunpack.c.l.b16 %v496
    %v1205 = vunpack.c.h.b16 %v496
    %v1206 = vunpack.c.l.b16 %v497
    %v1207 = vunpack.c.h.b16 %v497
    %v1208 = vunpack.c.l.b16 %v498
    %v1209 = vunpack.c.h.b16 %v498
    %v1210 = vunpack.c.l.b16 %v499
    %v1211 = vunpack.c.h.b16 %v499
    %v1212 = vunpack.c.l.b16 %v500
    %v1213 = vunpack.c.h.b16 %v500
    %v1214 = vunpack.c.l.b16 %v501
    %v1215 = vunpack.c.h.b16 %v501
    %v1216 = vunpack.c.l.b16 %v502
    %v1217 = vunpack.c.h.b16 %v502
    %v1218 = vunpack.c.l.b16 %v503
    %v1219 = vunpack.c.h.b16 %v503
    %v1220 = vunpack.c.l.b16 %v504
    %v1221 = vunpack.c.h.b16 %v504
    %v1222 = vunpack.c.l.b16 %v505
    %v1223 = vunpack.c.h.b16 %v505
    %v1224 = vunpack.c.l.b16 %v506
    %v1225 = vunpack.c.h.b16 %v506
    %v1226 = vunpack.c.l.b16 %v507
    %v1227 = vunpack.c.h.b16 %v507
    %v1228 = vunpack.c.l.b16 %v508
    %v1229 = vunpack.c.h.b16 %v508
    %v1230 = vunpack.c.l.b16 %v509
    %v1231 = vunpack.c.h.b16 %v509
    %v1232 = vunpack.c.l.b16 %v510
    %v1233 = vunpack.c.h.b16 %v510
    %v1234 = vunpack.c.l.b16 %v511
    %v1235 = vunpack.c.h.b16 %v511
    %v1236 = vunpack.c.l.b16 %v512
    %v1237 = vunpack.c.h.b16 %v512
    %v1238 = vunpack.c.l.b16 %v513
    %v1239 = vunpack.c.h.b16 %v513
    %v1240 = vunpack.c.l.b16 %v514
    %v1241 = vunpack.c.h.b16 %v514
    %v1242 = vunpack.c.l.b16 %v515
    %v1243 = vunpack.c.h.b16 %v515
    %v1244 = vunpack.c.l.b16 %v516
    %v1245 = vunpack.c.h.b16 %v516
    %v1246 = vunpack.c.l.b16 %v517
    %v1247 = vunpack.c.h.b16 %v517
    %v1248 = vunpack.c.l.b16 %v518
    %v1249 = vunpack.c.h.b16 %v518
    %v1250 = vunpack.c.l.b16 %v519
    %v1251 = vunpack.c.h.b16 %v519
    %v1252 = vunpack.c.l.b16 %v520
    %v1253 = vunpack.c.h.b16 %v520
    %v1254 = vunpack.c.l.b16 %v521
    %v1255 = vunpack.c.h.b16 %v521
    %v1256 = vunpack.c.l.b16 %v522
    %v1257 = vunpack.c.h.b16 %v522
    %v1258 = vunpack.c.l.b16 %v523
    %v1259 = vunpack.c.h.b16 %v523
    %v1260 = vunpack.c.l.b16 %v524
    %v1261 = vunpack.c.h.b16 %v524
    %v1262 = vunpack.c.l.b16 %v525
    %v1263 = vunpack.c.h.b16 %v525
    %v1264 = vunpack.c.l.b16 %v526
    %v1265 = vunpack.c.h.b16 %v526
    %v1266 = vunpack.c.l.b16 %v527
    %v1267 = vunpack.c.h.b16 %v527
    %v1268 = vunpack.c.l.b16 %v528
    %v1269 = vunpack.c.h.b16 %v528
    %v1270 = vunpack.c.l.b16 %v529
    %v1271 = vunpack.c.h.b16 %v529
    %v1272 = vunpack.c.l.b16 %v530
    %v1273 = vunpack.c.h.b16 %v530
    %v1274 = vunpack.c.l.b16 %v531
    %v1275 = vunpack.c.h.b16 %v531
    %v1276 = vunpack.c.l.b16 %v532
    %v1277 = vunpack.c.h.b16 %v532
    %v1278 = vunpack.c.l.b16 %v533
    %v1279 = vunpack.c.h.b16 %v533
    %v1280 = vunpack.c.l.b16 %v534
    %v1281 = vunpack.c.h.b16 %v534
    %v1282 = vunpack.c.l.b16 %v535
    %v1283 = vunpack.c.h.b16 %v535
    %v1284 = vunpack.c.l.b16 %v536
    %v1285 = vunpack.c.h.b16 %v536
    %v1286 = vunpack.c.l.b16 %v537
    %v1287 = vunpack.c.h.b16 %v537
    %v1288 = vpack.c.b16 %v824, %v816
    %v1289 = vpack.c.b16 %v825, %v817
    %v1290 = vpack.c.b16 %v826, %v818
    %v1291 = vpack.c.b16 %v827, %v819
    %v1292 = vpack.c.b16 %v828, %v820
    %v1293 = vpack.c.b16 %v829, %v821
    %v1294 = vpack.c.b16 %v830, %v822
    %v1295 = vpack.c.b16 %v831, %v823
    %v1296 = vpack.c.b16 %v840, %v832
    %v1297 = vpack.c.b16 %v841, %v833
    %v1298 = vpack.c.b16 %v842, %v834
    %v1299 = vpack.c.b16 %v843, %v835
    %v1300 = vpack.c.b16 %v844, %v836
    %v1301 = vpack.c.b16 %v845, %v837
    %v1302 = vpack.c.b16 %v846, %v838
    %v1303 = vpack.c.b16 %v847, %v839
    %v1304 = vpack.c.b16 %v856, %v848
    %v1305 = vpack.c.b16 %v857, %v849
    %v1306 = vpack.c.b16 %v858, %v850
    %v1307 = vpack.c.b16 %v859, %v851
    %v1308 = vpack.c.b16 %v860, %v852
    %v1309 = vpack.c.b16 %v861, %v853
    %v1310 = vpack.c.b16 %v862, %v854
    %v1311 = vpack.c.b16 %v863, %v855
    %v1312 = vpack.c.b16 %v872, %v864
    %v1313 = vpack.c.b16 %v873, %v865
    %v1314 = vpack.c.b16 %v874, %v866
    %v1315 = vpack.c.b16 %v875, %v867
    %v1316 = vpack.c.b16 %v876, %v868
    %v1317 = vpack.c.b16 %v877, %v869
    %v1318 = vpack.c.b16 %v878, %v870
    %v1319 = vpack.c.b16 %v879, %v871
    %v1320 = vpack.c.b16 %v888, %v880
    %v1321 = vpack.c.b16 %v889, %v881
    %v1322 = vpack.c.b16 %v890, %v882
    %v1323 = vpack.c.b16 %v891, %v883
    %v1324 = vpack.c.b16 %v892, %v884
    %v1325 = vpack.c.b16 %v893, %v885
    %v1326 = vpack.c.b16 %v894, %v886
    %v1327 = vpack.c.b16 %v895, %v887
    %v1328 = vpack.c.b16 %v904, %v896
    %v1329 = vpack.c.b16 %v905, %v897
    %v1330 = vpack.c.b16 %v906, %v898
    %v1331 = vpack.c.b16 %v907, %v899
    %v1332 = vpack.c.b16 %v908, %v900
    %v1333 = vpack.c.b16 %v909, %v901
    %v1334 = vpack.c.b16 %v910, %v902
    %v1335 = vpack.c.b16 %v911, %v903
    %v1336 = vpack.c.b16 %v920, %v912
    %v1337 = vpack.c.b16 %v921, %v913
    %v1338 = vpack.c.b16 %v922, %v914
    %v1339 = vpack.c.b16 %v923, %v915
    %v1340 = vpack.c.b16 %v924, %v916
    %v1341 = vpack.c.b16 %v925, %v917
    %v1342 = vpack.c.b16 %v926, %v918
    %v1343 = vpack.c.b16 %v927, %v919
    %v1344 = vpack.c.b16 %v936, %v928
    %v1345 = vpack.c.b16 %v937, %v929
    %v1346 = vpack.c.b16 %v938, %v930
    %v1347 = vpack.c.b16 %v939, %v931
    %v1348 = vpack.c.b16 %v940, %v932
    %v1349 = vpack.c.b16 %v941, %v933
    %v1350 = vpack.c.b16 %v942, %v934
    %v1351 = vpack.c.b16 %v943, %v935
    %v1352 = vpack.c.b16 %v952, %v944
    %v1353 = vpack.c.b16 %v953, %v945
    %v1354 = vpack.c.b16 %v954, %v946
    %v1355 = vpack.c.b16 %v955, %v947
    %v1356 = vpack.c.b16 %v956, %v948
    %v1357 = vpack.c.b16 %v957, %v949
    %v1358 = vpack.c.b16 %v958, %v950
    %v1359 = vpack.c.b16 %v959, %v951
    %v1360 = vpack.c.b16 %v968, %v960
    %v1361 = vpack.c.b16 %v969, %v961
    %v1362 = vpack.c.b16 %v970, %v962
    %v1363 = vpack.c.b16 %v971, %v963
    %v1364 = vpack.c.b16 %v972, %v964
    %v1365 = vpack.c.b16 %v973, %v965
    %v1366 = vpack.c.b16 %v974, %v966
    %v1367 = vpack.c.b16 %v975, %v967
    %v1368 = vpack.c.b16 %v984, %v976
    %v1369 = vpack.c.b16 %v985, %v977
    %v1370 = vpack.c.b16 %v986, %v978
    %v1371 = vpack.c.b16 %v987, %v979
    %v1372 = vpack.c.b16 %v988, %v980
    %v1373 = vpack.c.b16 %v989, %v981
    %v1374 = vpack.c.b16 %v990, %v982
    %v1375 = vpack.c.b16 %v991, %v983
    %v1376 = vpack.c.b16 %v1000, %v992
    %v1377 = vpack.c.b16 %v1001, %v993
    %v1378 = vpack.c.b16 %v1002, %v994
    %v1379 = vpack.c.b16 %v1003, %v995
    %v1380 = vpack.c.b16 %v1004, %v996
    %v1381 = vpack.c.b16 %v1005, %v997
    %v1382 = vpack.c.b16 %v1006, %v998
    %v1383 = vpack.c.b16 %v1007, %v999
    %v1384 = vpack.c.b16 %v1016, %v1008
    %v1385 = vpack.c.b16 %v1017, %v1009
    %v1386 = vpack.c.b16 %v1018, %v1010
    %v1387 = vpack.c.b16 %v1019, %v1011
    %v1388 = vpack.c.b16 %v1020, %v1012
    %v1389 = vpack.c.b16 %v1021, %v1013
    %v1390 = vpack.c.b16 %v1022, %v1014
    %v1391 = vpack.c.b16 %v1023, %v1015
    %v1392 = vpack.c.b16 %v1032, %v1024
    %v1393 = vpack.c.b16 %v1033, %v1025
    %v1394 = vpack.c.b16 %v1034, %v1026
    %v1395 = vpack.c.b16 %v1035, %v1027
    %v1396 = vpack.c.b16 %v1036, %v1028
    %v1397 = vpack.c.b16 %v1037, %v1029
    %v1398 = vpack.c.b16 %v1038, %v1030
    %v1399 = vpack.c.b16 %v1039, %v1031
    %v1400 = vpack.c.b16 %v1048, %v1040
    %v1401 = vpack.c.b16 %v1049, %v1041
    %v1402 = vpack.c.b16 %v1050, %v1042
    %v1403 = vpack.c.b16 %v1051, %v1043
    %v1404 = vpack.c.b16 %v1052, %v1044
    %v1405 = vpack.c.b16 %v1053, %v1045
    %v1406 = vpack.c.b16 %v1054, %v1046
    %v1407 = vpack.c.b16 %v1055, %v1047
    %v1408 = vpack.c.b16 %v1064, %v1056
    %v1409 = vpack.c.b16 %v1065, %v1057
    %v1410 = vpack.c.b16 %v1066, %v1058
    %v1411 = vpack.c.b16 %v1067, %v1059
    %v1412 = vpack.c.b16 %v1068, %v1060
    %v1413 = vpack.c.b16 %v1069, %v1061
    %v1414 = vpack.c.b16 %v1070, %v1062
    %v1415 = vpack.c.b16 %v1071, %v1063
    %v1416 = vpack.c.b16 %v1080, %v1072
    %v1417 = vpack.c.b16 %v1081, %v1073
    %v1418 = vpack.c.b16 %v1082, %v1074
    %v1419 = vpack.c.b16 %v1083, %v1075
    %v1420 = vpack.c.b16 %v1084, %v1076
    %v1421 = vpack.c.b16 %v1085, %v1077
    %v1422 = vpack.c.b16 %v1086, %v1078
    %v1423 = vpack.c.b16 %v1087, %v1079
    %v1424 = vpack.c.b16 %v1096, %v1088
    %v1425 = vpack.c.b16 %v1097, %v1089
    %v1426 = vpack.c.b16 %v1098, %v1090
    %v1427 = vpack.c.b16 %v1099, %v1091
    %v1428 = vpack.c.b16 %v1100, %v1092
    %v1429 = vpack.c.b16 %v1101, %v1093
    %v1430 = vpack.c.b16 %v1102, %v1094
    %v1431 = vpack.c.b16 %v1103, %v1095
    %v1432 = vpack.c.b16 %v1112, %v1104
    %v1433 = vpack.c.b16 %v1113, %v1105
    %v1434 = vpack.c.b16 %v1114, %v1106
    %v1435 = vpack.c.b16 %v1115, %v1107
    %v1436 = vpack.c.b16 %v1116, %v1108
    %v1437 = vpack.c.b16 %v1117, %v1109
    %v1438 = vpack.c.b16 %v1118, %v1110
    %v1439 = vpack.c.b16 %v1119, %v1111
    %v1440 = vpack.c.b16 %v1128, %v1120
    %v1441 = vpack.c.b16 %v1129, %v1121
    %v1442 = vpack.c.b16 %v1130, %v1122
    %v1443 = vpack.c.b16 %v1131, %v1123
    %v1444 = vpack.c.b16 %v1132, %v1124
    %v1445 = vpack.c.b16 %v1133, %v1125
    %v1446 = vpack.c.b16 %v1134, %v1126
    %v1447 = vpack.c.b16 %v1135, %v1127
    %v1448 = vpack.c.b16 %v1144, %v1136
    %v1449 = vpack.c.b16 %v1145, %v1137
    %v1450 = vpack.c.b16 %v1146, %v1138
    %v1451 = vpack.c.b16 %v1147, %v1139
    %v1452 = vpack.c.b16 %v1148, %v1140
    %v1453 = vpack.c.b16 %v1149, %v1141
    %v1454 = vpack.c.b16 %v1150, %v1142
    %v1455 = vpack.c.b16 %v1151, %v1143
    %v1456 = vpack.c.b16 %v1160, %v1152
    %v1457 = vpack.c.b16 %v1161, %v1153
    %v1458 = vpack.c.b16 %v1162, %v1154
    %v1459 = vpack.c.b16 %v1163, %v1155
    %v1460 = vpack.c.b16 %v1164, %v1156
    %v1461 = vpack.c.b16 %v1165, %v1157
    %v1462 = vpack.c.b16 %v1166, %v1158
    %v1463 = vpack.c.b16 %v1167, %v1159
    %v1464 = vpack.c.b16 %v1176, %v1168
    %v1465 = vpack.c.b16 %v1177, %v1169
    %v1466 = vpack.c.b16 %v1178, %v1170
    %v1467 = vpack.c.b16 %v1179, %v1171
    %v1468 = vpack.c.b16 %v1180, %v1172
    %v1469 = vpack.c.b16 %v1181, %v1173
    %v1470 = vpack.c.b16 %v1182, %v1174
    %v1471 = vpack.c.b16 %v1183, %v1175
    %v1472 = vpack.c.b16 %v1192, %v1184
    %v1473 = vpack.c.b16 %v1193, %v1185
    %v1474 = vpack.c.b16 %v1194, %v1186
    %v1475 = vpack.c.b16 %v1195, %v1187
    %v1476 = vpack.c.b16 %v1196, %v1188
    %v1477 = vpack.c.b16 %v1197, %v1189
    %v1478 = vpack.c.b16 %v1198, %v1190
    %v1479 = vpack.c.b16 %v1199, %v1191
    %v1480 = vpack.c.b16 %v1208, %v1200
    %v1481 = vpack.c.b16 %v1209, %v1201
    %v1482 = vpack.c.b16 %v1210, %v1202
    %v1483 = vpack.c.b16 %v1211, %v1203
    %v1484 = vpack.c.b16 %v1212, %v1204
    %v1485 = vpack.c.b16 %v1213, %v1205
    %v1486 = vpack.c.b16 %v1214, %v1206
    %v1487 = vpack.c.b16 %v1215, %v1207
    %v1488 = vpack.c.b16 %v1224, %v1216
    %v1489 = vpack.c.b16 %v1225, %v1217
    %v1490 = vpack.c.b16 %v1226, %v1218
    %v1491 = vpack.c.b16 %v1227, %v1219
    %v1492 = vpack.c.b16 %v1228, %v1220
    %v1493 = vpack.c.b16 %v1229, %v1221
    %v1494 = vpack.c.b16 %v1230, %v1222
    %v1495 = vpack.c.b16 %v1231, %v1223
    %v1496 = vpack.c.b16 %v1240, %v1232
    %v1497 = vpack.c.b16 %v1241, %v1233
    %v1498 = vpack.c.b16 %v1242, %v1234
    %v1499 = vpack.c.b16 %v1243, %v1235
    %v1500 = vpack.c.b16 %v1244, %v1236
    %v1501 = vpack.c.b16 %v1245, %v1237
    %v1502 = vpack.c.b16 %v1246, %v1238
    %v1503 = vpack.c.b16 %v1247, %v1239
    %v1504 = vpack.c.b16 %v1256, %v1248
    %v1505 = vpack.c.b16 %v1257, %v1249
    %v1506 = vpack.c.b16 %v1258, %v1250
    %v1507 = vpack.c.b16 %v1259, %v1251
    %v1508 = vpack.c.b16 %v1260, %v1252
    %v1509 = vpack.c.b16 %v1261, %v1253
    %v1510 = vpack.c.b16 %v1262, %v1254
    %v1511 = vpack.c.b16 %v1263, %v1255
    %v1512 = vpack.c.b16 %v1272, %v1264
    %v1513 = vpack.c.b16 %v1273, %v1265
    %v1514 = vpack.c.b16 %v1274, %v1266
    %v1515 = vpack.c.b16 %v1275, %v1267
    %v1516 = vpack.c.b16 %v1276, %v1268
    %v1517 = vpack.c.b16 %v1277, %v1269
    %v1518 = vpack.c.b16 %v1278, %v1270
    %v1519 = vpack.c.b16 %v1279, %v1271
    %v1520 = vpack.c.b16 %v1280, %v1280
    %v1521 = vpack.c.b16 %v1281, %v1281
    %v1522 = vpack.c.b16 %v1282, %v1282
    %v1523 = vpack.c.b16 %v1283, %v1283
    %v1524 = vpack.c.b16 %v1284, %v1284
    %v1525 = vpack.c.b16 %v1285, %v1285
    %v1526 = vpack.c.b16 %v1286, %v1286
    %v1527 = vpack.c.b16 %v1287, %v1287
    %vm1760 = vcmask 662528
    %v1762 = vsel %vm1760, %v301, 0
    %vm1764 = vcmask 1040384
    %v1765 = vsel 0, 4294967295, 65535
    %v1766 = vsel %vm1764, %v1765, 0
    %v1768 = vand.u32 %v1520, %v1766
    %v1771 = vand.u32 %v1521, %v1766
    %v1774 = vand.u32 %v1522, %v1766
    %v1777 = vand.u32 %v1523, %v1766
    %v1780 = vand.u32 %v1524, %v1766
    %v1783 = vand.u32 %v1525, %v1766
    %v1786 = vand.u32 %v1526, %v1766
    %v1789 = vand.u32 %v1527, %v1766
    %1791 = vmatprep.subr.bf16.mxu0 %v1345
    %1792 = vmatpush1.bf16.msra.mxu0 %v1344
    %1793 = vmatprep.subr.bf16.mxu0 %v1337
    %1794 = vmatpush1.bf16.msra.mxu0 %v1336
    %1795 = vmatprep.subr.bf16.mxu0 %v1329
    %1796 = vmatpush1.bf16.msra.mxu0 %v1328
    %1797 = vmatprep.subr.bf16.mxu0 %v1321
    %1798 = vmatpush1.bf16.msra.mxu0 %v1320
    %1799 = vmatprep.subr.bf16.mxu0 %v1313
    %1800 = vmatpush1.bf16.msra.mxu0 %v1312
    %1801 = vmatprep.subr.bf16.mxu0 %v1305
    %1802 = vmatpush1.bf16.msra.mxu0 %v1304
    %1803 = vmatprep.subr.bf16.mxu0 %v1297
    %1804 = vmatpush1.bf16.msra.mxu0 %v1296
    %1805 = vmatprep.subr.bf16.mxu0 %v1289
    %1806 = vmatpush1.bf16.msra.mxu0 %v1288
    %1807 = vmatprep.subr.bf16.mxu0 %v1409
    %1808 = vmatpush2.bf16.msra.mxu0 %v1408
    %1809 = vmatprep.subr.bf16.mxu0 %v1401
    %1810 = vmatpush2.bf16.msra.mxu0 %v1400
    %1811 = vmatprep.subr.bf16.mxu0 %v1393
    %1812 = vmatpush2.bf16.msra.mxu0 %v1392
    %1813 = vmatprep.subr.bf16.mxu0 %v1385
    %1814 = vmatpush2.bf16.msra.mxu0 %v1384
    %1815 = vmatprep.subr.bf16.mxu0 %v1377
    %1816 = vmatpush2.bf16.msra.mxu0 %v1376
    %1817 = vmatprep.subr.bf16.mxu0 %v1369
    %1818 = vmatpush2.bf16.msra.mxu0 %v1368
    %1819 = vmatprep.subr.bf16.mxu0 %v1361
    %1820 = vmatpush2.bf16.msra.mxu0 %v1360
    %1821 = vmatprep.subr.bf16.mxu0 %v1353
    %1822 = vmatpush2.bf16.msra.mxu0 %v1352
    %1823 = vmatprep.mubr.bf16.mxu0 %v299
    %1824 = vmatmul.mubr.bf16.gmra.mxu0 %v298
    %v1825 = vpop.f32.mrf.mxu0
    %v1826 = vadd.f32 %v543, %v1825
    %v1827 = vpop.f32.mrf.mxu0
    %v1828 = vadd.f32 %v547, %v1827
    %v1829 = vpop.f32.mrf.mxu0
    %v1830 = vpop.f32.mrf.mxu0
    %1831 = vdwg.mxu0
    %1832 = vmatprep.subr.bf16.mxu0 %v1473
    %1833 = vmatpush1.bf16.msra.mxu0 %v1472
    %1834 = vmatprep.subr.bf16.mxu0 %v1465
    %1835 = vmatpush1.bf16.msra.mxu0 %v1464
    %1836 = vmatprep.subr.bf16.mxu0 %v1457
    %1837 = vmatpush1.bf16.msra.mxu0 %v1456
    %1838 = vmatprep.subr.bf16.mxu0 %v1449
    %1839 = vmatpush1.bf16.msra.mxu0 %v1448
    %1840 = vmatprep.subr.bf16.mxu0 %v1441
    %1841 = vmatpush1.bf16.msra.mxu0 %v1440
    %1842 = vmatprep.subr.bf16.mxu0 %v1433
    %1843 = vmatpush1.bf16.msra.mxu0 %v1432
    %1844 = vmatprep.subr.bf16.mxu0 %v1425
    %1845 = vmatpush1.bf16.msra.mxu0 %v1424
    %1846 = vmatprep.subr.bf16.mxu0 %v1417
    %1847 = vmatpush1.bf16.msra.mxu0 %v1416
    %1848 = vmatprep.subr.bf16.mxu0 0
    %1849 = vmatpush2.bf16.msra.mxu0 0
    %1850 = vmatprep.subr.bf16.mxu0 0
    %1851 = vmatpush2.bf16.msra.mxu0 0
    %1852 = vmatprep.subr.bf16.mxu0 %v1771
    %1853 = vmatpush2.bf16.msra.mxu0 %v1768
    %1854 = vmatprep.subr.bf16.mxu0 %v1513
    %1855 = vmatpush2.bf16.msra.mxu0 %v1512
    %1856 = vmatprep.subr.bf16.mxu0 %v1505
    %1857 = vmatpush2.bf16.msra.mxu0 %v1504
    %1858 = vmatprep.subr.bf16.mxu0 %v1497
    %1859 = vmatpush2.bf16.msra.mxu0 %v1496
    %1860 = vmatprep.subr.bf16.mxu0 %v1489
    %1861 = vmatpush2.bf16.msra.mxu0 %v1488
    %1862 = vmatprep.subr.bf16.mxu0 %v1481
    %1863 = vmatpush2.bf16.msra.mxu0 %v1480
    %1864 = vmatprep.mubr.bf16.mxu0 %v1762
    %1865 = vmatmul.mubr.bf16.gmra.mxu0 %v300
    %v1866 = vpop.f32.mrf.mxu0
    %v1867 = vadd.f32 %v1826, %v1866
    %v1868 = vpop.f32.mrf.mxu0
    %v1869 = vadd.f32 %v1828, %v1868
    %v1870 = vpop.f32.mrf.mxu0
    %v1871 = vpop.f32.mrf.mxu0
    %1872 = vdwg.mxu0
    %1873 = vmatprep.subr.bf16.mxu0 %v1347
    %1874 = vmatpush1.bf16.msra.mxu0 %v1346
    %1875 = vmatprep.subr.bf16.mxu0 %v1339
    %1876 = vmatpush1.bf16.msra.mxu0 %v1338
    %1877 = vmatprep.subr.bf16.mxu0 %v1331
    %1878 = vmatpush1.bf16.msra.mxu0 %v1330
    %1879 = vmatprep.subr.bf16.mxu0 %v1323
    %1880 = vmatpush1.bf16.msra.mxu0 %v1322
    %1881 = vmatprep.subr.bf16.mxu0 %v1315
    %1882 = vmatpush1.bf16.msra.mxu0 %v1314
    %1883 = vmatprep.subr.bf16.mxu0 %v1307
    %1884 = vmatpush1.bf16.msra.mxu0 %v1306
    %1885 = vmatprep.subr.bf16.mxu0 %v1299
    %1886 = vmatpush1.bf16.msra.mxu0 %v1298
    %1887 = vmatprep.subr.bf16.mxu0 %v1291
    %1888 = vmatpush1.bf16.msra.mxu0 %v1290
    %1889 = vmatprep.subr.bf16.mxu0 %v1411
    %1890 = vmatpush2.bf16.msra.mxu0 %v1410
    %1891 = vmatprep.subr.bf16.mxu0 %v1403
    %1892 = vmatpush2.bf16.msra.mxu0 %v1402
    %1893 = vmatprep.subr.bf16.mxu0 %v1395
    %1894 = vmatpush2.bf16.msra.mxu0 %v1394
    %1895 = vmatprep.subr.bf16.mxu0 %v1387
    %1896 = vmatpush2.bf16.msra.mxu0 %v1386
    %1897 = vmatprep.subr.bf16.mxu0 %v1379
    %1898 = vmatpush2.bf16.msra.mxu0 %v1378
    %1899 = vmatprep.subr.bf16.mxu0 %v1371
    %1900 = vmatpush2.bf16.msra.mxu0 %v1370
    %1901 = vmatprep.subr.bf16.mxu0 %v1363
    %1902 = vmatpush2.bf16.msra.mxu0 %v1362
    %1903 = vmatprep.subr.bf16.mxu0 %v1355
    %1904 = vmatpush2.bf16.msra.mxu0 %v1354
    %1905 = vmatprep.mubr.bf16.mxu0 %v299
    %1906 = vmatmul.mubr.bf16.gmra.mxu0 %v298
    %v1907 = vpop.f32.mrf.mxu0
    %v1908 = vadd.f32 %v551, %v1907
    %v1909 = vpop.f32.mrf.mxu0
    %v1910 = vadd.f32 %v555, %v1909
    %v1911 = vpop.f32.mrf.mxu0
    %v1912 = vpop.f32.mrf.mxu0
    %1913 = vdwg.mxu0
    %1914 = vmatprep.subr.bf16.mxu0 %v1475
    %1915 = vmatpush1.bf16.msra.mxu0 %v1474
    %1916 = vmatprep.subr.bf16.mxu0 %v1467
    %1917 = vmatpush1.bf16.msra.mxu0 %v1466
    %1918 = vmatprep.subr.bf16.mxu0 %v1459
    %1919 = vmatpush1.bf16.msra.mxu0 %v1458
    %1920 = vmatprep.subr.bf16.mxu0 %v1451
    %1921 = vmatpush1.bf16.msra.mxu0 %v1450
    %1922 = vmatprep.subr.bf16.mxu0 %v1443
    %1923 = vmatpush1.bf16.msra.mxu0 %v1442
    %1924 = vmatprep.subr.bf16.mxu0 %v1435
    %1925 = vmatpush1.bf16.msra.mxu0 %v1434
    %1926 = vmatprep.subr.bf16.mxu0 %v1427
    %1927 = vmatpush1.bf16.msra.mxu0 %v1426
    %1928 = vmatprep.subr.bf16.mxu0 %v1419
    %1929 = vmatpush1.bf16.msra.mxu0 %v1418
    %1930 = vmatprep.subr.bf16.mxu0 0
    %1931 = vmatpush2.bf16.msra.mxu0 0
    %1932 = vmatprep.subr.bf16.mxu0 0
    %1933 = vmatpush2.bf16.msra.mxu0 0
    %1934 = vmatprep.subr.bf16.mxu0 %v1777
    %1935 = vmatpush2.bf16.msra.mxu0 %v1774
    %1936 = vmatprep.subr.bf16.mxu0 %v1515
    %1937 = vmatpush2.bf16.msra.mxu0 %v1514
    %1938 = vmatprep.subr.bf16.mxu0 %v1507
    %1939 = vmatpush2.bf16.msra.mxu0 %v1506
    %1940 = vmatprep.subr.bf16.mxu0 %v1499
    %1941 = vmatpush2.bf16.msra.mxu0 %v1498
    %1942 = vmatprep.subr.bf16.mxu0 %v1491
    %1943 = vmatpush2.bf16.msra.mxu0 %v1490
    %1944 = vmatprep.subr.bf16.mxu0 %v1483
    %1945 = vmatpush2.bf16.msra.mxu0 %v1482
    %1946 = vmatprep.mubr.bf16.mxu0 %v1762
    %1947 = vmatmul.mubr.bf16.gmra.mxu0 %v300
    %v1948 = vpop.f32.mrf.mxu0
    %v1949 = vadd.f32 %v1908, %v1948
    %v1950 = vpop.f32.mrf.mxu0
    %v1951 = vadd.f32 %v1910, %v1950
    %v1952 = vpop.f32.mrf.mxu0
    %v1953 = vpop.f32.mrf.mxu0
    %1954 = vdwg.mxu0
    %1955 = vmatprep.subr.bf16.mxu0 %v1349
    %1956 = vmatpush1.bf16.msra.mxu0 %v1348
    %1957 = vmatprep.subr.bf16.mxu0 %v1341
    %1958 = vmatpush1.bf16.msra.mxu0 %v1340
    %1959 = vmatprep.subr.bf16.mxu0 %v1333
    %1960 = vmatpush1.bf16.msra.mxu0 %v1332
    %1961 = vmatprep.subr.bf16.mxu0 %v1325
    %1962 = vmatpush1.bf16.msra.mxu0 %v1324
    %1963 = vmatprep.subr.bf16.mxu0 %v1317
    %1964 = vmatpush1.bf16.msra.mxu0 %v1316
    %1965 = vmatprep.subr.bf16.mxu0 %v1309
    %1966 = vmatpush1.bf16.msra.mxu0 %v1308
    %1967 = vmatprep.subr.bf16.mxu0 %v1301
    %1968 = vmatpush1.bf16.msra.mxu0 %v1300
    %1969 = vmatprep.subr.bf16.mxu0 %v1293
    %1970 = vmatpush1.bf16.msra.mxu0 %v1292
    %1971 = vmatprep.subr.bf16.mxu0 %v1413
    %1972 = vmatpush2.bf16.msra.mxu0 %v1412
    %1973 = vmatprep.subr.bf16.mxu0 %v1405
    %1974 = vmatpush2.bf16.msra.mxu0 %v1404
    %1975 = vmatprep.subr.bf16.mxu0 %v1397
    %1976 = vmatpush2.bf16.msra.mxu0 %v1396
    %1977 = vmatprep.subr.bf16.mxu0 %v1389
    %1978 = vmatpush2.bf16.msra.mxu0 %v1388
    %1979 = vmatprep.subr.bf16.mxu0 %v1381
    %1980 = vmatpush2.bf16.msra.mxu0 %v1380
    %1981 = vmatprep.subr.bf16.mxu0 %v1373
    %1982 = vmatpush2.bf16.msra.mxu0 %v1372
    %1983 = vmatprep.subr.bf16.mxu0 %v1365
    %1984 = vmatpush2.bf16.msra.mxu0 %v1364
    %1985 = vmatprep.subr.bf16.mxu0 %v1357
    %1986 = vmatpush2.bf16.msra.mxu0 %v1356
    %1987 = vmatprep.mubr.bf16.mxu0 %v299
    %1988 = vmatmul.mubr.bf16.gmra.mxu0 %v298
    %v1989 = vpop.f32.mrf.mxu0
    %v1990 = vadd.f32 %v559, %v1989
    %v1991 = vpop.f32.mrf.mxu0
    %v1992 = vadd.f32 %v563, %v1991
    %v1993 = vpop.f32.mrf.mxu0
    %v1994 = vpop.f32.mrf.mxu0
    %1995 = vdwg.mxu0
    %1996 = vmatprep.subr.bf16.mxu0 %v1477
    %1997 = vmatpush1.bf16.msra.mxu0 %v1476
    %1998 = vmatprep.subr.bf16.mxu0 %v1469
    %1999 = vmatpush1.bf16.msra.mxu0 %v1468
    %2000 = vmatprep.subr.bf16.mxu0 %v1461
    %2001 = vmatpush1.bf16.msra.mxu0 %v1460
    %2002 = vmatprep.subr.bf16.mxu0 %v1453
    %2003 = vmatpush1.bf16.msra.mxu0 %v1452
    %2004 = vmatprep.subr.bf16.mxu0 %v1445
    %2005 = vmatpush1.bf16.msra.mxu0 %v1444
    %2006 = vmatprep.subr.bf16.mxu0 %v1437
    %2007 = vmatpush1.bf16.msra.mxu0 %v1436
    %2008 = vmatprep.subr.bf16.mxu0 %v1429
    %2009 = vmatpush1.bf16.msra.mxu0 %v1428
    %2010 = vmatprep.subr.bf16.mxu0 %v1421
    %2011 = vmatpush1.bf16.msra.mxu0 %v1420
    %2012 = vmatprep.subr.bf16.mxu0 0
    %2013 = vmatpush2.bf16.msra.mxu0 0
    %2014 = vmatprep.subr.bf16.mxu0 0
    %2015 = vmatpush2.bf16.msra.mxu0 0
    %2016 = vmatprep.subr.bf16.mxu0 %v1783
    %2017 = vmatpush2.bf16.msra.mxu0 %v1780
    %2018 = vmatprep.subr.bf16.mxu0 %v1517
    %2019 = vmatpush2.bf16.msra.mxu0 %v1516
    %2020 = vmatprep.subr.bf16.mxu0 %v1509
    %2021 = vmatpush2.bf16.msra.mxu0 %v1508
    %2022 = vmatprep.subr.bf16.mxu0 %v1501
    %2023 = vmatpush2.bf16.msra.mxu0 %v1500
    %2024 = vmatprep.subr.bf16.mxu0 %v1493
    %2025 = vmatpush2.bf16.msra.mxu0 %v1492
    %2026 = vmatprep.subr.bf16.mxu0 %v1485
    %2027 = vmatpush2.bf16.msra.mxu0 %v1484
    %2028 = vmatprep.mubr.bf16.mxu0 %v1762
    %2029 = vmatmul.mubr.bf16.gmra.mxu0 %v300
    %v2030 = vpop.f32.mrf.mxu0
    %v2031 = vadd.f32 %v1990, %v2030
    %v2032 = vpop.f32.mrf.mxu0
    %v2033 = vadd.f32 %v1992, %v2032
    %v2034 = vpop.f32.mrf.mxu0
    %v2035 = vpop.f32.mrf.mxu0
    %2036 = vdwg.mxu0
    %2037 = vmatprep.subr.bf16.mxu0 %v1351
    %2038 = vmatpush1.bf16.msra.mxu0 %v1350
    %2039 = vmatprep.subr.bf16.mxu0 %v1343
    %2040 = vmatpush1.bf16.msra.mxu0 %v1342
    %2041 = vmatprep.subr.bf16.mxu0 %v1335
    %2042 = vmatpush1.bf16.msra.mxu0 %v1334
    %2043 = vmatprep.subr.bf16.mxu0 %v1327
    %2044 = vmatpush1.bf16.msra.mxu0 %v1326
    %2045 = vmatprep.subr.bf16.mxu0 %v1319
    %2046 = vmatpush1.bf16.msra.mxu0 %v1318
    %2047 = vmatprep.subr.bf16.mxu0 %v1311
    %2048 = vmatpush1.bf16.msra.mxu0 %v1310
    %2049 = vmatprep.subr.bf16.mxu0 %v1303
    %2050 = vmatpush1.bf16.msra.mxu0 %v1302
    %2051 = vmatprep.subr.bf16.mxu0 %v1295
    %2052 = vmatpush1.bf16.msra.mxu0 %v1294
    %2053 = vmatprep.subr.bf16.mxu0 %v1415
    %2054 = vmatpush2.bf16.msra.mxu0 %v1414
    %2055 = vmatprep.subr.bf16.mxu0 %v1407
    %2056 = vmatpush2.bf16.msra.mxu0 %v1406
    %2057 = vmatprep.subr.bf16.mxu0 %v1399
    %2058 = vmatpush2.bf16.msra.mxu0 %v1398
    %2059 = vmatprep.subr.bf16.mxu0 %v1391
    %2060 = vmatpush2.bf16.msra.mxu0 %v1390
    %2061 = vmatprep.subr.bf16.mxu0 %v1383
    %2062 = vmatpush2.bf16.msra.mxu0 %v1382
    %2063 = vmatprep.subr.bf16.mxu0 %v1375
    %2064 = vmatpush2.bf16.msra.mxu0 %v1374
    %2065 = vmatprep.subr.bf16.mxu0 %v1367
    %2066 = vmatpush2.bf16.msra.mxu0 %v1366
    %2067 = vmatprep.subr.bf16.mxu0 %v1359
    %2068 = vmatpush2.bf16.msra.mxu0 %v1358
    %2069 = vmatprep.mubr.bf16.mxu0 %v299
    %2070 = vmatmul.mubr.bf16.gmra.mxu0 %v298
    %v2071 = vpop.f32.mrf.mxu0
    %v2072 = vadd.f32 %v567, %v2071
    %v2073 = vpop.f32.mrf.mxu0
    %v2074 = vadd.f32 %v571, %v2073
    %v2075 = vpop.f32.mrf.mxu0
    %v2076 = vpop.f32.mrf.mxu0
    %2077 = vdwg.mxu0
    %2078 = vmatprep.subr.bf16.mxu0 %v1479
    %2079 = vmatpush1.bf16.msra.mxu0 %v1478
    %2080 = vmatprep.subr.bf16.mxu0 %v1471
    %2081 = vmatpush1.bf16.msra.mxu0 %v1470
    %2082 = vmatprep.subr.bf16.mxu0 %v1463
    %2083 = vmatpush1.bf16.msra.mxu0 %v1462
    %2084 = vmatprep.subr.bf16.mxu0 %v1455
    %2085 = vmatpush1.bf16.msra.mxu0 %v1454
    %2086 = vmatprep.subr.bf16.mxu0 %v1447
    %2087 = vmatpush1.bf16.msra.mxu0 %v1446
    %2088 = vmatprep.subr.bf16.mxu0 %v1439
    %2089 = vmatpush1.bf16.msra.mxu0 %v1438
    %2090 = vmatprep.subr.bf16.mxu0 %v1431
    %2091 = vmatpush1.bf16.msra.mxu0 %v1430
    %2092 = vmatprep.subr.bf16.mxu0 %v1423
    %2093 = vmatpush1.bf16.msra.mxu0 %v1422
    %2094 = vmatprep.subr.bf16.mxu0 0
    %2095 = vmatpush2.bf16.msra.mxu0 0
    %2096 = vmatprep.subr.bf16.mxu0 0
    %2097 = vmatpush2.bf16.msra.mxu0 0
    %2098 = vmatprep.subr.bf16.mxu0 %v1789
    %2099 = vmatpush2.bf16.msra.mxu0 %v1786
    %2100 = vmatprep.subr.bf16.mxu0 %v1519
    %2101 = vmatpush2.bf16.msra.mxu0 %v1518
    %2102 = vmatprep.subr.bf16.mxu0 %v1511
    %2103 = vmatpush2.bf16.msra.mxu0 %v1510
    %2104 = vmatprep.subr.bf16.mxu0 %v1503
    %2105 = vmatpush2.bf16.msra.mxu0 %v1502
    %2106 = vmatprep.subr.bf16.mxu0 %v1495
    %2107 = vmatpush2.bf16.msra.mxu0 %v1494
    %2108 = vmatprep.subr.bf16.mxu0 %v1487
    %2109 = vmatpush2.bf16.msra.mxu0 %v1486
    %2110 = vmatprep.mubr.bf16.mxu0 %v1762
    %2111 = vmatmul.mubr.bf16.gmra.mxu0 %v300
    %v2112 = vpop.f32.mrf.mxu0
    %v2113 = vadd.f32 %v2072, %v2112
    %v2114 = vpop.f32.mrf.mxu0
    %v2115 = vadd.f32 %v2074, %v2114
    %v2116 = vpop.f32.mrf.mxu0
    %v2117 = vpop.f32.mrf.mxu0
    %2118 = vdwg.mxu0
    %v2119 = vmax.f32 %v1867, 0.0
    %v2120 = vmax.f32 %v1869, 0.0
    %v2121 = vmax.f32 %v1949, 0.0
    %v2122 = vmax.f32 %v1951, 0.0
    %v2123 = vmax.f32 %v2031, 0.0
    %v2124 = vmax.f32 %v2033, 0.0
    %v2125 = vmax.f32 %v2113, 0.0
    %v2126 = vmax.f32 %v2115, 0.0
    %v2127 = vpack.c.bf16 %v2119, %v2119
    %v2128 = vpack.c.bf16 %v2120, %v2120
    %v2129 = vpack.c.bf16 %v2121, %v2121
    %v2130 = vpack.c.bf16 %v2122, %v2122
    %v2131 = vpack.c.bf16 %v2123, %v2123
    %v2132 = vpack.c.bf16 %v2124, %v2124
    %v2133 = vpack.c.bf16 %v2125, %v2125
    %v2134 = vpack.c.bf16 %v2126, %v2126
    %v2135 = vld [vmem:[%s9] sm:$0x1]
    %v2137 = vlaneseq
    %v2138 = vshrl.u32 %v2137, 7
    %v2139 = vsub.s32 0, %v2138
    %v2140 = vrot.slane %v2135, %v2139
    %v2142 = vadd.f32 %v2140, 0.0
    %v2143 = vld [vmem:[%s7] sm:$0xff]
    %v2144 = vld [vmem:[%s7 + $0x8] sm:$0xff]
    %v2146 = vpack.i.b16 %v2127, %v2127
    %v2148 = vlaneseq
    %v2149 = vshrl.u32 %v2148, 7
    %v2150 = vsub.s32 0, %v2149
    %v2151 = vrot.slane %v2146, %v2150
    %v2153 = vpack.i.b16 %v2128, %v2128
    %v2155 = vlaneseq
    %v2156 = vshrl.u32 %v2155, 7
    %v2157 = vsub.s32 0, %v2156
    %v2158 = vrot.slane %v2153, %v2157
    %v2160 = vpack.i.b16 %v2129, %v2129
    %v2162 = vlaneseq
    %v2163 = vshrl.u32 %v2162, 7
    %v2164 = vsub.s32 0, %v2163
    %v2165 = vrot.slane %v2160, %v2164
    %v2167 = vpack.i.b16 %v2130, %v2130
    %v2169 = vlaneseq
    %v2170 = vshrl.u32 %v2169, 7
    %v2171 = vsub.s32 0, %v2170
    %v2172 = vrot.slane %v2167, %v2171
    %v2174 = vpack.i.b16 %v2131, %v2131
    %v2176 = vlaneseq
    %v2177 = vshrl.u32 %v2176, 7
    %v2178 = vsub.s32 0, %v2177
    %v2179 = vrot.slane %v2174, %v2178
    %v2181 = vpack.i.b16 %v2132, %v2132
    %v2183 = vlaneseq
    %v2184 = vshrl.u32 %v2183, 7
    %v2185 = vsub.s32 0, %v2184
    %v2186 = vrot.slane %v2181, %v2185
    %v2188 = vpack.i.b16 %v2133, %v2133
    %v2190 = vlaneseq
    %v2191 = vshrl.u32 %v2190, 7
    %v2192 = vsub.s32 0, %v2191
    %v2193 = vrot.slane %v2188, %v2192
    %v2195 = vpack.i.b16 %v2134, %v2134
    %v2197 = vlaneseq
    %v2198 = vshrl.u32 %v2197, 7
    %v2199 = vsub.s32 0, %v2198
    %v2200 = vrot.slane %v2195, %v2199
    %v2209 = vcombine.low %v2151, %v2158
    %v2210 = vcombine.low %v2165, %v2172
    %v2212 = vunpack.c.l.s4 1983009808
    %v2213 = vunpack.c.0.s8 %v2212
    %v2214 = vlaneseq
    %v2215 = vshrl.u32 %v2214, 7
    %v2216 = vsub.s32 %v2213, %v2215
    %v2217 = vrot.slane %v2209, %v2216
    %v2219 = vunpack.c.l.s4 1983009808
    %v2220 = vunpack.c.0.s8 %v2219
    %v2221 = vlaneseq
    %v2222 = vshrl.u32 %v2221, 7
    %v2223 = vsub.s32 %v2220, %v2222
    %v2224 = vrot.slane %v2210, %v2223
    %v2225 = vcombine.low %v2217, %v2224
    %v2226 = vcombine.low %v2179, %v2186
    %v2227 = vcombine.low %v2193, %v2200
    %v2229 = vunpack.c.l.s4 1983009808
    %v2230 = vunpack.c.0.s8 %v2229
    %v2231 = vlaneseq
    %v2232 = vshrl.u32 %v2231, 7
    %v2233 = vsub.s32 %v2230, %v2232
    %v2234 = vrot.slane %v2226, %v2233
    %v2236 = vunpack.c.l.s4 1983009808
    %v2237 = vunpack.c.0.s8 %v2236
    %v2238 = vlaneseq
    %v2239 = vshrl.u32 %v2238, 7
    %v2240 = vsub.s32 %v2237, %v2239
    %v2241 = vrot.slane %v2227, %v2240
    %v2242 = vcombine.low %v2234, %v2241
    %v2245 = vmul.bf16 %v2143, %v2225
    %v2246 = vmul.bf16 %v2144, %v2242
    %v2247 = vld [vmem:[%s8] sm:$0xf]
    %v2248 = vld [vmem:[%s8 + $0x4] sm:$0xf]
    %v2249 = vld [vmem:[%s8 + $0x8] sm:$0xf]
    %v2250 = vld [vmem:[%s8 + $0xc] sm:$0xf]
    %v2251 = vld [vmem:[%s8 + $0x10] sm:$0xf]
    %v2252 = vld [vmem:[%s8 + $0x14] sm:$0xf]
    %v2253 = vld [vmem:[%s8 + $0x18] sm:$0xf]
    %v2254 = vld [vmem:[%s8 + $0x1c] sm:$0xf]
    %v2255 = vld [vmem:[%s8 + $0x20] sm:$0xf]
    %v2256 = vld [vmem:[%s8 + $0x24] sm:$0xf]
    %v2257 = vld [vmem:[%s8 + $0x28] sm:$0xf]
    %v2258 = vld [vmem:[%s8 + $0x2c] sm:$0xf]
    %v2259 = vld [vmem:[%s8 + $0x30] sm:$0xf]
    %v2260 = vld [vmem:[%s8 + $0x34] sm:$0xf]
    %v2261 = vld [vmem:[%s8 + $0x38] sm:$0xf]
    %v2262 = vld [vmem:[%s8 + $0x3c] sm:$0xf]
    %v2263 = vld [vmem:[%s8 + $0x40] sm:$0xf]
    %v2264 = vld [vmem:[%s8 + $0x44] sm:$0xf]
    %v2265 = vld [vmem:[%s8 + $0x48] sm:$0xf]
    %v2266 = vld [vmem:[%s8 + $0x4c] sm:$0xf]
    %v2267 = vld [vmem:[%s8 + $0x50] sm:$0xf]
    %v2268 = vld [vmem:[%s8 + $0x54] sm:$0xf]
    %v2269 = vld [vmem:[%s8 + $0x58] sm:$0xf]
    %v2270 = vld [vmem:[%s8 + $0x5c] sm:$0xf]
    %v2271 = vld [vmem:[%s8 + $0x60] sm:$0xf]
    %v2272 = vld [vmem:[%s8 + $0x64] sm:$0xf]
    %v2273 = vld [vmem:[%s8 + $0x68] sm:$0xf]
    %v2274 = vld [vmem:[%s8 + $0x6c] sm:$0xf]
    %v2275 = vld [vmem:[%s8 + $0x70] sm:$0xf]
    %v2276 = vld [vmem:[%s8 + $0x74] sm:$0xf]
    %v2277 = vld [vmem:[%s8 + $0x78] sm:$0xf]
    %v2278 = vld [vmem:[%s8 + $0x7c] sm:$0xf]
    %v2279 = vld [vmem:[%s8 + $0x80] sm:$0xf]
    %v2280 = vld [vmem:[%s8 + $0x84] sm:$0xf]
    %v2281 = vld [vmem:[%s8 + $0x88] sm:$0xf]
    %v2282 = vld [vmem:[%s8 + $0x8c] sm:$0xf]
    %v2283 = vld [vmem:[%s8 + $0x90] sm:$0xf]
    %v2284 = vld [vmem:[%s8 + $0x94] sm:$0xf]
    %v2285 = vld [vmem:[%s8 + $0x98] sm:$0xf]
    %v2286 = vld [vmem:[%s8 + $0x9c] sm:$0xf]
    %v2287 = vld [vmem:[%s8 + $0xa0] sm:$0xf]
    %v2288 = vld [vmem:[%s8 + $0xa4] sm:$0xf]
    %v2289 = vld [vmem:[%s8 + $0xa8] sm:$0xf]
    %v2290 = vld [vmem:[%s8 + $0xac] sm:$0xf]
    %v2291 = vld [vmem:[%s8 + $0xb0] sm:$0xf]
    %v2292 = vld [vmem:[%s8 + $0xb4] sm:$0xf]
    %v2293 = vld [vmem:[%s8 + $0xb8] sm:$0xf]
    %v2294 = vld [vmem:[%s8 + $0xbc] sm:$0xf]
    %v2295 = vld [vmem:[%s8 + $0xc0] sm:$0xf]
    %v2296 = vld [vmem:[%s8 + $0xc4] sm:$0xf]
    %v2297 = vld [vmem:[%s8 + $0xc8] sm:$0xf]
    %v2298 = vld [vmem:[%s8 + $0xcc] sm:$0xf]
    %v2299 = vld [vmem:[%s8 + $0xd0] sm:$0xf]
    %v2300 = vld [vmem:[%s8 + $0xd4] sm:$0xf]
    %v2301 = vld [vmem:[%s8 + $0xd8] sm:$0xf]
    %v2302 = vld [vmem:[%s8 + $0xdc] sm:$0xf]
    %v2303 = vld [vmem:[%s8 + $0xe0] sm:$0xf]
    %v2304 = vld [vmem:[%s8 + $0xe4] sm:$0xf]
    %v2305 = vld [vmem:[%s8 + $0xe8] sm:$0xf]
    %v2306 = vld [vmem:[%s8 + $0xec] sm:$0xf]
    %v2307 = vld [vmem:[%s8 + $0xf0] sm:$0xf]
    %v2308 = vld [vmem:[%s8 + $0xf4] sm:$0xf]
    %v2309 = vld [vmem:[%s8 + $0xf8] sm:$0xf]
    %v2310 = vld [vmem:[%s8 + $0xfc] sm:$0xf]
    %v2311 = vld [vmem:[%s8 + $0x100] sm:$0xf]
    %v2312 = vld [vmem:[%s8 + $0x104] sm:$0xf]
    %v2313 = vld [vmem:[%s8 + $0x108] sm:$0xf]
    %v2314 = vld [vmem:[%s8 + $0x10c] sm:$0xf]
    %v2315 = vld [vmem:[%s8 + $0x110] sm:$0xf]
    %v2316 = vld [vmem:[%s8 + $0x114] sm:$0xf]
    %v2317 = vld [vmem:[%s8 + $0x118] sm:$0xf]
    %v2318 = vld [vmem:[%s8 + $0x11c] sm:$0xf]
    %v2319 = vld [vmem:[%s8 + $0x120] sm:$0xf]
    %v2320 = vld [vmem:[%s8 + $0x124] sm:$0xf]
    %v2321 = vld [vmem:[%s8 + $0x128] sm:$0xf]
    %v2322 = vld [vmem:[%s8 + $0x12c] sm:$0xf]
    %v2323 = vld [vmem:[%s8 + $0x130] sm:$0xf]
    %v2324 = vld [vmem:[%s8 + $0x134] sm:$0xf]
    %v2325 = vld [vmem:[%s8 + $0x138] sm:$0xf]
    %v2326 = vld [vmem:[%s8 + $0x13c] sm:$0xf]
    %v2327 = vld [vmem:[%s8 + $0x140] sm:$0xf]
    %v2328 = vld [vmem:[%s8 + $0x144] sm:$0xf]
    %v2329 = vld [vmem:[%s8 + $0x148] sm:$0xf]
    %v2330 = vld [vmem:[%s8 + $0x14c] sm:$0xf]
    %v2331 = vld [vmem:[%s8 + $0x150] sm:$0xf]
    %v2332 = vld [vmem:[%s8 + $0x154] sm:$0xf]
    %v2333 = vld [vmem:[%s8 + $0x158] sm:$0xf]
    %v2334 = vld [vmem:[%s8 + $0x15c] sm:$0xf]
    %v2335 = vld [vmem:[%s8 + $0x160] sm:$0xf]
    %v2336 = vld [vmem:[%s8 + $0x164] sm:$0xf]
    %v2337 = vld [vmem:[%s8 + $0x168] sm:$0xf]
    %v2338 = vld [vmem:[%s8 + $0x16c] sm:$0xf]
    %v2339 = vld [vmem:[%s8 + $0x170] sm:$0xf]
    %v2340 = vld [vmem:[%s8 + $0x174] sm:$0xf]
    %v2341 = vld [vmem:[%s8 + $0x178] sm:$0xf]
    %v2342 = vld [vmem:[%s8 + $0x17c] sm:$0xf]
    %v2343 = vld [vmem:[%s8 + $0x180] sm:$0xf]
    %v2344 = vld [vmem:[%s8 + $0x184] sm:$0xf]
    %v2345 = vld [vmem:[%s8 + $0x188] sm:$0xf]
    %v2346 = vld [vmem:[%s8 + $0x18c] sm:$0xf]
    %v2347 = vld [vmem:[%s8 + $0x190] sm:$0xf]
    %v2348 = vld [vmem:[%s8 + $0x194] sm:$0xf]
    %v2349 = vld [vmem:[%s8 + $0x198] sm:$0xf]
    %v2350 = vld [vmem:[%s8 + $0x19c] sm:$0xf]
    %v2351 = vld [vmem:[%s8 + $0x1a0] sm:$0xf]
    %v2352 = vld [vmem:[%s8 + $0x1a4] sm:$0xf]
    %v2353 = vld [vmem:[%s8 + $0x1a8] sm:$0xf]
    %v2354 = vld [vmem:[%s8 + $0x1ac] sm:$0xf]
    %v2355 = vld [vmem:[%s8 + $0x1b0] sm:$0xf]
    %v2356 = vld [vmem:[%s8 + $0x1b4] sm:$0xf]
    %v2357 = vld [vmem:[%s8 + $0x1b8] sm:$0xf]
    %v2358 = vld [vmem:[%s8 + $0x1bc] sm:$0xf]
    %v2359 = vld [vmem:[%s8 + $0x1c0] sm:$0x3]
    %v2362 = vcombine.high %v2245, %v2245
    %v2364 = vunpack.c.l.s4 1983009808
    %v2365 = vunpack.c.0.s8 %v2364
    %v2366 = vlaneseq
    %v2367 = vshrl.u32 %v2366, 7
    %v2368 = vsub.s32 %v2365, %v2367
    %v2369 = vrot.slane %v2245, %v2368
    %v2371 = vunpack.c.l.s4 1983009808
    %v2372 = vunpack.c.0.s8 %v2371
    %v2373 = vlaneseq
    %v2374 = vshrl.u32 %v2373, 7
    %v2375 = vsub.s32 %v2372, %v2374
    %v2376 = vrot.slane %v2362, %v2375
    %v2377 = vcombine.high %v2369, %v2369
    %v2378 = vcombine.high %v2376, %v2376
    %v2379 = vcombine.high %v2246, %v2246
    %v2381 = vunpack.c.l.s4 1983009808
    %v2382 = vunpack.c.0.s8 %v2381
    %v2383 = vlaneseq
    %v2384 = vshrl.u32 %v2383, 7
    %v2385 = vsub.s32 %v2382, %v2384
    %v2386 = vrot.slane %v2246, %v2385
    %v2388 = vunpack.c.l.s4 1983009808
    %v2389 = vunpack.c.0.s8 %v2388
    %v2390 = vlaneseq
    %v2391 = vshrl.u32 %v2390, 7
    %v2392 = vsub.s32 %v2389, %v2391
    %v2393 = vrot.slane %v2379, %v2392
    %v2394 = vcombine.high %v2386, %v2386
    %v2395 = vcombine.high %v2393, %v2393
    %v2516 = vunpack.c.l.b16 %v2247
    %v2517 = vunpack.c.l.b16 %v2248
    %v2518 = vunpack.c.l.b16 %v2249
    %v2519 = vunpack.c.l.b16 %v2250
    %v2520 = vunpack.c.l.b16 %v2251
    %v2521 = vunpack.c.l.b16 %v2252
    %v2522 = vunpack.c.l.b16 %v2253
    %v2523 = vunpack.c.l.b16 %v2254
    %v2524 = vunpack.c.l.b16 %v2255
    %v2525 = vunpack.c.l.b16 %v2256
    %v2526 = vunpack.c.l.b16 %v2257
    %v2527 = vunpack.c.l.b16 %v2258
    %v2528 = vunpack.c.l.b16 %v2259
    %v2529 = vunpack.c.l.b16 %v2260
    %v2530 = vunpack.c.l.b16 %v2261
    %v2531 = vunpack.c.l.b16 %v2262
    %v2532 = vunpack.c.l.b16 %v2263
    %v2533 = vunpack.c.l.b16 %v2264
    %v2534 = vunpack.c.l.b16 %v2265
    %v2535 = vunpack.c.l.b16 %v2266
    %v2536 = vunpack.c.l.b16 %v2267
    %v2537 = vunpack.c.l.b16 %v2268
    %v2538 = vunpack.c.l.b16 %v2269
    %v2539 = vunpack.c.l.b16 %v2270
    %v2540 = vunpack.c.l.b16 %v2271
    %v2541 = vunpack.c.l.b16 %v2272
    %v2542 = vunpack.c.l.b16 %v2273
    %v2543 = vunpack.c.l.b16 %v2274
    %v2544 = vunpack.c.l.b16 %v2275
    %v2545 = vunpack.c.l.b16 %v2276
    %v2546 = vunpack.c.l.b16 %v2277
    %v2547 = vunpack.c.l.b16 %v2278
    %v2548 = vunpack.c.l.b16 %v2279
    %v2549 = vunpack.c.l.b16 %v2280
    %v2550 = vunpack.c.l.b16 %v2281
    %v2551 = vunpack.c.l.b16 %v2282
    %v2552 = vunpack.c.l.b16 %v2283
    %v2553 = vunpack.c.l.b16 %v2284
    %v2554 = vunpack.c.l.b16 %v2285
    %v2555 = vunpack.c.l.b16 %v2286
    %v2556 = vunpack.c.l.b16 %v2287
    %v2557 = vunpack.c.l.b16 %v2288
    %v2558 = vunpack.c.l.b16 %v2289
    %v2559 = vunpack.c.l.b16 %v2290
    %v2560 = vunpack.c.l.b16 %v2291
    %v2561 = vunpack.c.l.b16 %v2292
    %v2562 = vunpack.c.l.b16 %v2293
    %v2563 = vunpack.c.l.b16 %v2294
    %v2564 = vunpack.c.l.b16 %v2295
    %v2565 = vunpack.c.l.b16 %v2296
    %v2566 = vunpack.c.l.b16 %v2297
    %v2567 = vunpack.c.l.b16 %v2298
    %v2568 = vunpack.c.l.b16 %v2299
    %v2569 = vunpack.c.l.b16 %v2300
    %v2570 = vunpack.c.l.b16 %v2301
    %v2571 = vunpack.c.l.b16 %v2302
    %v2572 = vunpack.c.l.b16 %v2303
    %v2573 = vunpack.c.l.b16 %v2304
    %v2574 = vunpack.c.l.b16 %v2305
    %v2575 = vunpack.c.l.b16 %v2306
    %v2576 = vunpack.c.l.b16 %v2307
    %v2577 = vunpack.c.l.b16 %v2308
    %v2578 = vunpack.c.l.b16 %v2309
    %v2579 = vunpack.c.l.b16 %v2310
    %v2580 = vunpack.c.l.b16 %v2311
    %v2581 = vunpack.c.l.b16 %v2312
    %v2582 = vunpack.c.l.b16 %v2313
    %v2583 = vunpack.c.l.b16 %v2314
    %v2584 = vunpack.c.l.b16 %v2315
    %v2585 = vunpack.c.l.b16 %v2316
    %v2586 = vunpack.c.l.b16 %v2317
    %v2587 = vunpack.c.l.b16 %v2318
    %v2588 = vunpack.c.l.b16 %v2319
    %v2589 = vunpack.c.l.b16 %v2320
    %v2590 = vunpack.c.l.b16 %v2321
    %v2591 = vunpack.c.l.b16 %v2322
    %v2592 = vunpack.c.l.b16 %v2323
    %v2593 = vunpack.c.l.b16 %v2324
    %v2594 = vunpack.c.l.b16 %v2325
    %v2595 = vunpack.c.l.b16 %v2326
    %v2596 = vunpack.c.l.b16 %v2327
    %v2597 = vunpack.c.l.b16 %v2328
    %v2598 = vunpack.c.l.b16 %v2329
    %v2599 = vunpack.c.l.b16 %v2330
    %v2600 = vunpack.c.l.b16 %v2331
    %v2601 = vunpack.c.l.b16 %v2332
    %v2602 = vunpack.c.l.b16 %v2333
    %v2603 = vunpack.c.l.b16 %v2334
    %v2604 = vunpack.c.l.b16 %v2335
    %v2605 = vunpack.c.l.b16 %v2336
    %v2606 = vunpack.c.l.b16 %v2337
    %v2607 = vunpack.c.l.b16 %v2338
    %v2608 = vunpack.c.l.b16 %v2339
    %v2609 = vunpack.c.l.b16 %v2340
    %v2610 = vunpack.c.l.b16 %v2341
    %v2611 = vunpack.c.l.b16 %v2342
    %v2612 = vunpack.c.l.b16 %v2343
    %v2613 = vunpack.c.l.b16 %v2344
    %v2614 = vunpack.c.l.b16 %v2345
    %v2615 = vunpack.c.l.b16 %v2346
    %v2616 = vunpack.c.l.b16 %v2347
    %v2617 = vunpack.c.l.b16 %v2348
    %v2618 = vunpack.c.l.b16 %v2349
    %v2619 = vunpack.c.l.b16 %v2350
    %v2620 = vunpack.c.l.b16 %v2351
    %v2621 = vunpack.c.l.b16 %v2352
    %v2622 = vunpack.c.l.b16 %v2353
    %v2623 = vunpack.c.l.b16 %v2354
    %v2624 = vunpack.c.l.b16 %v2355
    %v2625 = vunpack.c.l.b16 %v2356
    %v2626 = vunpack.c.l.b16 %v2357
    %v2627 = vunpack.c.l.b16 %v2358
    %v2628 = vunpack.c.l.b16 %v2359
    %v2629 = vpack.c.b16 %v2517, %v2516
    %v2630 = vpack.c.b16 %v2519, %v2518
    %v2631 = vpack.c.b16 %v2521, %v2520
    %v2632 = vpack.c.b16 %v2523, %v2522
    %v2633 = vpack.c.b16 %v2525, %v2524
    %v2634 = vpack.c.b16 %v2527, %v2526
    %v2635 = vpack.c.b16 %v2529, %v2528
    %v2636 = vpack.c.b16 %v2531, %v2530
    %v2637 = vpack.c.b16 %v2533, %v2532
    %v2638 = vpack.c.b16 %v2535, %v2534
    %v2639 = vpack.c.b16 %v2537, %v2536
    %v2640 = vpack.c.b16 %v2539, %v2538
    %v2641 = vpack.c.b16 %v2541, %v2540
    %v2642 = vpack.c.b16 %v2543, %v2542
    %v2643 = vpack.c.b16 %v2545, %v2544
    %v2644 = vpack.c.b16 %v2547, %v2546
    %v2645 = vpack.c.b16 %v2549, %v2548
    %v2646 = vpack.c.b16 %v2551, %v2550
    %v2647 = vpack.c.b16 %v2553, %v2552
    %v2648 = vpack.c.b16 %v2555, %v2554
    %v2649 = vpack.c.b16 %v2557, %v2556
    %v2650 = vpack.c.b16 %v2559, %v2558
    %v2651 = vpack.c.b16 %v2561, %v2560
    %v2652 = vpack.c.b16 %v2563, %v2562
    %v2653 = vpack.c.b16 %v2565, %v2564
    %v2654 = vpack.c.b16 %v2567, %v2566
    %v2655 = vpack.c.b16 %v2569, %v2568
    %v2656 = vpack.c.b16 %v2571, %v2570
    %v2657 = vpack.c.b16 %v2573, %v2572
    %v2658 = vpack.c.b16 %v2575, %v2574
    %v2659 = vpack.c.b16 %v2577, %v2576
    %v2660 = vpack.c.b16 %v2579, %v2578
    %v2661 = vpack.c.b16 %v2581, %v2580
    %v2662 = vpack.c.b16 %v2583, %v2582
    %v2663 = vpack.c.b16 %v2585, %v2584
    %v2664 = vpack.c.b16 %v2587, %v2586
    %v2665 = vpack.c.b16 %v2589, %v2588
    %v2666 = vpack.c.b16 %v2591, %v2590
    %v2667 = vpack.c.b16 %v2593, %v2592
    %v2668 = vpack.c.b16 %v2595, %v2594
    %v2669 = vpack.c.b16 %v2597, %v2596
    %v2670 = vpack.c.b16 %v2599, %v2598
    %v2671 = vpack.c.b16 %v2601, %v2600
    %v2672 = vpack.c.b16 %v2603, %v2602
    %v2673 = vpack.c.b16 %v2605, %v2604
    %v2674 = vpack.c.b16 %v2607, %v2606
    %v2675 = vpack.c.b16 %v2609, %v2608
    %v2676 = vpack.c.b16 %v2611, %v2610
    %v2677 = vpack.c.b16 %v2613, %v2612
    %v2678 = vpack.c.b16 %v2615, %v2614
    %v2679 = vpack.c.b16 %v2617, %v2616
    %v2680 = vpack.c.b16 %v2619, %v2618
    %v2681 = vpack.c.b16 %v2621, %v2620
    %v2682 = vpack.c.b16 %v2623, %v2622
    %v2683 = vpack.c.b16 %v2625, %v2624
    %v2684 = vpack.c.b16 %v2627, %v2626
    %v2685 = vpack.c.b16 %v2628, %v2628
    %vm2742 = vcmask 31744
    %v2744 = vsel %vm2742, %v2395, 0
    %vm2746 = vcmask 1041408
    %v2748 = vsel %vm2746, %v2685, 0
    %2750 = vmatprep.subr.bf16.mxu0 0
    %2751 = vmatpush1.bf16.msra.mxu0 %v2636
    %2752 = vmatprep.subr.bf16.mxu0 0
    %2753 = vmatpush1.bf16.msra.mxu0 %v2635
    %2754 = vmatprep.subr.bf16.mxu0 0
    %2755 = vmatpush1.bf16.msra.mxu0 %v2634
    %2756 = vmatprep.subr.bf16.mxu0 0
    %2757 = vmatpush1.bf16.msra.mxu0 %v2633
    %2758 = vmatprep.subr.bf16.mxu0 0
    %2759 = vmatpush1.bf16.msra.mxu0 %v2632
    %2760 = vmatprep.subr.bf16.mxu0 0
    %2761 = vmatpush1.bf16.msra.mxu0 %v2631
    %2762 = vmatprep.subr.bf16.mxu0 0
    %2763 = vmatpush1.bf16.msra.mxu0 %v2630
    %2764 = vmatprep.subr.bf16.mxu0 0
    %2765 = vmatpush1.bf16.msra.mxu0 %v2629
    %2766 = vmatprep.subr.bf16.mxu0 0
    %2767 = vmatpush2.bf16.msra.mxu0 %v2644
    %2768 = vmatprep.subr.bf16.mxu0 0
    %2769 = vmatpush2.bf16.msra.mxu0 %v2643
    %2770 = vmatprep.subr.bf16.mxu0 0
    %2771 = vmatpush2.bf16.msra.mxu0 %v2642
    %2772 = vmatprep.subr.bf16.mxu0 0
    %2773 = vmatpush2.bf16.msra.mxu0 %v2641
    %2774 = vmatprep.subr.bf16.mxu0 0
    %2775 = vmatpush2.bf16.msra.mxu0 %v2640
    %2776 = vmatprep.subr.bf16.mxu0 0
    %2777 = vmatpush2.bf16.msra.mxu0 %v2639
    %2778 = vmatprep.subr.bf16.mxu0 0
    %2779 = vmatpush2.bf16.msra.mxu0 %v2638
    %2780 = vmatprep.subr.bf16.mxu0 0
    %2781 = vmatpush2.bf16.msra.mxu0 %v2637
    %2782 = vmatprep.mubr.bf16.mxu0 %v2377
    %2783 = vmatmul.mubr.bf16.gmra.mxu0 %v2369
    %v2784 = vpop.f32.mrf.mxu0
    %v2785 = vadd.f32 0.0, %v2784
    %v2786 = vpop.f32.mrf.mxu0
    %v2787 = vpop.f32.mrf.mxu0
    %v2788 = vpop.f32.mrf.mxu0
    %2789 = vdwg.mxu0
    %2790 = vmatprep.subr.bf16.mxu0 0
    %2791 = vmatpush1.bf16.msra.mxu0 %v2652
    %2792 = vmatprep.subr.bf16.mxu0 0
    %2793 = vmatpush1.bf16.msra.mxu0 %v2651
    %2794 = vmatprep.subr.bf16.mxu0 0
    %2795 = vmatpush1.bf16.msra.mxu0 %v2650
    %2796 = vmatprep.subr.bf16.mxu0 0
    %2797 = vmatpush1.bf16.msra.mxu0 %v2649
    %2798 = vmatprep.subr.bf16.mxu0 0
    %2799 = vmatpush1.bf16.msra.mxu0 %v2648
    %2800 = vmatprep.subr.bf16.mxu0 0
    %2801 = vmatpush1.bf16.msra.mxu0 %v2647
    %2802 = vmatprep.subr.bf16.mxu0 0
    %2803 = vmatpush1.bf16.msra.mxu0 %v2646
    %2804 = vmatprep.subr.bf16.mxu0 0
    %2805 = vmatpush1.bf16.msra.mxu0 %v2645
    %2806 = vmatprep.subr.bf16.mxu0 0
    %2807 = vmatpush2.bf16.msra.mxu0 %v2660
    %2808 = vmatprep.subr.bf16.mxu0 0
    %2809 = vmatpush2.bf16.msra.mxu0 %v2659
    %2810 = vmatprep.subr.bf16.mxu0 0
    %2811 = vmatpush2.bf16.msra.mxu0 %v2658
    %2812 = vmatprep.subr.bf16.mxu0 0
    %2813 = vmatpush2.bf16.msra.mxu0 %v2657
    %2814 = vmatprep.subr.bf16.mxu0 0
    %2815 = vmatpush2.bf16.msra.mxu0 %v2656
    %2816 = vmatprep.subr.bf16.mxu0 0
    %2817 = vmatpush2.bf16.msra.mxu0 %v2655
    %2818 = vmatprep.subr.bf16.mxu0 0
    %2819 = vmatpush2.bf16.msra.mxu0 %v2654
    %2820 = vmatprep.subr.bf16.mxu0 0
    %2821 = vmatpush2.bf16.msra.mxu0 %v2653
    %2822 = vmatprep.mubr.bf16.mxu0 %v2378
    %2823 = vmatmul.mubr.bf16.gmra.mxu0 %v2376
    %v2824 = vpop.f32.mrf.mxu0
    %v2825 = vadd.f32 %v2785, %v2824
    %v2826 = vpop.f32.mrf.mxu0
    %v2827 = vpop.f32.mrf.mxu0
    %v2828 = vpop.f32.mrf.mxu0
    %2829 = vdwg.mxu0
    %2830 = vmatprep.subr.bf16.mxu0 0
    %2831 = vmatpush1.bf16.msra.mxu0 %v2668
    %2832 = vmatprep.subr.bf16.mxu0 0
    %2833 = vmatpush1.bf16.msra.mxu0 %v2667
    %2834 = vmatprep.subr.bf16.mxu0 0
    %2835 = vmatpush1.bf16.msra.mxu0 %v2666
    %2836 = vmatprep.subr.bf16.mxu0 0
    %2837 = vmatpush1.bf16.msra.mxu0 %v2665
    %2838 = vmatprep.subr.bf16.mxu0 0
    %2839 = vmatpush1.bf16.msra.mxu0 %v2664
    %2840 = vmatprep.subr.bf16.mxu0 0
    %2841 = vmatpush1.bf16.msra.mxu0 %v2663
    %2842 = vmatprep.subr.bf16.mxu0 0
    %2843 = vmatpush1.bf16.msra.mxu0 %v2662
    %2844 = vmatprep.subr.bf16.mxu0 0
    %2845 = vmatpush1.bf16.msra.mxu0 %v2661
    %2846 = vmatprep.subr.bf16.mxu0 0
    %2847 = vmatpush2.bf16.msra.mxu0 %v2676
    %2848 = vmatprep.subr.bf16.mxu0 0
    %2849 = vmatpush2.bf16.msra.mxu0 %v2675
    %2850 = vmatprep.subr.bf16.mxu0 0
    %2851 = vmatpush2.bf16.msra.mxu0 %v2674
    %2852 = vmatprep.subr.bf16.mxu0 0
    %2853 = vmatpush2.bf16.msra.mxu0 %v2673
    %2854 = vmatprep.subr.bf16.mxu0 0
    %2855 = vmatpush2.bf16.msra.mxu0 %v2672
    %2856 = vmatprep.subr.bf16.mxu0 0
    %2857 = vmatpush2.bf16.msra.mxu0 %v2671
    %2858 = vmatprep.subr.bf16.mxu0 0
    %2859 = vmatpush2.bf16.msra.mxu0 %v2670
    %2860 = vmatprep.subr.bf16.mxu0 0
    %2861 = vmatpush2.bf16.msra.mxu0 %v2669
    %2862 = vmatprep.mubr.bf16.mxu0 %v2394
    %2863 = vmatmul.mubr.bf16.gmra.mxu0 %v2386
    %v2864 = vpop.f32.mrf.mxu0
    %v2865 = vadd.f32 %v2825, %v2864
    %v2866 = vpop.f32.mrf.mxu0
    %v2867 = vpop.f32.mrf.mxu0
    %v2868 = vpop.f32.mrf.mxu0
    %2869 = vdwg.mxu0
    %2870 = vmatprep.subr.bf16.mxu0 0
    %2871 = vmatpush1.bf16.msra.mxu0 %v2684
    %2872 = vmatprep.subr.bf16.mxu0 0
    %2873 = vmatpush1.bf16.msra.mxu0 %v2683
    %2874 = vmatprep.subr.bf16.mxu0 0
    %2875 = vmatpush1.bf16.msra.mxu0 %v2682
    %2876 = vmatprep.subr.bf16.mxu0 0
    %2877 = vmatpush1.bf16.msra.mxu0 %v2681
    %2878 = vmatprep.subr.bf16.mxu0 0
    %2879 = vmatpush1.bf16.msra.mxu0 %v2680
    %2880 = vmatprep.subr.bf16.mxu0 0
    %2881 = vmatpush1.bf16.msra.mxu0 %v2679
    %2882 = vmatprep.subr.bf16.mxu0 0
    %2883 = vmatpush1.bf16.msra.mxu0 %v2678
    %2884 = vmatprep.subr.bf16.mxu0 0
    %2885 = vmatpush1.bf16.msra.mxu0 %v2677
    %2886 = vmatprep.subr.bf16.mxu0 0
    %2887 = vmatpush2.bf16.msra.mxu0 0
    %2888 = vmatprep.subr.bf16.mxu0 0
    %2889 = vmatpush2.bf16.msra.mxu0 0
    %2890 = vmatprep.subr.bf16.mxu0 0
    %2891 = vmatpush2.bf16.msra.mxu0 0
    %2892 = vmatprep.subr.bf16.mxu0 0
    %2893 = vmatpush2.bf16.msra.mxu0 0
    %2894 = vmatprep.subr.bf16.mxu0 0
    %2895 = vmatpush2.bf16.msra.mxu0 0
    %2896 = vmatprep.subr.bf16.mxu0 0
    %2897 = vmatpush2.bf16.msra.mxu0 0
    %2898 = vmatprep.subr.bf16.mxu0 0
    %2899 = vmatpush2.bf16.msra.mxu0 0
    %2900 = vmatprep.subr.bf16.mxu0 0
    %2901 = vmatpush2.bf16.msra.mxu0 %v2748
    %2902 = vmatprep.mubr.bf16.mxu0 %v2744
    %2903 = vmatmul.mubr.bf16.gmra.mxu0 %v2393
    %v2904 = vpop.f32.mrf.mxu0
    %v2905 = vadd.f32 %v2865, %v2904
    %v2906 = vpop.f32.mrf.mxu0
    %v2907 = vpop.f32.mrf.mxu0
    %v2908 = vpop.f32.mrf.mxu0
    %2909 = vdwg.mxu0
    %v2910 = vadd.f32 %v2142, %v2905
    %s2911 = scalar_lea.vmem %s7, 16
    %v2912 = vld [vmem:[%s2911] sm:$0xff]
    %v2913 = vld [vmem:[%s2911 + $0x8] sm:$0xff]
    %v2914 = vshrl.u32 %v2127, 16
    %v2915 = vpack.i.b16 %v2914, %v2914
    %v2917 = vlaneseq
    %v2918 = vshrl.u32 %v2917, 7
    %v2919 = vsub.s32 0, %v2918
    %v2920 = vrot.slane %v2915, %v2919
    %v2921 = vshrl.u32 %v2128, 16
    %v2922 = vpack.i.b16 %v2921, %v2921
    %v2924 = vlaneseq
    %v2925 = vshrl.u32 %v2924, 7
    %v2926 = vsub.s32 0, %v2925
    %v2927 = vrot.slane %v2922, %v2926
    %v2928 = vshrl.u32 %v2129, 16
    %v2929 = vpack.i.b16 %v2928, %v2928
    %v2931 = vlaneseq
    %v2932 = vshrl.u32 %v2931, 7
    %v2933 = vsub.s32 0, %v2932
    %v2934 = vrot.slane %v2929, %v2933
    %v2935 = vshrl.u32 %v2130, 16
    %v2936 = vpack.i.b16 %v2935, %v2935
    %v2938 = vlaneseq
    %v2939 = vshrl.u32 %v2938, 7
    %v2940 = vsub.s32 0, %v2939
    %v2941 = vrot.slane %v2936, %v2940
    %v2942 = vshrl.u32 %v2131, 16
    %v2943 = vpack.i.b16 %v2942, %v2942
    %v2945 = vlaneseq
    %v2946 = vshrl.u32 %v2945, 7
    %v2947 = vsub.s32 0, %v2946
    %v2948 = vrot.slane %v2943, %v2947
    %v2949 = vshrl.u32 %v2132, 16
    %v2950 = vpack.i.b16 %v2949, %v2949
    %v2952 = vlaneseq
    %v2953 = vshrl.u32 %v2952, 7
    %v2954 = vsub.s32 0, %v2953
    %v2955 = vrot.slane %v2950, %v2954
    %v2956 = vshrl.u32 %v2133, 16
    %v2957 = vpack.i.b16 %v2956, %v2956
    %v2959 = vlaneseq
    %v2960 = vshrl.u32 %v2959, 7
    %v2961 = vsub.s32 0, %v2960
    %v2962 = vrot.slane %v2957, %v2961
    %v2963 = vshrl.u32 %v2134, 16
    %v2964 = vpack.i.b16 %v2963, %v2963
    %v2966 = vlaneseq
    %v2967 = vshrl.u32 %v2966, 7
    %v2968 = vsub.s32 0, %v2967
    %v2969 = vrot.slane %v2964, %v2968
    %v2978 = vcombine.low %v2920, %v2927
    %v2979 = vcombine.low %v2934, %v2941
    %v2981 = vunpack.c.l.s4 1983009808
    %v2982 = vunpack.c.0.s8 %v2981
    %v2983 = vlaneseq
    %v2984 = vshrl.u32 %v2983, 7
    %v2985 = vsub.s32 %v2982, %v2984
    %v2986 = vrot.slane %v2978, %v2985
    %v2988 = vunpack.c.l.s4 1983009808
    %v2989 = vunpack.c.0.s8 %v2988
    %v2990 = vlaneseq
    %v2991 = vshrl.u32 %v2990, 7
    %v2992 = vsub.s32 %v2989, %v2991
    %v2993 = vrot.slane %v2979, %v2992
    %v2994 = vcombine.low %v2986, %v2993
    %v2995 = vcombine.low %v2948, %v2955
    %v2996 = vcombine.low %v2962, %v2969
    %v2998 = vunpack.c.l.s4 1983009808
    %v2999 = vunpack.c.0.s8 %v2998
    %v3000 = vlaneseq
    %v3001 = vshrl.u32 %v3000, 7
    %v3002 = vsub.s32 %v2999, %v3001
    %v3003 = vrot.slane %v2995, %v3002
    %v3005 = vunpack.c.l.s4 1983009808
    %v3006 = vunpack.c.0.s8 %v3005
    %v3007 = vlaneseq
    %v3008 = vshrl.u32 %v3007, 7
    %v3009 = vsub.s32 %v3006, %v3008
    %v3010 = vrot.slane %v2996, %v3009
    %v3011 = vcombine.low %v3003, %v3010
    %v3014 = vmul.bf16 %v2912, %v2994
    %v3015 = vmul.bf16 %v2913, %v3011
    %s3016 = scalar_lea.vmem %s8, 452
    %v3017 = vld [vmem:[%s3016] sm:$0xf]
    %v3018 = vld [vmem:[%s3016 + $0x4] sm:$0xf]
    %v3019 = vld [vmem:[%s3016 + $0x8] sm:$0xf]
    %v3020 = vld [vmem:[%s3016 + $0xc] sm:$0xf]
    %v3021 = vld [vmem:[%s3016 + $0x10] sm:$0xf]
    %v3022 = vld [vmem:[%s3016 + $0x14] sm:$0xf]
    %v3023 = vld [vmem:[%s3016 + $0x18] sm:$0xf]
    %v3024 = vld [vmem:[%s3016 + $0x1c] sm:$0xf]
    %v3025 = vld [vmem:[%s3016 + $0x20] sm:$0xf]
    %v3026 = vld [vmem:[%s3016 + $0x24] sm:$0xf]
    %v3027 = vld [vmem:[%s3016 + $0x28] sm:$0xf]
    %v3028 = vld [vmem:[%s3016 + $0x2c] sm:$0xf]
    %v3029 = vld [vmem:[%s3016 + $0x30] sm:$0xf]
    %v3030 = vld [vmem:[%s3016 + $0x34] sm:$0xf]
    %v3031 = vld [vmem:[%s3016 + $0x38] sm:$0xf]
    %v3032 = vld [vmem:[%s3016 + $0x3c] sm:$0xf]
    %v3033 = vld [vmem:[%s3016 + $0x40] sm:$0xf]
    %v3034 = vld [vmem:[%s3016 + $0x44] sm:$0xf]
    %v3035 = vld [vmem:[%s3016 + $0x48] sm:$0xf]
    %v3036 = vld [vmem:[%s3016 + $0x4c] sm:$0xf]
    %v3037 = vld [vmem:[%s3016 + $0x50] sm:$0xf]
    %v3038 = vld [vmem:[%s3016 + $0x54] sm:$0xf]
    %v3039 = vld [vmem:[%s3016 + $0x58] sm:$0xf]
    %v3040 = vld [vmem:[%s3016 + $0x5c] sm:$0xf]
    %v3041 = vld [vmem:[%s3016 + $0x60] sm:$0xf]
    %v3042 = vld [vmem:[%s3016 + $0x64] sm:$0xf]
    %v3043 = vld [vmem:[%s3016 + $0x68] sm:$0xf]
    %v3044 = vld [vmem:[%s3016 + $0x6c] sm:$0xf]
    %v3045 = vld [vmem:[%s3016 + $0x70] sm:$0xf]
    %v3046 = vld [vmem:[%s3016 + $0x74] sm:$0xf]
    %v3047 = vld [vmem:[%s3016 + $0x78] sm:$0xf]
    %v3048 = vld [vmem:[%s3016 + $0x7c] sm:$0xf]
    %v3049 = vld [vmem:[%s3016 + $0x80] sm:$0xf]
    %v3050 = vld [vmem:[%s3016 + $0x84] sm:$0xf]
    %v3051 = vld [vmem:[%s3016 + $0x88] sm:$0xf]
    %v3052 = vld [vmem:[%s3016 + $0x8c] sm:$0xf]
    %v3053 = vld [vmem:[%s3016 + $0x90] sm:$0xf]
    %v3054 = vld [vmem:[%s3016 + $0x94] sm:$0xf]
    %v3055 = vld [vmem:[%s3016 + $0x98] sm:$0xf]
    %v3056 = vld [vmem:[%s3016 + $0x9c] sm:$0xf]
    %v3057 = vld [vmem:[%s3016 + $0xa0] sm:$0xf]
    %v3058 = vld [vmem:[%s3016 + $0xa4] sm:$0xf]
    %v3059 = vld [vmem:[%s3016 + $0xa8] sm:$0xf]
    %v3060 = vld [vmem:[%s3016 + $0xac] sm:$0xf]
    %v3061 = vld [vmem:[%s3016 + $0xb0] sm:$0xf]
    %v3062 = vld [vmem:[%s3016 + $0xb4] sm:$0xf]
    %v3063 = vld [vmem:[%s3016 + $0xb8] sm:$0xf]
    %v3064 = vld [vmem:[%s3016 + $0xbc] sm:$0xf]
    %v3065 = vld [vmem:[%s3016 + $0xc0] sm:$0xf]
    %v3066 = vld [vmem:[%s3016 + $0xc4] sm:$0xf]
    %v3067 = vld [vmem:[%s3016 + $0xc8] sm:$0xf]
    %v3068 = vld [vmem:[%s3016 + $0xcc] sm:$0xf]
    %v3069 = vld [vmem:[%s3016 + $0xd0] sm:$0xf]
    %v3070 = vld [vmem:[%s3016 + $0xd4] sm:$0xf]
    %v3071 = vld [vmem:[%s3016 + $0xd8] sm:$0xf]
    %v3072 = vld [vmem:[%s3016 + $0xdc] sm:$0xf]
    %v3073 = vld [vmem:[%s3016 + $0xe0] sm:$0xf]
    %v3074 = vld [vmem:[%s3016 + $0xe4] sm:$0xf]
    %v3075 = vld [vmem:[%s3016 + $0xe8] sm:$0xf]
    %v3076 = vld [vmem:[%s3016 + $0xec] sm:$0xf]
    %v3077 = vld [vmem:[%s3016 + $0xf0] sm:$0xf]
    %v3078 = vld [vmem:[%s3016 + $0xf4] sm:$0xf]
    %v3079 = vld [vmem:[%s3016 + $0xf8] sm:$0xf]
    %v3080 = vld [vmem:[%s3016 + $0xfc] sm:$0xf]
    %v3081 = vld [vmem:[%s3016 + $0x100] sm:$0xf]
    %v3082 = vld [vmem:[%s3016 + $0x104] sm:$0xf]
    %v3083 = vld [vmem:[%s3016 + $0x108] sm:$0xf]
    %v3084 = vld [vmem:[%s3016 + $0x10c] sm:$0xf]
    %v3085 = vld [vmem:[%s3016 + $0x110] sm:$0xf]
    %v3086 = vld [vmem:[%s3016 + $0x114] sm:$0xf]
    %v3087 = vld [vmem:[%s3016 + $0x118] sm:$0xf]
    %v3088 = vld [vmem:[%s3016 + $0x11c] sm:$0xf]
    %v3089 = vld [vmem:[%s3016 + $0x120] sm:$0xf]
    %v3090 = vld [vmem:[%s3016 + $0x124] sm:$0xf]
    %v3091 = vld [vmem:[%s3016 + $0x128] sm:$0xf]
    %v3092 = vld [vmem:[%s3016 + $0x12c] sm:$0xf]
    %v3093 = vld [vmem:[%s3016 + $0x130] sm:$0xf]
    %v3094 = vld [vmem:[%s3016 + $0x134] sm:$0xf]
    %v3095 = vld [vmem:[%s3016 + $0x138] sm:$0xf]
    %v3096 = vld [vmem:[%s3016 + $0x13c] sm:$0xf]
    %v3097 = vld [vmem:[%s3016 + $0x140] sm:$0xf]
    %v3098 = vld [vmem:[%s3016 + $0x144] sm:$0xf]
    %v3099 = vld [vmem:[%s3016 + $0x148] sm:$0xf]
    %v3100 = vld [vmem:[%s3016 + $0x14c] sm:$0xf]
    %v3101 = vld [vmem:[%s3016 + $0x150] sm:$0xf]
    %v3102 = vld [vmem:[%s3016 + $0x154] sm:$0xf]
    %v3103 = vld [vmem:[%s3016 + $0x158] sm:$0xf]
    %v3104 = vld [vmem:[%s3016 + $0x15c] sm:$0xf]
    %v3105 = vld [vmem:[%s3016 + $0x160] sm:$0xf]
    %v3106 = vld [vmem:[%s3016 + $0x164] sm:$0xf]
    %v3107 = vld [vmem:[%s3016 + $0x168] sm:$0xf]
    %v3108 = vld [vmem:[%s3016 + $0x16c] sm:$0xf]
    %v3109 = vld [vmem:[%s3016 + $0x170] sm:$0xf]
    %v3110 = vld [vmem:[%s3016 + $0x174] sm:$0xf]
    %v3111 = vld [vmem:[%s3016 + $0x178] sm:$0xf]
    %v3112 = vld [vmem:[%s3016 + $0x17c] sm:$0xf]
    %v3113 = vld [vmem:[%s3016 + $0x180] sm:$0xf]
    %v3114 = vld [vmem:[%s3016 + $0x184] sm:$0xf]
    %v3115 = vld [vmem:[%s3016 + $0x188] sm:$0xf]
    %v3116 = vld [vmem:[%s3016 + $0x18c] sm:$0xf]
    %v3117 = vld [vmem:[%s3016 + $0x190] sm:$0xf]
    %v3118 = vld [vmem:[%s3016 + $0x194] sm:$0xf]
    %v3119 = vld [vmem:[%s3016 + $0x198] sm:$0xf]
    %v3120 = vld [vmem:[%s3016 + $0x19c] sm:$0xf]
    %v3121 = vld [vmem:[%s3016 + $0x1a0] sm:$0xf]
    %v3122 = vld [vmem:[%s3016 + $0x1a4] sm:$0xf]
    %v3123 = vld [vmem:[%s3016 + $0x1a8] sm:$0xf]
    %v3124 = vld [vmem:[%s3016 + $0x1ac] sm:$0xf]
    %v3125 = vld [vmem:[%s3016 + $0x1b0] sm:$0xf]
    %v3126 = vld [vmem:[%s3016 + $0x1b4] sm:$0xf]
    %v3127 = vld [vmem:[%s3016 + $0x1b8] sm:$0xf]
    %v3128 = vld [vmem:[%s3016 + $0x1bc] sm:$0xf]
    %v3129 = vld [vmem:[%s3016 + $0x1c0] sm:$0x3]
    %v3132 = vcombine.high %v3014, %v3014
    %v3134 = vunpack.c.l.s4 1983009808
    %v3135 = vunpack.c.0.s8 %v3134
    %v3136 = vlaneseq
    %v3137 = vshrl.u32 %v3136, 7
    %v3138 = vsub.s32 %v3135, %v3137
    %v3139 = vrot.slane %v3014, %v3138
    %v3141 = vunpack.c.l.s4 1983009808
    %v3142 = vunpack.c.0.s8 %v3141
    %v3143 = vlaneseq
    %v3144 = vshrl.u32 %v3143, 7
    %v3145 = vsub.s32 %v3142, %v3144
    %v3146 = vrot.slane %v3132, %v3145
    %v3147 = vcombine.high %v3139, %v3139
    %v3148 = vcombine.high %v3146, %v3146
    %v3149 = vcombine.high %v3015, %v3015
    %v3151 = vunpack.c.l.s4 1983009808
    %v3152 = vunpack.c.0.s8 %v3151
    %v3153 = vlaneseq
    %v3154 = vshrl.u32 %v3153, 7
    %v3155 = vsub.s32 %v3152, %v3154
    %v3156 = vrot.slane %v3015, %v3155
    %v3158 = vunpack.c.l.s4 1983009808
    %v3159 = vunpack.c.0.s8 %v3158
    %v3160 = vlaneseq
    %v3161 = vshrl.u32 %v3160, 7
    %v3162 = vsub.s32 %v3159, %v3161
    %v3163 = vrot.slane %v3149, %v3162
    %v3164 = vcombine.high %v3156, %v3156
    %v3165 = vcombine.high %v3163, %v3163
    %v3286 = vunpack.c.l.b16 %v3017
    %v3287 = vunpack.c.l.b16 %v3018
    %v3288 = vunpack.c.l.b16 %v3019
    %v3289 = vunpack.c.l.b16 %v3020
    %v3290 = vunpack.c.l.b16 %v3021
    %v3291 = vunpack.c.l.b16 %v3022
    %v3292 = vunpack.c.l.b16 %v3023
    %v3293 = vunpack.c.l.b16 %v3024
    %v3294 = vunpack.c.l.b16 %v3025
    %v3295 = vunpack.c.l.b16 %v3026
    %v3296 = vunpack.c.l.b16 %v3027
    %v3297 = vunpack.c.l.b16 %v3028
    %v3298 = vunpack.c.l.b16 %v3029
    %v3299 = vunpack.c.l.b16 %v3030
    %v3300 = vunpack.c.l.b16 %v3031
    %v3301 = vunpack.c.l.b16 %v3032
    %v3302 = vunpack.c.l.b16 %v3033
    %v3303 = vunpack.c.l.b16 %v3034
    %v3304 = vunpack.c.l.b16 %v3035
    %v3305 = vunpack.c.l.b16 %v3036
    %v3306 = vunpack.c.l.b16 %v3037
    %v3307 = vunpack.c.l.b16 %v3038
    %v3308 = vunpack.c.l.b16 %v3039
    %v3309 = vunpack.c.l.b16 %v3040
    %v3310 = vunpack.c.l.b16 %v3041
    %v3311 = vunpack.c.l.b16 %v3042
    %v3312 = vunpack.c.l.b16 %v3043
    %v3313 = vunpack.c.l.b16 %v3044
    %v3314 = vunpack.c.l.b16 %v3045
    %v3315 = vunpack.c.l.b16 %v3046
    %v3316 = vunpack.c.l.b16 %v3047
    %v3317 = vunpack.c.l.b16 %v3048
    %v3318 = vunpack.c.l.b16 %v3049
    %v3319 = vunpack.c.l.b16 %v3050
    %v3320 = vunpack.c.l.b16 %v3051
    %v3321 = vunpack.c.l.b16 %v3052
    %v3322 = vunpack.c.l.b16 %v3053
    %v3323 = vunpack.c.l.b16 %v3054
    %v3324 = vunpack.c.l.b16 %v3055
    %v3325 = vunpack.c.l.b16 %v3056
    %v3326 = vunpack.c.l.b16 %v3057
    %v3327 = vunpack.c.l.b16 %v3058
    %v3328 = vunpack.c.l.b16 %v3059
    %v3329 = vunpack.c.l.b16 %v3060
    %v3330 = vunpack.c.l.b16 %v3061
    %v3331 = vunpack.c.l.b16 %v3062
    %v3332 = vunpack.c.l.b16 %v3063
    %v3333 = vunpack.c.l.b16 %v3064
    %v3334 = vunpack.c.l.b16 %v3065
    %v3335 = vunpack.c.l.b16 %v3066
    %v3336 = vunpack.c.l.b16 %v3067
    %v3337 = vunpack.c.l.b16 %v3068
    %v3338 = vunpack.c.l.b16 %v3069
    %v3339 = vunpack.c.l.b16 %v3070
    %v3340 = vunpack.c.l.b16 %v3071
    %v3341 = vunpack.c.l.b16 %v3072
    %v3342 = vunpack.c.l.b16 %v3073
    %v3343 = vunpack.c.l.b16 %v3074
    %v3344 = vunpack.c.l.b16 %v3075
    %v3345 = vunpack.c.l.b16 %v3076
    %v3346 = vunpack.c.l.b16 %v3077
    %v3347 = vunpack.c.l.b16 %v3078
    %v3348 = vunpack.c.l.b16 %v3079
    %v3349 = vunpack.c.l.b16 %v3080
    %v3350 = vunpack.c.l.b16 %v3081
    %v3351 = vunpack.c.l.b16 %v3082
    %v3352 = vunpack.c.l.b16 %v3083
    %v3353 = vunpack.c.l.b16 %v3084
    %v3354 = vunpack.c.l.b16 %v3085
    %v3355 = vunpack.c.l.b16 %v3086
    %v3356 = vunpack.c.l.b16 %v3087
    %v3357 = vunpack.c.l.b16 %v3088
    %v3358 = vunpack.c.l.b16 %v3089
    %v3359 = vunpack.c.l.b16 %v3090
    %v3360 = vunpack.c.l.b16 %v3091
    %v3361 = vunpack.c.l.b16 %v3092
    %v3362 = vunpack.c.l.b16 %v3093
    %v3363 = vunpack.c.l.b16 %v3094
    %v3364 = vunpack.c.l.b16 %v3095
    %v3365 = vunpack.c.l.b16 %v3096
    %v3366 = vunpack.c.l.b16 %v3097
    %v3367 = vunpack.c.l.b16 %v3098
    %v3368 = vunpack.c.l.b16 %v3099
    %v3369 = vunpack.c.l.b16 %v3100
    %v3370 = vunpack.c.l.b16 %v3101
    %v3371 = vunpack.c.l.b16 %v3102
    %v3372 = vunpack.c.l.b16 %v3103
    %v3373 = vunpack.c.l.b16 %v3104
    %v3374 = vunpack.c.l.b16 %v3105
    %v3375 = vunpack.c.l.b16 %v3106
    %v3376 = vunpack.c.l.b16 %v3107
    %v3377 = vunpack.c.l.b16 %v3108
    %v3378 = vunpack.c.l.b16 %v3109
    %v3379 = vunpack.c.l.b16 %v3110
    %v3380 = vunpack.c.l.b16 %v3111
    %v3381 = vunpack.c.l.b16 %v3112
    %v3382 = vunpack.c.l.b16 %v3113
    %v3383 = vunpack.c.l.b16 %v3114
    %v3384 = vunpack.c.l.b16 %v3115
    %v3385 = vunpack.c.l.b16 %v3116
    %v3386 = vunpack.c.l.b16 %v3117
    %v3387 = vunpack.c.l.b16 %v3118
    %v3388 = vunpack.c.l.b16 %v3119
    %v3389 = vunpack.c.l.b16 %v3120
    %v3390 = vunpack.c.l.b16 %v3121
    %v3391 = vunpack.c.l.b16 %v3122
    %v3392 = vunpack.c.l.b16 %v3123
    %v3393 = vunpack.c.l.b16 %v3124
    %v3394 = vunpack.c.l.b16 %v3125
    %v3395 = vunpack.c.l.b16 %v3126
    %v3396 = vunpack.c.l.b16 %v3127
    %v3397 = vunpack.c.l.b16 %v3128
    %v3398 = vunpack.c.l.b16 %v3129
    %v3399 = vpack.c.b16 %v3287, %v3286
    %v3400 = vpack.c.b16 %v3289, %v3288
    %v3401 = vpack.c.b16 %v3291, %v3290
    %v3402 = vpack.c.b16 %v3293, %v3292
    %v3403 = vpack.c.b16 %v3295, %v3294
    %v3404 = vpack.c.b16 %v3297, %v3296
    %v3405 = vpack.c.b16 %v3299, %v3298
    %v3406 = vpack.c.b16 %v3301, %v3300
    %v3407 = vpack.c.b16 %v3303, %v3302
    %v3408 = vpack.c.b16 %v3305, %v3304
    %v3409 = vpack.c.b16 %v3307, %v3306
    %v3410 = vpack.c.b16 %v3309, %v3308
    %v3411 = vpack.c.b16 %v3311, %v3310
    %v3412 = vpack.c.b16 %v3313, %v3312
    %v3413 = vpack.c.b16 %v3315, %v3314
    %v3414 = vpack.c.b16 %v3317, %v3316
    %v3415 = vpack.c.b16 %v3319, %v3318
    %v3416 = vpack.c.b16 %v3321, %v3320
    %v3417 = vpack.c.b16 %v3323, %v3322
    %v3418 = vpack.c.b16 %v3325, %v3324
    %v3419 = vpack.c.b16 %v3327, %v3326
    %v3420 = vpack.c.b16 %v3329, %v3328
    %v3421 = vpack.c.b16 %v3331, %v3330
    %v3422 = vpack.c.b16 %v3333, %v3332
    %v3423 = vpack.c.b16 %v3335, %v3334
    %v3424 = vpack.c.b16 %v3337, %v3336
    %v3425 = vpack.c.b16 %v3339, %v3338
    %v3426 = vpack.c.b16 %v3341, %v3340
    %v3427 = vpack.c.b16 %v3343, %v3342
    %v3428 = vpack.c.b16 %v3345, %v3344
    %v3429 = vpack.c.b16 %v3347, %v3346
    %v3430 = vpack.c.b16 %v3349, %v3348
    %v3431 = vpack.c.b16 %v3351, %v3350
    %v3432 = vpack.c.b16 %v3353, %v3352
    %v3433 = vpack.c.b16 %v3355, %v3354
    %v3434 = vpack.c.b16 %v3357, %v3356
    %v3435 = vpack.c.b16 %v3359, %v3358
    %v3436 = vpack.c.b16 %v3361, %v3360
    %v3437 = vpack.c.b16 %v3363, %v3362
    %v3438 = vpack.c.b16 %v3365, %v3364
    %v3439 = vpack.c.b16 %v3367, %v3366
    %v3440 = vpack.c.b16 %v3369, %v3368
    %v3441 = vpack.c.b16 %v3371, %v3370
    %v3442 = vpack.c.b16 %v3373, %v3372
    %v3443 = vpack.c.b16 %v3375, %v3374
    %v3444 = vpack.c.b16 %v3377, %v3376
    %v3445 = vpack.c.b16 %v3379, %v3378
    %v3446 = vpack.c.b16 %v3381, %v3380
    %v3447 = vpack.c.b16 %v3383, %v3382
    %v3448 = vpack.c.b16 %v3385, %v3384
    %v3449 = vpack.c.b16 %v3387, %v3386
    %v3450 = vpack.c.b16 %v3389, %v3388
    %v3451 = vpack.c.b16 %v3391, %v3390
    %v3452 = vpack.c.b16 %v3393, %v3392
    %v3453 = vpack.c.b16 %v3395, %v3394
    %v3454 = vpack.c.b16 %v3397, %v3396
    %v3455 = vpack.c.b16 %v3398, %v3398
    %v3513 = vsel %vm2742, %v3165, 0
    %v3516 = vsel %vm2746, %v3455, 0
    %3518 = vmatprep.subr.bf16.mxu0 0
    %3519 = vmatpush1.bf16.msra.mxu0 %v3406
    %3520 = vmatprep.subr.bf16.mxu0 0
    %3521 = vmatpush1.bf16.msra.mxu0 %v3405
    %3522 = vmatprep.subr.bf16.mxu0 0
    %3523 = vmatpush1.bf16.msra.mxu0 %v3404
    %3524 = vmatprep.subr.bf16.mxu0 0
    %3525 = vmatpush1.bf16.msra.mxu0 %v3403
    %3526 = vmatprep.subr.bf16.mxu0 0
    %3527 = vmatpush1.bf16.msra.mxu0 %v3402
    %3528 = vmatprep.subr.bf16.mxu0 0
    %3529 = vmatpush1.bf16.msra.mxu0 %v3401
    %3530 = vmatprep.subr.bf16.mxu0 0
    %3531 = vmatpush1.bf16.msra.mxu0 %v3400
    %3532 = vmatprep.subr.bf16.mxu0 0
    %3533 = vmatpush1.bf16.msra.mxu0 %v3399
    %3534 = vmatprep.subr.bf16.mxu0 0
    %3535 = vmatpush2.bf16.msra.mxu0 %v3414
    %3536 = vmatprep.subr.bf16.mxu0 0
    %3537 = vmatpush2.bf16.msra.mxu0 %v3413
    %3538 = vmatprep.subr.bf16.mxu0 0
    %3539 = vmatpush2.bf16.msra.mxu0 %v3412
    %3540 = vmatprep.subr.bf16.mxu0 0
    %3541 = vmatpush2.bf16.msra.mxu0 %v3411
    %3542 = vmatprep.subr.bf16.mxu0 0
    %3543 = vmatpush2.bf16.msra.mxu0 %v3410
    %3544 = vmatprep.subr.bf16.mxu0 0
    %3545 = vmatpush2.bf16.msra.mxu0 %v3409
    %3546 = vmatprep.subr.bf16.mxu0 0
    %3547 = vmatpush2.bf16.msra.mxu0 %v3408
    %3548 = vmatprep.subr.bf16.mxu0 0
    %3549 = vmatpush2.bf16.msra.mxu0 %v3407
    %3550 = vmatprep.mubr.bf16.mxu0 %v3147
    %3551 = vmatmul.mubr.bf16.gmra.mxu0 %v3139
    %v3552 = vpop.f32.mrf.mxu0
    %v3553 = vadd.f32 0.0, %v3552
    %v3554 = vpop.f32.mrf.mxu0
    %v3555 = vpop.f32.mrf.mxu0
    %v3556 = vpop.f32.mrf.mxu0
    %3557 = vdwg.mxu0
    %3558 = vmatprep.subr.bf16.mxu0 0
    %3559 = vmatpush1.bf16.msra.mxu0 %v3422
    %3560 = vmatprep.subr.bf16.mxu0 0
    %3561 = vmatpush1.bf16.msra.mxu0 %v3421
    %3562 = vmatprep.subr.bf16.mxu0 0
    %3563 = vmatpush1.bf16.msra.mxu0 %v3420
    %3564 = vmatprep.subr.bf16.mxu0 0
    %3565 = vmatpush1.bf16.msra.mxu0 %v3419
    %3566 = vmatprep.subr.bf16.mxu0 0
    %3567 = vmatpush1.bf16.msra.mxu0 %v3418
    %3568 = vmatprep.subr.bf16.mxu0 0
    %3569 = vmatpush1.bf16.msra.mxu0 %v3417
    %3570 = vmatprep.subr.bf16.mxu0 0
    %3571 = vmatpush1.bf16.msra.mxu0 %v3416
    %3572 = vmatprep.subr.bf16.mxu0 0
    %3573 = vmatpush1.bf16.msra.mxu0 %v3415
    %3574 = vmatprep.subr.bf16.mxu0 0
    %3575 = vmatpush2.bf16.msra.mxu0 %v3430
    %3576 = vmatprep.subr.bf16.mxu0 0
    %3577 = vmatpush2.bf16.msra.mxu0 %v3429
    %3578 = vmatprep.subr.bf16.mxu0 0
    %3579 = vmatpush2.bf16.msra.mxu0 %v3428
    %3580 = vmatprep.subr.bf16.mxu0 0
    %3581 = vmatpush2.bf16.msra.mxu0 %v3427
    %3582 = vmatprep.subr.bf16.mxu0 0
    %3583 = vmatpush2.bf16.msra.mxu0 %v3426
    %3584 = vmatprep.subr.bf16.mxu0 0
    %3585 = vmatpush2.bf16.msra.mxu0 %v3425
    %3586 = vmatprep.subr.bf16.mxu0 0
    %3587 = vmatpush2.bf16.msra.mxu0 %v3424
    %3588 = vmatprep.subr.bf16.mxu0 0
    %3589 = vmatpush2.bf16.msra.mxu0 %v3423
    %3590 = vmatprep.mubr.bf16.mxu0 %v3148
    %3591 = vmatmul.mubr.bf16.gmra.mxu0 %v3146
    %v3592 = vpop.f32.mrf.mxu0
    %v3593 = vadd.f32 %v3553, %v3592
    %v3594 = vpop.f32.mrf.mxu0
    %v3595 = vpop.f32.mrf.mxu0
    %v3596 = vpop.f32.mrf.mxu0
    %3597 = vdwg.mxu0
    %3598 = vmatprep.subr.bf16.mxu0 0
    %3599 = vmatpush1.bf16.msra.mxu0 %v3438
    %3600 = vmatprep.subr.bf16.mxu0 0
    %3601 = vmatpush1.bf16.msra.mxu0 %v3437
    %3602 = vmatprep.subr.bf16.mxu0 0
    %3603 = vmatpush1.bf16.msra.mxu0 %v3436
    %3604 = vmatprep.subr.bf16.mxu0 0
    %3605 = vmatpush1.bf16.msra.mxu0 %v3435
    %3606 = vmatprep.subr.bf16.mxu0 0
    %3607 = vmatpush1.bf16.msra.mxu0 %v3434
    %3608 = vmatprep.subr.bf16.mxu0 0
    %3609 = vmatpush1.bf16.msra.mxu0 %v3433
    %3610 = vmatprep.subr.bf16.mxu0 0
    %3611 = vmatpush1.bf16.msra.mxu0 %v3432
    %3612 = vmatprep.subr.bf16.mxu0 0
    %3613 = vmatpush1.bf16.msra.mxu0 %v3431
    %3614 = vmatprep.subr.bf16.mxu0 0
    %3615 = vmatpush2.bf16.msra.mxu0 %v3446
    %3616 = vmatprep.subr.bf16.mxu0 0
    %3617 = vmatpush2.bf16.msra.mxu0 %v3445
    %3618 = vmatprep.subr.bf16.mxu0 0
    %3619 = vmatpush2.bf16.msra.mxu0 %v3444
    %3620 = vmatprep.subr.bf16.mxu0 0
    %3621 = vmatpush2.bf16.msra.mxu0 %v3443
    %3622 = vmatprep.subr.bf16.mxu0 0
    %3623 = vmatpush2.bf16.msra.mxu0 %v3442
    %3624 = vmatprep.subr.bf16.mxu0 0
    %3625 = vmatpush2.bf16.msra.mxu0 %v3441
    %3626 = vmatprep.subr.bf16.mxu0 0
    %3627 = vmatpush2.bf16.msra.mxu0 %v3440
    %3628 = vmatprep.subr.bf16.mxu0 0
    %3629 = vmatpush2.bf16.msra.mxu0 %v3439
    %3630 = vmatprep.mubr.bf16.mxu0 %v3164
    %3631 = vmatmul.mubr.bf16.gmra.mxu0 %v3156
    %v3632 = vpop.f32.mrf.mxu0
    %v3633 = vadd.f32 %v3593, %v3632
    %v3634 = vpop.f32.mrf.mxu0
    %v3635 = vpop.f32.mrf.mxu0
    %v3636 = vpop.f32.mrf.mxu0
    %3637 = vdwg.mxu0
    %3638 = vmatprep.subr.bf16.mxu0 0
    %3639 = vmatpush1.bf16.msra.mxu0 %v3454
    %3640 = vmatprep.subr.bf16.mxu0 0
    %3641 = vmatpush1.bf16.msra.mxu0 %v3453
    %3642 = vmatprep.subr.bf16.mxu0 0
    %3643 = vmatpush1.bf16.msra.mxu0 %v3452
    %3644 = vmatprep.subr.bf16.mxu0 0
    %3645 = vmatpush1.bf16.msra.mxu0 %v3451
    %3646 = vmatprep.subr.bf16.mxu0 0
    %3647 = vmatpush1.bf16.msra.mxu0 %v3450
    %3648 = vmatprep.subr.bf16.mxu0 0
    %3649 = vmatpush1.bf16.msra.mxu0 %v3449
    %3650 = vmatprep.subr.bf16.mxu0 0
    %3651 = vmatpush1.bf16.msra.mxu0 %v3448
    %3652 = vmatprep.subr.bf16.mxu0 0
    %3653 = vmatpush1.bf16.msra.mxu0 %v3447
    %3654 = vmatprep.subr.bf16.mxu0 0
    %3655 = vmatpush2.bf16.msra.mxu0 0
    %3656 = vmatprep.subr.bf16.mxu0 0
    %3657 = vmatpush2.bf16.msra.mxu0 0
    %3658 = vmatprep.subr.bf16.mxu0 0
    %3659 = vmatpush2.bf16.msra.mxu0 0
    %3660 = vmatprep.subr.bf16.mxu0 0
    %3661 = vmatpush2.bf16.msra.mxu0 0
    %3662 = vmatprep.subr.bf16.mxu0 0
    %3663 = vmatpush2.bf16.msra.mxu0 0
    %3664 = vmatprep.subr.bf16.mxu0 0
    %3665 = vmatpush2.bf16.msra.mxu0 0
    %3666 = vmatprep.subr.bf16.mxu0 0
    %3667 = vmatpush2.bf16.msra.mxu0 0
    %3668 = vmatprep.subr.bf16.mxu0 0
    %3669 = vmatpush2.bf16.msra.mxu0 %v3516
    %3670 = vmatprep.mubr.bf16.mxu0 %v3513
    %3671 = vmatmul.mubr.bf16.gmra.mxu0 %v3163
    %v3672 = vpop.f32.mrf.mxu0
    %v3673 = vadd.f32 %v3633, %v3672
    %v3674 = vpop.f32.mrf.mxu0
    %v3675 = vpop.f32.mrf.mxu0
    %v3676 = vpop.f32.mrf.mxu0
    %3677 = vdwg.mxu0
    %v3678 = vadd.f32 %v2910, %v3673
    %s3679 = scalar_lea.vmem %s7, 32
    %v3680 = vld [vmem:[%s3679] sm:$0xff]
    %v3681 = vld [vmem:[%s3679 + $0x8] sm:$0xff]
    %v3682 = vlaneseq
    %v3683 = vshrl.u32 %v3682, 7
    %v3684 = vsub.s32 1, %v3683
    %v3685 = vrot.slane %v2146, %v3684
    %v3686 = vlaneseq
    %v3687 = vshrl.u32 %v3686, 7
    %v3688 = vsub.s32 1, %v3687
    %v3689 = vrot.slane %v2153, %v3688
    %v3690 = vlaneseq
    %v3691 = vshrl.u32 %v3690, 7
    %v3692 = vsub.s32 1, %v3691
    %v3693 = vrot.slane %v2160, %v3692
    %v3694 = vlaneseq
    %v3695 = vshrl.u32 %v3694, 7
    %v3696 = vsub.s32 1, %v3695
    %v3697 = vrot.slane %v2167, %v3696
    %v3698 = vlaneseq
    %v3699 = vshrl.u32 %v3698, 7
    %v3700 = vsub.s32 1, %v3699
    %v3701 = vrot.slane %v2174, %v3700
    %v3702 = vlaneseq
    %v3703 = vshrl.u32 %v3702, 7
    %v3704 = vsub.s32 1, %v3703
    %v3705 = vrot.slane %v2181, %v3704
    %v3706 = vlaneseq
    %v3707 = vshrl.u32 %v3706, 7
    %v3708 = vsub.s32 1, %v3707
    %v3709 = vrot.slane %v2188, %v3708
    %v3710 = vlaneseq
    %v3711 = vshrl.u32 %v3710, 7
    %v3712 = vsub.s32 1, %v3711
    %v3713 = vrot.slane %v2195, %v3712
    %v3722 = vcombine.low %v3685, %v3689
    %v3723 = vcombine.low %v3693, %v3697
    %v3725 = vunpack.c.l.s4 1983009808
    %v3726 = vunpack.c.0.s8 %v3725
    %v3727 = vlaneseq
    %v3728 = vshrl.u32 %v3727, 7
    %v3729 = vsub.s32 %v3726, %v3728
    %v3730 = vrot.slane %v3722, %v3729
    %v3732 = vunpack.c.l.s4 1983009808
    %v3733 = vunpack.c.0.s8 %v3732
    %v3734 = vlaneseq
    %v3735 = vshrl.u32 %v3734, 7
    %v3736 = vsub.s32 %v3733, %v3735
    %v3737 = vrot.slane %v3723, %v3736
    %v3738 = vcombine.low %v3730, %v3737
    %v3739 = vcombine.low %v3701, %v3705
    %v3740 = vcombine.low %v3709, %v3713
    %v3742 = vunpack.c.l.s4 1983009808
    %v3743 = vunpack.c.0.s8 %v3742
    %v3744 = vlaneseq
    %v3745 = vshrl.u32 %v3744, 7
    %v3746 = vsub.s32 %v3743, %v3745
    %v3747 = vrot.slane %v3739, %v3746
    %v3749 = vunpack.c.l.s4 1983009808
    %v3750 = vunpack.c.0.s8 %v3749
    %v3751 = vlaneseq
    %v3752 = vshrl.u32 %v3751, 7
    %v3753 = vsub.s32 %v3750, %v3752
    %v3754 = vrot.slane %v3740, %v3753
    %v3755 = vcombine.low %v3747, %v3754
    %v3758 = vmul.bf16 %v3680, %v3738
    %v3759 = vmul.bf16 %v3681, %v3755
    %s3760 = scalar_lea.vmem %s8, 904
    %v3761 = vld [vmem:[%s3760] sm:$0xf]
    %v3762 = vld [vmem:[%s3760 + $0x4] sm:$0xf]
    %v3763 = vld [vmem:[%s3760 + $0x8] sm:$0xf]
    %v3764 = vld [vmem:[%s3760 + $0xc] sm:$0xf]
    %v3765 = vld [vmem:[%s3760 + $0x10] sm:$0xf]
    %v3766 = vld [vmem:[%s3760 + $0x14] sm:$0xf]
    %v3767 = vld [vmem:[%s3760 + $0x18] sm:$0xf]
    %v3768 = vld [vmem:[%s3760 + $0x1c] sm:$0xf]
    %v3769 = vld [vmem:[%s3760 + $0x20] sm:$0xf]
    %v3770 = vld [vmem:[%s3760 + $0x24] sm:$0xf]
    %v3771 = vld [vmem:[%s3760 + $0x28] sm:$0xf]
    %v3772 = vld [vmem:[%s3760 + $0x2c] sm:$0xf]
    %v3773 = vld [vmem:[%s3760 + $0x30] sm:$0xf]
    %v3774 = vld [vmem:[%s3760 + $0x34] sm:$0xf]
    %v3775 = vld [vmem:[%s3760 + $0x38] sm:$0xf]
    %v3776 = vld [vmem:[%s3760 + $0x3c] sm:$0xf]
    %v3777 = vld [vmem:[%s3760 + $0x40] sm:$0xf]
    %v3778 = vld [vmem:[%s3760 + $0x44] sm:$0xf]
    %v3779 = vld [vmem:[%s3760 + $0x48] sm:$0xf]
    %v3780 = vld [vmem:[%s3760 + $0x4c] sm:$0xf]
    %v3781 = vld [vmem:[%s3760 + $0x50] sm:$0xf]
    %v3782 = vld [vmem:[%s3760 + $0x54] sm:$0xf]
    %v3783 = vld [vmem:[%s3760 + $0x58] sm:$0xf]
    %v3784 = vld [vmem:[%s3760 + $0x5c] sm:$0xf]
    %v3785 = vld [vmem:[%s3760 + $0x60] sm:$0xf]
    %v3786 = vld [vmem:[%s3760 + $0x64] sm:$0xf]
    %v3787 = vld [vmem:[%s3760 + $0x68] sm:$0xf]
    %v3788 = vld [vmem:[%s3760 + $0x6c] sm:$0xf]
    %v3789 = vld [vmem:[%s3760 + $0x70] sm:$0xf]
    %v3790 = vld [vmem:[%s3760 + $0x74] sm:$0xf]
    %v3791 = vld [vmem:[%s3760 + $0x78] sm:$0xf]
    %v3792 = vld [vmem:[%s3760 + $0x7c] sm:$0xf]
    %v3793 = vld [vmem:[%s3760 + $0x80] sm:$0xf]
    %v3794 = vld [vmem:[%s3760 + $0x84] sm:$0xf]
    %v3795 = vld [vmem:[%s3760 + $0x88] sm:$0xf]
    %v3796 = vld [vmem:[%s3760 + $0x8c] sm:$0xf]
    %v3797 = vld [vmem:[%s3760 + $0x90] sm:$0xf]
    %v3798 = vld [vmem:[%s3760 + $0x94] sm:$0xf]
    %v3799 = vld [vmem:[%s3760 + $0x98] sm:$0xf]
    %v3800 = vld [vmem:[%s3760 + $0x9c] sm:$0xf]
    %v3801 = vld [vmem:[%s3760 + $0xa0] sm:$0xf]
    %v3802 = vld [vmem:[%s3760 + $0xa4] sm:$0xf]
    %v3803 = vld [vmem:[%s3760 + $0xa8] sm:$0xf]
    %v3804 = vld [vmem:[%s3760 + $0xac] sm:$0xf]
    %v3805 = vld [vmem:[%s3760 + $0xb0] sm:$0xf]
    %v3806 = vld [vmem:[%s3760 + $0xb4] sm:$0xf]
    %v3807 = vld [vmem:[%s3760 + $0xb8] sm:$0xf]
    %v3808 = vld [vmem:[%s3760 + $0xbc] sm:$0xf]
    %v3809 = vld [vmem:[%s3760 + $0xc0] sm:$0xf]
    %v3810 = vld [vmem:[%s3760 + $0xc4] sm:$0xf]
    %v3811 = vld [vmem:[%s3760 + $0xc8] sm:$0xf]
    %v3812 = vld [vmem:[%s3760 + $0xcc] sm:$0xf]
    %v3813 = vld [vmem:[%s3760 + $0xd0] sm:$0xf]
    %v3814 = vld [vmem:[%s3760 + $0xd4] sm:$0xf]
    %v3815 = vld [vmem:[%s3760 + $0xd8] sm:$0xf]
    %v3816 = vld [vmem:[%s3760 + $0xdc] sm:$0xf]
    %v3817 = vld [vmem:[%s3760 + $0xe0] sm:$0xf]
    %v3818 = vld [vmem:[%s3760 + $0xe4] sm:$0xf]
    %v3819 = vld [vmem:[%s3760 + $0xe8] sm:$0xf]
    %v3820 = vld [vmem:[%s3760 + $0xec] sm:$0xf]
    %v3821 = vld [vmem:[%s3760 + $0xf0] sm:$0xf]
    %v3822 = vld [vmem:[%s3760 + $0xf4] sm:$0xf]
    %v3823 = vld [vmem:[%s3760 + $0xf8] sm:$0xf]
    %v3824 = vld [vmem:[%s3760 + $0xfc] sm:$0xf]
    %v3825 = vld [vmem:[%s3760 + $0x100] sm:$0xf]
    %v3826 = vld [vmem:[%s3760 + $0x104] sm:$0xf]
    %v3827 = vld [vmem:[%s3760 + $0x108] sm:$0xf]
    %v3828 = vld [vmem:[%s3760 + $0x10c] sm:$0xf]
    %v3829 = vld [vmem:[%s3760 + $0x110] sm:$0xf]
    %v3830 = vld [vmem:[%s3760 + $0x114] sm:$0xf]
    %v3831 = vld [vmem:[%s3760 + $0x118] sm:$0xf]
    %v3832 = vld [vmem:[%s3760 + $0x11c] sm:$0xf]
    %v3833 = vld [vmem:[%s3760 + $0x120] sm:$0xf]
    %v3834 = vld [vmem:[%s3760 + $0x124] sm:$0xf]
    %v3835 = vld [vmem:[%s3760 + $0x128] sm:$0xf]
    %v3836 = vld [vmem:[%s3760 + $0x12c] sm:$0xf]
    %v3837 = vld [vmem:[%s3760 + $0x130] sm:$0xf]
    %v3838 = vld [vmem:[%s3760 + $0x134] sm:$0xf]
    %v3839 = vld [vmem:[%s3760 + $0x138] sm:$0xf]
    %v3840 = vld [vmem:[%s3760 + $0x13c] sm:$0xf]
    %v3841 = vld [vmem:[%s3760 + $0x140] sm:$0xf]
    %v3842 = vld [vmem:[%s3760 + $0x144] sm:$0xf]
    %v3843 = vld [vmem:[%s3760 + $0x148] sm:$0xf]
    %v3844 = vld [vmem:[%s3760 + $0x14c] sm:$0xf]
    %v3845 = vld [vmem:[%s3760 + $0x150] sm:$0xf]
    %v3846 = vld [vmem:[%s3760 + $0x154] sm:$0xf]
    %v3847 = vld [vmem:[%s3760 + $0x158] sm:$0xf]
    %v3848 = vld [vmem:[%s3760 + $0x15c] sm:$0xf]
    %v3849 = vld [vmem:[%s3760 + $0x160] sm:$0xf]
    %v3850 = vld [vmem:[%s3760 + $0x164] sm:$0xf]
    %v3851 = vld [vmem:[%s3760 + $0x168] sm:$0xf]
    %v3852 = vld [vmem:[%s3760 + $0x16c] sm:$0xf]
    %v3853 = vld [vmem:[%s3760 + $0x170] sm:$0xf]
    %v3854 = vld [vmem:[%s3760 + $0x174] sm:$0xf]
    %v3855 = vld [vmem:[%s3760 + $0x178] sm:$0xf]
    %v3856 = vld [vmem:[%s3760 + $0x17c] sm:$0xf]
    %v3857 = vld [vmem:[%s3760 + $0x180] sm:$0xf]
    %v3858 = vld [vmem:[%s3760 + $0x184] sm:$0xf]
    %v3859 = vld [vmem:[%s3760 + $0x188] sm:$0xf]
    %v3860 = vld [vmem:[%s3760 + $0x18c] sm:$0xf]
    %v3861 = vld [vmem:[%s3760 + $0x190] sm:$0xf]
    %v3862 = vld [vmem:[%s3760 + $0x194] sm:$0xf]
    %v3863 = vld [vmem:[%s3760 + $0x198] sm:$0xf]
    %v3864 = vld [vmem:[%s3760 + $0x19c] sm:$0xf]
    %v3865 = vld [vmem:[%s3760 + $0x1a0] sm:$0xf]
    %v3866 = vld [vmem:[%s3760 + $0x1a4] sm:$0xf]
    %v3867 = vld [vmem:[%s3760 + $0x1a8] sm:$0xf]
    %v3868 = vld [vmem:[%s3760 + $0x1ac] sm:$0xf]
    %v3869 = vld [vmem:[%s3760 + $0x1b0] sm:$0xf]
    %v3870 = vld [vmem:[%s3760 + $0x1b4] sm:$0xf]
    %v3871 = vld [vmem:[%s3760 + $0x1b8] sm:$0xf]
    %v3872 = vld [vmem:[%s3760 + $0x1bc] sm:$0xf]
    %v3873 = vld [vmem:[%s3760 + $0x1c0] sm:$0x3]
    %v3876 = vcombine.high %v3758, %v3758
    %v3878 = vunpack.c.l.s4 1983009808
    %v3879 = vunpack.c.0.s8 %v3878
    %v3880 = vlaneseq
    %v3881 = vshrl.u32 %v3880, 7
    %v3882 = vsub.s32 %v3879, %v3881
    %v3883 = vrot.slane %v3758, %v3882
    %v3885 = vunpack.c.l.s4 1983009808
    %v3886 = vunpack.c.0.s8 %v3885
    %v3887 = vlaneseq
    %v3888 = vshrl.u32 %v3887, 7
    %v3889 = vsub.s32 %v3886, %v3888
    %v3890 = vrot.slane %v3876, %v3889
    %v3891 = vcombine.high %v3883, %v3883
    %v3892 = vcombine.high %v3890, %v3890
    %v3893 = vcombine.high %v3759, %v3759
    %v3895 = vunpack.c.l.s4 1983009808
    %v3896 = vunpack.c.0.s8 %v3895
    %v3897 = vlaneseq
    %v3898 = vshrl.u32 %v3897, 7
    %v3899 = vsub.s32 %v3896, %v3898
    %v3900 = vrot.slane %v3759, %v3899
    %v3902 = vunpack.c.l.s4 1983009808
    %v3903 = vunpack.c.0.s8 %v3902
    %v3904 = vlaneseq
    %v3905 = vshrl.u32 %v3904, 7
    %v3906 = vsub.s32 %v3903, %v3905
    %v3907 = vrot.slane %v3893, %v3906
    %v3908 = vcombine.high %v3900, %v3900
    %v3909 = vcombine.high %v3907, %v3907
    %v4030 = vunpack.c.l.b16 %v3761
    %v4031 = vunpack.c.l.b16 %v3762
    %v4032 = vunpack.c.l.b16 %v3763
    %v4033 = vunpack.c.l.b16 %v3764
    %v4034 = vunpack.c.l.b16 %v3765
    %v4035 = vunpack.c.l.b16 %v3766
    %v4036 = vunpack.c.l.b16 %v3767
    %v4037 = vunpack.c.l.b16 %v3768
    %v4038 = vunpack.c.l.b16 %v3769
    %v4039 = vunpack.c.l.b16 %v3770
    %v4040 = vunpack.c.l.b16 %v3771
    %v4041 = vunpack.c.l.b16 %v3772
    %v4042 = vunpack.c.l.b16 %v3773
    %v4043 = vunpack.c.l.b16 %v3774
    %v4044 = vunpack.c.l.b16 %v3775
    %v4045 = vunpack.c.l.b16 %v3776
    %v4046 = vunpack.c.l.b16 %v3777
    %v4047 = vunpack.c.l.b16 %v3778
    %v4048 = vunpack.c.l.b16 %v3779
    %v4049 = vunpack.c.l.b16 %v3780
    %v4050 = vunpack.c.l.b16 %v3781
    %v4051 = vunpack.c.l.b16 %v3782
    %v4052 = vunpack.c.l.b16 %v3783
    %v4053 = vunpack.c.l.b16 %v3784
    %v4054 = vunpack.c.l.b16 %v3785
    %v4055 = vunpack.c.l.b16 %v3786
    %v4056 = vunpack.c.l.b16 %v3787
    %v4057 = vunpack.c.l.b16 %v3788
    %v4058 = vunpack.c.l.b16 %v3789
    %v4059 = vunpack.c.l.b16 %v3790
    %v4060 = vunpack.c.l.b16 %v3791
    %v4061 = vunpack.c.l.b16 %v3792
    %v4062 = vunpack.c.l.b16 %v3793
    %v4063 = vunpack.c.l.b16 %v3794
    %v4064 = vunpack.c.l.b16 %v3795
    %v4065 = vunpack.c.l.b16 %v3796
    %v4066 = vunpack.c.l.b16 %v3797
    %v4067 = vunpack.c.l.b16 %v3798
    %v4068 = vunpack.c.l.b16 %v3799
    %v4069 = vunpack.c.l.b16 %v3800
    %v4070 = vunpack.c.l.b16 %v3801
    %v4071 = vunpack.c.l.b16 %v3802
    %v4072 = vunpack.c.l.b16 %v3803
    %v4073 = vunpack.c.l.b16 %v3804
    %v4074 = vunpack.c.l.b16 %v3805
    %v4075 = vunpack.c.l.b16 %v3806
    %v4076 = vunpack.c.l.b16 %v3807
    %v4077 = vunpack.c.l.b16 %v3808
    %v4078 = vunpack.c.l.b16 %v3809
    %v4079 = vunpack.c.l.b16 %v3810
    %v4080 = vunpack.c.l.b16 %v3811
    %v4081 = vunpack.c.l.b16 %v3812
    %v4082 = vunpack.c.l.b16 %v3813
    %v4083 = vunpack.c.l.b16 %v3814
    %v4084 = vunpack.c.l.b16 %v3815
    %v4085 = vunpack.c.l.b16 %v3816
    %v4086 = vunpack.c.l.b16 %v3817
    %v4087 = vunpack.c.l.b16 %v3818
    %v4088 = vunpack.c.l.b16 %v3819
    %v4089 = vunpack.c.l.b16 %v3820
    %v4090 = vunpack.c.l.b16 %v3821
    %v4091 = vunpack.c.l.b16 %v3822
    %v4092 = vunpack.c.l.b16 %v3823
    %v4093 = vunpack.c.l.b16 %v3824
    %v4094 = vunpack.c.l.b16 %v3825
    %v4095 = vunpack.c.l.b16 %v3826
    %v4096 = vunpack.c.l.b16 %v3827
    %v4097 = vunpack.c.l.b16 %v3828
    %v4098 = vunpack.c.l.b16 %v3829
    %v4099 = vunpack.c.l.b16 %v3830
    %v4100 = vunpack.c.l.b16 %v3831
    %v4101 = vunpack.c.l.b16 %v3832
    %v4102 = vunpack.c.l.b16 %v3833
    %v4103 = vunpack.c.l.b16 %v3834
    %v4104 = vunpack.c.l.b16 %v3835
    %v4105 = vunpack.c.l.b16 %v3836
    %v4106 = vunpack.c.l.b16 %v3837
    %v4107 = vunpack.c.l.b16 %v3838
    %v4108 = vunpack.c.l.b16 %v3839
    %v4109 = vunpack.c.l.b16 %v3840
    %v4110 = vunpack.c.l.b16 %v3841
    %v4111 = vunpack.c.l.b16 %v3842
    %v4112 = vunpack.c.l.b16 %v3843
    %v4113 = vunpack.c.l.b16 %v3844
    %v4114 = vunpack.c.l.b16 %v3845
    %v4115 = vunpack.c.l.b16 %v3846
    %v4116 = vunpack.c.l.b16 %v3847
    %v4117 = vunpack.c.l.b16 %v3848
    %v4118 = vunpack.c.l.b16 %v3849
    %v4119 = vunpack.c.l.b16 %v3850
    %v4120 = vunpack.c.l.b16 %v3851
    %v4121 = vunpack.c.l.b16 %v3852
    %v4122 = vunpack.c.l.b16 %v3853
    %v4123 = vunpack.c.l.b16 %v3854
    %v4124 = vunpack.c.l.b16 %v3855
    %v4125 = vunpack.c.l.b16 %v3856
    %v4126 = vunpack.c.l.b16 %v3857
    %v4127 = vunpack.c.l.b16 %v3858
    %v4128 = vunpack.c.l.b16 %v3859
    %v4129 = vunpack.c.l.b16 %v3860
    %v4130 = vunpack.c.l.b16 %v3861
    %v4131 = vunpack.c.l.b16 %v3862
    %v4132 = vunpack.c.l.b16 %v3863
    %v4133 = vunpack.c.l.b16 %v3864
    %v4134 = vunpack.c.l.b16 %v3865
    %v4135 = vunpack.c.l.b16 %v3866
    %v4136 = vunpack.c.l.b16 %v3867
    %v4137 = vunpack.c.l.b16 %v3868
    %v4138 = vunpack.c.l.b16 %v3869
    %v4139 = vunpack.c.l.b16 %v3870
    %v4140 = vunpack.c.l.b16 %v3871
    %v4141 = vunpack.c.l.b16 %v3872
    %v4142 = vunpack.c.l.b16 %v3873
    %v4143 = vpack.c.b16 %v4031, %v4030
    %v4144 = vpack.c.b16 %v4033, %v4032
    %v4145 = vpack.c.b16 %v4035, %v4034
    %v4146 = vpack.c.b16 %v4037, %v4036
    %v4147 = vpack.c.b16 %v4039, %v4038
    %v4148 = vpack.c.b16 %v4041, %v4040
    %v4149 = vpack.c.b16 %v4043, %v4042
    %v4150 = vpack.c.b16 %v4045, %v4044
    %v4151 = vpack.c.b16 %v4047, %v4046
    %v4152 = vpack.c.b16 %v4049, %v4048
    %v4153 = vpack.c.b16 %v4051, %v4050
    %v4154 = vpack.c.b16 %v4053, %v4052
    %v4155 = vpack.c.b16 %v4055, %v4054
    %v4156 = vpack.c.b16 %v4057, %v4056
    %v4157 = vpack.c.b16 %v4059, %v4058
    %v4158 = vpack.c.b16 %v4061, %v4060
    %v4159 = vpack.c.b16 %v4063, %v4062
    %v4160 = vpack.c.b16 %v4065, %v4064
    %v4161 = vpack.c.b16 %v4067, %v4066
    %v4162 = vpack.c.b16 %v4069, %v4068
    %v4163 = vpack.c.b16 %v4071, %v4070
    %v4164 = vpack.c.b16 %v4073, %v4072
    %v4165 = vpack.c.b16 %v4075, %v4074
    %v4166 = vpack.c.b16 %v4077, %v4076
    %v4167 = vpack.c.b16 %v4079, %v4078
    %v4168 = vpack.c.b16 %v4081, %v4080
    %v4169 = vpack.c.b16 %v4083, %v4082
    %v4170 = vpack.c.b16 %v4085, %v4084
    %v4171 = vpack.c.b16 %v4087, %v4086
    %v4172 = vpack.c.b16 %v4089, %v4088
    %v4173 = vpack.c.b16 %v4091, %v4090
    %v4174 = vpack.c.b16 %v4093, %v4092
    %v4175 = vpack.c.b16 %v4095, %v4094
    %v4176 = vpack.c.b16 %v4097, %v4096
    %v4177 = vpack.c.b16 %v4099, %v4098
    %v4178 = vpack.c.b16 %v4101, %v4100
    %v4179 = vpack.c.b16 %v4103, %v4102
    %v4180 = vpack.c.b16 %v4105, %v4104
    %v4181 = vpack.c.b16 %v4107, %v4106
    %v4182 = vpack.c.b16 %v4109, %v4108
    %v4183 = vpack.c.b16 %v4111, %v4110
    %v4184 = vpack.c.b16 %v4113, %v4112
    %v4185 = vpack.c.b16 %v4115, %v4114
    %v4186 = vpack.c.b16 %v4117, %v4116
    %v4187 = vpack.c.b16 %v4119, %v4118
    %v4188 = vpack.c.b16 %v4121, %v4120
    %v4189 = vpack.c.b16 %v4123, %v4122
    %v4190 = vpack.c.b16 %v4125, %v4124
    %v4191 = vpack.c.b16 %v4127, %v4126
    %v4192 = vpack.c.b16 %v4129, %v4128
    %v4193 = vpack.c.b16 %v4131, %v4130
    %v4194 = vpack.c.b16 %v4133, %v4132
    %v4195 = vpack.c.b16 %v4135, %v4134
    %v4196 = vpack.c.b16 %v4137, %v4136
    %v4197 = vpack.c.b16 %v4139, %v4138
    %v4198 = vpack.c.b16 %v4141, %v4140
    %v4199 = vpack.c.b16 %v4142, %v4142
    %v4257 = vsel %vm2742, %v3909, 0
    %v4260 = vsel %vm2746, %v4199, 0
    %4262 = vmatprep.subr.bf16.mxu0 0
    %4263 = vmatpush1.bf16.msra.mxu0 %v4150
    %4264 = vmatprep.subr.bf16.mxu0 0
    %4265 = vmatpush1.bf16.msra.mxu0 %v4149
    %4266 = vmatprep.subr.bf16.mxu0 0
    %4267 = vmatpush1.bf16.msra.mxu0 %v4148
    %4268 = vmatprep.subr.bf16.mxu0 0
    %4269 = vmatpush1.bf16.msra.mxu0 %v4147
    %4270 = vmatprep.subr.bf16.mxu0 0
    %4271 = vmatpush1.bf16.msra.mxu0 %v4146
    %4272 = vmatprep.subr.bf16.mxu0 0
    %4273 = vmatpush1.bf16.msra.mxu0 %v4145
    %4274 = vmatprep.subr.bf16.mxu0 0
    %4275 = vmatpush1.bf16.msra.mxu0 %v4144
    %4276 = vmatprep.subr.bf16.mxu0 0
    %4277 = vmatpush1.bf16.msra.mxu0 %v4143
    %4278 = vmatprep.subr.bf16.mxu0 0
    %4279 = vmatpush2.bf16.msra.mxu0 %v4158
    %4280 = vmatprep.subr.bf16.mxu0 0
    %4281 = vmatpush2.bf16.msra.mxu0 %v4157
    %4282 = vmatprep.subr.bf16.mxu0 0
    %4283 = vmatpush2.bf16.msra.mxu0 %v4156
    %4284 = vmatprep.subr.bf16.mxu0 0
    %4285 = vmatpush2.bf16.msra.mxu0 %v4155
    %4286 = vmatprep.subr.bf16.mxu0 0
    %4287 = vmatpush2.bf16.msra.mxu0 %v4154
    %4288 = vmatprep.subr.bf16.mxu0 0
    %4289 = vmatpush2.bf16.msra.mxu0 %v4153
    %4290 = vmatprep.subr.bf16.mxu0 0
    %4291 = vmatpush2.bf16.msra.mxu0 %v4152
    %4292 = vmatprep.subr.bf16.mxu0 0
    %4293 = vmatpush2.bf16.msra.mxu0 %v4151
    %4294 = vmatprep.mubr.bf16.mxu0 %v3891
    %4295 = vmatmul.mubr.bf16.gmra.mxu0 %v3883
    %v4296 = vpop.f32.mrf.mxu0
    %v4297 = vadd.f32 0.0, %v4296
    %v4298 = vpop.f32.mrf.mxu0
    %v4299 = vpop.f32.mrf.mxu0
    %v4300 = vpop.f32.mrf.mxu0
    %4301 = vdwg.mxu0
    %4302 = vmatprep.subr.bf16.mxu0 0
    %4303 = vmatpush1.bf16.msra.mxu0 %v4166
    %4304 = vmatprep.subr.bf16.mxu0 0
    %4305 = vmatpush1.bf16.msra.mxu0 %v4165
    %4306 = vmatprep.subr.bf16.mxu0 0
    %4307 = vmatpush1.bf16.msra.mxu0 %v4164
    %4308 = vmatprep.subr.bf16.mxu0 0
    %4309 = vmatpush1.bf16.msra.mxu0 %v4163
    %4310 = vmatprep.subr.bf16.mxu0 0
    %4311 = vmatpush1.bf16.msra.mxu0 %v4162
    %4312 = vmatprep.subr.bf16.mxu0 0
    %4313 = vmatpush1.bf16.msra.mxu0 %v4161
    %4314 = vmatprep.subr.bf16.mxu0 0
    %4315 = vmatpush1.bf16.msra.mxu0 %v4160
    %4316 = vmatprep.subr.bf16.mxu0 0
    %4317 = vmatpush1.bf16.msra.mxu0 %v4159
    %4318 = vmatprep.subr.bf16.mxu0 0
    %4319 = vmatpush2.bf16.msra.mxu0 %v4174
    %4320 = vmatprep.subr.bf16.mxu0 0
    %4321 = vmatpush2.bf16.msra.mxu0 %v4173
    %4322 = vmatprep.subr.bf16.mxu0 0
    %4323 = vmatpush2.bf16.msra.mxu0 %v4172
    %4324 = vmatprep.subr.bf16.mxu0 0
    %4325 = vmatpush2.bf16.msra.mxu0 %v4171
    %4326 = vmatprep.subr.bf16.mxu0 0
    %4327 = vmatpush2.bf16.msra.mxu0 %v4170
    %4328 = vmatprep.subr.bf16.mxu0 0
    %4329 = vmatpush2.bf16.msra.mxu0 %v4169
    %4330 = vmatprep.subr.bf16.mxu0 0
    %4331 = vmatpush2.bf16.msra.mxu0 %v4168
    %4332 = vmatprep.subr.bf16.mxu0 0
    %4333 = vmatpush2.bf16.msra.mxu0 %v4167
    %4334 = vmatprep.mubr.bf16.mxu0 %v3892
    %4335 = vmatmul.mubr.bf16.gmra.mxu0 %v3890
    %v4336 = vpop.f32.mrf.mxu0
    %v4337 = vadd.f32 %v4297, %v4336
    %v4338 = vpop.f32.mrf.mxu0
    %v4339 = vpop.f32.mrf.mxu0
    %v4340 = vpop.f32.mrf.mxu0
    %4341 = vdwg.mxu0
    %4342 = vmatprep.subr.bf16.mxu0 0
    %4343 = vmatpush1.bf16.msra.mxu0 %v4182
    %4344 = vmatprep.subr.bf16.mxu0 0
    %4345 = vmatpush1.bf16.msra.mxu0 %v4181
    %4346 = vmatprep.subr.bf16.mxu0 0
    %4347 = vmatpush1.bf16.msra.mxu0 %v4180
    %4348 = vmatprep.subr.bf16.mxu0 0
    %4349 = vmatpush1.bf16.msra.mxu0 %v4179
    %4350 = vmatprep.subr.bf16.mxu0 0
    %4351 = vmatpush1.bf16.msra.mxu0 %v4178
    %4352 = vmatprep.subr.bf16.mxu0 0
    %4353 = vmatpush1.bf16.msra.mxu0 %v4177
    %4354 = vmatprep.subr.bf16.mxu0 0
    %4355 = vmatpush1.bf16.msra.mxu0 %v4176
    %4356 = vmatprep.subr.bf16.mxu0 0
    %4357 = vmatpush1.bf16.msra.mxu0 %v4175
    %4358 = vmatprep.subr.bf16.mxu0 0
    %4359 = vmatpush2.bf16.msra.mxu0 %v4190
    %4360 = vmatprep.subr.bf16.mxu0 0
    %4361 = vmatpush2.bf16.msra.mxu0 %v4189
    %4362 = vmatprep.subr.bf16.mxu0 0
    %4363 = vmatpush2.bf16.msra.mxu0 %v4188
    %4364 = vmatprep.subr.bf16.mxu0 0
    %4365 = vmatpush2.bf16.msra.mxu0 %v4187
    %4366 = vmatprep.subr.bf16.mxu0 0
    %4367 = vmatpush2.bf16.msra.mxu0 %v4186
    %4368 = vmatprep.subr.bf16.mxu0 0
    %4369 = vmatpush2.bf16.msra.mxu0 %v4185
    %4370 = vmatprep.subr.bf16.mxu0 0
    %4371 = vmatpush2.bf16.msra.mxu0 %v4184
    %4372 = vmatprep.subr.bf16.mxu0 0
    %4373 = vmatpush2.bf16.msra.mxu0 %v4183
    %4374 = vmatprep.mubr.bf16.mxu0 %v3908
    %4375 = vmatmul.mubr.bf16.gmra.mxu0 %v3900
    %v4376 = vpop.f32.mrf.mxu0
    %v4377 = vadd.f32 %v4337, %v4376
    %v4378 = vpop.f32.mrf.mxu0
    %v4379 = vpop.f32.mrf.mxu0
    %v4380 = vpop.f32.mrf.mxu0
    %4381 = vdwg.mxu0
    %4382 = vmatprep.subr.bf16.mxu0 0
    %4383 = vmatpush1.bf16.msra.mxu0 %v4198
    %4384 = vmatprep.subr.bf16.mxu0 0
    %4385 = vmatpush1.bf16.msra.mxu0 %v4197
    %4386 = vmatprep.subr.bf16.mxu0 0
    %4387 = vmatpush1.bf16.msra.mxu0 %v4196
    %4388 = vmatprep.subr.bf16.mxu0 0
    %4389 = vmatpush1.bf16.msra.mxu0 %v4195
    %4390 = vmatprep.subr.bf16.mxu0 0
    %4391 = vmatpush1.bf16.msra.mxu0 %v4194
    %4392 = vmatprep.subr.bf16.mxu0 0
    %4393 = vmatpush1.bf16.msra.mxu0 %v4193
    %4394 = vmatprep.subr.bf16.mxu0 0
    %4395 = vmatpush1.bf16.msra.mxu0 %v4192
    %4396 = vmatprep.subr.bf16.mxu0 0
    %4397 = vmatpush1.bf16.msra.mxu0 %v4191
    %4398 = vmatprep.subr.bf16.mxu0 0
    %4399 = vmatpush2.bf16.msra.mxu0 0
    %4400 = vmatprep.subr.bf16.mxu0 0
    %4401 = vmatpush2.bf16.msra.mxu0 0
    %4402 = vmatprep.subr.bf16.mxu0 0
    %4403 = vmatpush2.bf16.msra.mxu0 0
    %4404 = vmatprep.subr.bf16.mxu0 0
    %4405 = vmatpush2.bf16.msra.mxu0 0
    %4406 = vmatprep.subr.bf16.mxu0 0
    %4407 = vmatpush2.bf16.msra.mxu0 0
    %4408 = vmatprep.subr.bf16.mxu0 0
    %4409 = vmatpush2.bf16.msra.mxu0 0
    %4410 = vmatprep.subr.bf16.mxu0 0
    %4411 = vmatpush2.bf16.msra.mxu0 0
    %4412 = vmatprep.subr.bf16.mxu0 0
    %4413 = vmatpush2.bf16.msra.mxu0 %v4260
    %4414 = vmatprep.mubr.bf16.mxu0 %v4257
    %4415 = vmatmul.mubr.bf16.gmra.mxu0 %v3907
    %v4416 = vpop.f32.mrf.mxu0
    %v4417 = vadd.f32 %v4377, %v4416
    %v4418 = vpop.f32.mrf.mxu0
    %v4419 = vpop.f32.mrf.mxu0
    %v4420 = vpop.f32.mrf.mxu0
    %4421 = vdwg.mxu0
    %v4422 = vadd.f32 %v3678, %v4417
    %s4423 = scalar_lea.vmem %s7, 48
    %v4424 = vld [vmem:[%s4423] sm:$0xff]
    %v4425 = vld [vmem:[%s4423 + $0x8] sm:$0xff]
    %v4426 = vlaneseq
    %v4427 = vshrl.u32 %v4426, 7
    %v4428 = vsub.s32 1, %v4427
    %v4429 = vrot.slane %v2915, %v4428
    %v4430 = vlaneseq
    %v4431 = vshrl.u32 %v4430, 7
    %v4432 = vsub.s32 1, %v4431
    %v4433 = vrot.slane %v2922, %v4432
    %v4434 = vlaneseq
    %v4435 = vshrl.u32 %v4434, 7
    %v4436 = vsub.s32 1, %v4435
    %v4437 = vrot.slane %v2929, %v4436
    %v4438 = vlaneseq
    %v4439 = vshrl.u32 %v4438, 7
    %v4440 = vsub.s32 1, %v4439
    %v4441 = vrot.slane %v2936, %v4440
    %v4442 = vlaneseq
    %v4443 = vshrl.u32 %v4442, 7
    %v4444 = vsub.s32 1, %v4443
    %v4445 = vrot.slane %v2943, %v4444
    %v4446 = vlaneseq
    %v4447 = vshrl.u32 %v4446, 7
    %v4448 = vsub.s32 1, %v4447
    %v4449 = vrot.slane %v2950, %v4448
    %v4450 = vlaneseq
    %v4451 = vshrl.u32 %v4450, 7
    %v4452 = vsub.s32 1, %v4451
    %v4453 = vrot.slane %v2957, %v4452
    %v4454 = vlaneseq
    %v4455 = vshrl.u32 %v4454, 7
    %v4456 = vsub.s32 1, %v4455
    %v4457 = vrot.slane %v2964, %v4456
    %v4466 = vcombine.low %v4429, %v4433
    %v4467 = vcombine.low %v4437, %v4441
    %v4469 = vunpack.c.l.s4 1983009808
    %v4470 = vunpack.c.0.s8 %v4469
    %v4471 = vlaneseq
    %v4472 = vshrl.u32 %v4471, 7
    %v4473 = vsub.s32 %v4470, %v4472
    %v4474 = vrot.slane %v4466, %v4473
    %v4476 = vunpack.c.l.s4 1983009808
    %v4477 = vunpack.c.0.s8 %v4476
    %v4478 = vlaneseq
    %v4479 = vshrl.u32 %v4478, 7
    %v4480 = vsub.s32 %v4477, %v4479
    %v4481 = vrot.slane %v4467, %v4480
    %v4482 = vcombine.low %v4474, %v4481
    %v4483 = vcombine.low %v4445, %v4449
    %v4484 = vcombine.low %v4453, %v4457
    %v4486 = vunpack.c.l.s4 1983009808
    %v4487 = vunpack.c.0.s8 %v4486
    %v4488 = vlaneseq
    %v4489 = vshrl.u32 %v4488, 7
    %v4490 = vsub.s32 %v4487, %v4489
    %v4491 = vrot.slane %v4483, %v4490
    %v4493 = vunpack.c.l.s4 1983009808
    %v4494 = vunpack.c.0.s8 %v4493
    %v4495 = vlaneseq
    %v4496 = vshrl.u32 %v4495, 7
    %v4497 = vsub.s32 %v4494, %v4496
    %v4498 = vrot.slane %v4484, %v4497
    %v4499 = vcombine.low %v4491, %v4498
    %v4502 = vmul.bf16 %v4424, %v4482
    %v4503 = vmul.bf16 %v4425, %v4499
    %s4504 = scalar_lea.vmem %s8, 1356
    %v4505 = vld [vmem:[%s4504] sm:$0xf]
    %v4506 = vld [vmem:[%s4504 + $0x4] sm:$0xf]
    %v4507 = vld [vmem:[%s4504 + $0x8] sm:$0xf]
    %v4508 = vld [vmem:[%s4504 + $0xc] sm:$0xf]
    %v4509 = vld [vmem:[%s4504 + $0x10] sm:$0xf]
    %v4510 = vld [vmem:[%s4504 + $0x14] sm:$0xf]
    %v4511 = vld [vmem:[%s4504 + $0x18] sm:$0xf]
    %v4512 = vld [vmem:[%s4504 + $0x1c] sm:$0xf]
    %v4513 = vld [vmem:[%s4504 + $0x20] sm:$0xf]
    %v4514 = vld [vmem:[%s4504 + $0x24] sm:$0xf]
    %v4515 = vld [vmem:[%s4504 + $0x28] sm:$0xf]
    %v4516 = vld [vmem:[%s4504 + $0x2c] sm:$0xf]
    %v4517 = vld [vmem:[%s4504 + $0x30] sm:$0xf]
    %v4518 = vld [vmem:[%s4504 + $0x34] sm:$0xf]
    %v4519 = vld [vmem:[%s4504 + $0x38] sm:$0xf]
    %v4520 = vld [vmem:[%s4504 + $0x3c] sm:$0xf]
    %v4521 = vld [vmem:[%s4504 + $0x40] sm:$0xf]
    %v4522 = vld [vmem:[%s4504 + $0x44] sm:$0xf]
    %v4523 = vld [vmem:[%s4504 + $0x48] sm:$0xf]
    %v4524 = vld [vmem:[%s4504 + $0x4c] sm:$0xf]
    %v4525 = vld [vmem:[%s4504 + $0x50] sm:$0xf]
    %v4526 = vld [vmem:[%s4504 + $0x54] sm:$0xf]
    %v4527 = vld [vmem:[%s4504 + $0x58] sm:$0xf]
    %v4528 = vld [vmem:[%s4504 + $0x5c] sm:$0xf]
    %v4529 = vld [vmem:[%s4504 + $0x60] sm:$0xf]
    %v4530 = vld [vmem:[%s4504 + $0x64] sm:$0xf]
    %v4531 = vld [vmem:[%s4504 + $0x68] sm:$0xf]
    %v4532 = vld [vmem:[%s4504 + $0x6c] sm:$0xf]
    %v4533 = vld [vmem:[%s4504 + $0x70] sm:$0xf]
    %v4534 = vld [vmem:[%s4504 + $0x74] sm:$0xf]
    %v4535 = vld [vmem:[%s4504 + $0x78] sm:$0xf]
    %v4536 = vld [vmem:[%s4504 + $0x7c] sm:$0xf]
    %v4537 = vld [vmem:[%s4504 + $0x80] sm:$0xf]
    %v4538 = vld [vmem:[%s4504 + $0x84] sm:$0xf]
    %v4539 = vld [vmem:[%s4504 + $0x88] sm:$0xf]
    %v4540 = vld [vmem:[%s4504 + $0x8c] sm:$0xf]
    %v4541 = vld [vmem:[%s4504 + $0x90] sm:$0xf]
    %v4542 = vld [vmem:[%s4504 + $0x94] sm:$0xf]
    %v4543 = vld [vmem:[%s4504 + $0x98] sm:$0xf]
    %v4544 = vld [vmem:[%s4504 + $0x9c] sm:$0xf]
    %v4545 = vld [vmem:[%s4504 + $0xa0] sm:$0xf]
    %v4546 = vld [vmem:[%s4504 + $0xa4] sm:$0xf]
    %v4547 = vld [vmem:[%s4504 + $0xa8] sm:$0xf]
    %v4548 = vld [vmem:[%s4504 + $0xac] sm:$0xf]
    %v4549 = vld [vmem:[%s4504 + $0xb0] sm:$0xf]
    %v4550 = vld [vmem:[%s4504 + $0xb4] sm:$0xf]
    %v4551 = vld [vmem:[%s4504 + $0xb8] sm:$0xf]
    %v4552 = vld [vmem:[%s4504 + $0xbc] sm:$0xf]
    %v4553 = vld [vmem:[%s4504 + $0xc0] sm:$0xf]
    %v4554 = vld [vmem:[%s4504 + $0xc4] sm:$0xf]
    %v4555 = vld [vmem:[%s4504 + $0xc8] sm:$0xf]
    %v4556 = vld [vmem:[%s4504 + $0xcc] sm:$0xf]
    %v4557 = vld [vmem:[%s4504 + $0xd0] sm:$0xf]
    %v4558 = vld [vmem:[%s4504 + $0xd4] sm:$0xf]
    %v4559 = vld [vmem:[%s4504 + $0xd8] sm:$0xf]
    %v4560 = vld [vmem:[%s4504 + $0xdc] sm:$0xf]
    %v4561 = vld [vmem:[%s4504 + $0xe0] sm:$0xf]
    %v4562 = vld [vmem:[%s4504 + $0xe4] sm:$0xf]
    %v4563 = vld [vmem:[%s4504 + $0xe8] sm:$0xf]
    %v4564 = vld [vmem:[%s4504 + $0xec] sm:$0xf]
    %v4565 = vld [vmem:[%s4504 + $0xf0] sm:$0xf]
    %v4566 = vld [vmem:[%s4504 + $0xf4] sm:$0xf]
    %v4567 = vld [vmem:[%s4504 + $0xf8] sm:$0xf]
    %v4568 = vld [vmem:[%s4504 + $0xfc] sm:$0xf]
    %v4569 = vld [vmem:[%s4504 + $0x100] sm:$0xf]
    %v4570 = vld [vmem:[%s4504 + $0x104] sm:$0xf]
    %v4571 = vld [vmem:[%s4504 + $0x108] sm:$0xf]
    %v4572 = vld [vmem:[%s4504 + $0x10c] sm:$0xf]
    %v4573 = vld [vmem:[%s4504 + $0x110] sm:$0xf]
    %v4574 = vld [vmem:[%s4504 + $0x114] sm:$0xf]
    %v4575 = vld [vmem:[%s4504 + $0x118] sm:$0xf]
    %v4576 = vld [vmem:[%s4504 + $0x11c] sm:$0xf]
    %v4577 = vld [vmem:[%s4504 + $0x120] sm:$0xf]
    %v4578 = vld [vmem:[%s4504 + $0x124] sm:$0xf]
    %v4579 = vld [vmem:[%s4504 + $0x128] sm:$0xf]
    %v4580 = vld [vmem:[%s4504 + $0x12c] sm:$0xf]
    %v4581 = vld [vmem:[%s4504 + $0x130] sm:$0xf]
    %v4582 = vld [vmem:[%s4504 + $0x134] sm:$0xf]
    %v4583 = vld [vmem:[%s4504 + $0x138] sm:$0xf]
    %v4584 = vld [vmem:[%s4504 + $0x13c] sm:$0xf]
    %v4585 = vld [vmem:[%s4504 + $0x140] sm:$0xf]
    %v4586 = vld [vmem:[%s4504 + $0x144] sm:$0xf]
    %v4587 = vld [vmem:[%s4504 + $0x148] sm:$0xf]
    %v4588 = vld [vmem:[%s4504 + $0x14c] sm:$0xf]
    %v4589 = vld [vmem:[%s4504 + $0x150] sm:$0xf]
    %v4590 = vld [vmem:[%s4504 + $0x154] sm:$0xf]
    %v4591 = vld [vmem:[%s4504 + $0x158] sm:$0xf]
    %v4592 = vld [vmem:[%s4504 + $0x15c] sm:$0xf]
    %v4593 = vld [vmem:[%s4504 + $0x160] sm:$0xf]
    %v4594 = vld [vmem:[%s4504 + $0x164] sm:$0xf]
    %v4595 = vld [vmem:[%s4504 + $0x168] sm:$0xf]
    %v4596 = vld [vmem:[%s4504 + $0x16c] sm:$0xf]
    %v4597 = vld [vmem:[%s4504 + $0x170] sm:$0xf]
    %v4598 = vld [vmem:[%s4504 + $0x174] sm:$0xf]
    %v4599 = vld [vmem:[%s4504 + $0x178] sm:$0xf]
    %v4600 = vld [vmem:[%s4504 + $0x17c] sm:$0xf]
    %v4601 = vld [vmem:[%s4504 + $0x180] sm:$0xf]
    %v4602 = vld [vmem:[%s4504 + $0x184] sm:$0xf]
    %v4603 = vld [vmem:[%s4504 + $0x188] sm:$0xf]
    %v4604 = vld [vmem:[%s4504 + $0x18c] sm:$0xf]
    %v4605 = vld [vmem:[%s4504 + $0x190] sm:$0xf]
    %v4606 = vld [vmem:[%s4504 + $0x194] sm:$0xf]
    %v4607 = vld [vmem:[%s4504 + $0x198] sm:$0xf]
    %v4608 = vld [vmem:[%s4504 + $0x19c] sm:$0xf]
    %v4609 = vld [vmem:[%s4504 + $0x1a0] sm:$0xf]
    %v4610 = vld [vmem:[%s4504 + $0x1a4] sm:$0xf]
    %v4611 = vld [vmem:[%s4504 + $0x1a8] sm:$0xf]
    %v4612 = vld [vmem:[%s4504 + $0x1ac] sm:$0xf]
    %v4613 = vld [vmem:[%s4504 + $0x1b0] sm:$0xf]
    %v4614 = vld [vmem:[%s4504 + $0x1b4] sm:$0xf]
    %v4615 = vld [vmem:[%s4504 + $0x1b8] sm:$0xf]
    %v4616 = vld [vmem:[%s4504 + $0x1bc] sm:$0xf]
    %v4617 = vld [vmem:[%s4504 + $0x1c0] sm:$0x3]
    %v4620 = vcombine.high %v4502, %v4502
    %v4622 = vunpack.c.l.s4 1983009808
    %v4623 = vunpack.c.0.s8 %v4622
    %v4624 = vlaneseq
    %v4625 = vshrl.u32 %v4624, 7
    %v4626 = vsub.s32 %v4623, %v4625
    %v4627 = vrot.slane %v4502, %v4626
    %v4629 = vunpack.c.l.s4 1983009808
    %v4630 = vunpack.c.0.s8 %v4629
    %v4631 = vlaneseq
    %v4632 = vshrl.u32 %v4631, 7
    %v4633 = vsub.s32 %v4630, %v4632
    %v4634 = vrot.slane %v4620, %v4633
    %v4635 = vcombine.high %v4627, %v4627
    %v4636 = vcombine.high %v4634, %v4634
    %v4637 = vcombine.high %v4503, %v4503
    %v4639 = vunpack.c.l.s4 1983009808
    %v4640 = vunpack.c.0.s8 %v4639
    %v4641 = vlaneseq
    %v4642 = vshrl.u32 %v4641, 7
    %v4643 = vsub.s32 %v4640, %v4642
    %v4644 = vrot.slane %v4503, %v4643
    %v4646 = vunpack.c.l.s4 1983009808
    %v4647 = vunpack.c.0.s8 %v4646
    %v4648 = vlaneseq
    %v4649 = vshrl.u32 %v4648, 7
    %v4650 = vsub.s32 %v4647, %v4649
    %v4651 = vrot.slane %v4637, %v4650
    %v4652 = vcombine.high %v4644, %v4644
    %v4653 = vcombine.high %v4651, %v4651
    %v4774 = vunpack.c.l.b16 %v4505
    %v4775 = vunpack.c.l.b16 %v4506
    %v4776 = vunpack.c.l.b16 %v4507
    %v4777 = vunpack.c.l.b16 %v4508
    %v4778 = vunpack.c.l.b16 %v4509
    %v4779 = vunpack.c.l.b16 %v4510
    %v4780 = vunpack.c.l.b16 %v4511
    %v4781 = vunpack.c.l.b16 %v4512
    %v4782 = vunpack.c.l.b16 %v4513
    %v4783 = vunpack.c.l.b16 %v4514
    %v4784 = vunpack.c.l.b16 %v4515
    %v4785 = vunpack.c.l.b16 %v4516
    %v4786 = vunpack.c.l.b16 %v4517
    %v4787 = vunpack.c.l.b16 %v4518
    %v4788 = vunpack.c.l.b16 %v4519
    %v4789 = vunpack.c.l.b16 %v4520
    %v4790 = vunpack.c.l.b16 %v4521
    %v4791 = vunpack.c.l.b16 %v4522
    %v4792 = vunpack.c.l.b16 %v4523
    %v4793 = vunpack.c.l.b16 %v4524
    %v4794 = vunpack.c.l.b16 %v4525
    %v4795 = vunpack.c.l.b16 %v4526
    %v4796 = vunpack.c.l.b16 %v4527
    %v4797 = vunpack.c.l.b16 %v4528
    %v4798 = vunpack.c.l.b16 %v4529
    %v4799 = vunpack.c.l.b16 %v4530
    %v4800 = vunpack.c.l.b16 %v4531
    %v4801 = vunpack.c.l.b16 %v4532
    %v4802 = vunpack.c.l.b16 %v4533
    %v4803 = vunpack.c.l.b16 %v4534
    %v4804 = vunpack.c.l.b16 %v4535
    %v4805 = vunpack.c.l.b16 %v4536
    %v4806 = vunpack.c.l.b16 %v4537
    %v4807 = vunpack.c.l.b16 %v4538
    %v4808 = vunpack.c.l.b16 %v4539
    %v4809 = vunpack.c.l.b16 %v4540
    %v4810 = vunpack.c.l.b16 %v4541
    %v4811 = vunpack.c.l.b16 %v4542
    %v4812 = vunpack.c.l.b16 %v4543
    %v4813 = vunpack.c.l.b16 %v4544
    %v4814 = vunpack.c.l.b16 %v4545
    %v4815 = vunpack.c.l.b16 %v4546
    %v4816 = vunpack.c.l.b16 %v4547
    %v4817 = vunpack.c.l.b16 %v4548
    %v4818 = vunpack.c.l.b16 %v4549
    %v4819 = vunpack.c.l.b16 %v4550
    %v4820 = vunpack.c.l.b16 %v4551
    %v4821 = vunpack.c.l.b16 %v4552
    %v4822 = vunpack.c.l.b16 %v4553
    %v4823 = vunpack.c.l.b16 %v4554
    %v4824 = vunpack.c.l.b16 %v4555
    %v4825 = vunpack.c.l.b16 %v4556
    %v4826 = vunpack.c.l.b16 %v4557
    %v4827 = vunpack.c.l.b16 %v4558
    %v4828 = vunpack.c.l.b16 %v4559
    %v4829 = vunpack.c.l.b16 %v4560
    %v4830 = vunpack.c.l.b16 %v4561
    %v4831 = vunpack.c.l.b16 %v4562
    %v4832 = vunpack.c.l.b16 %v4563
    %v4833 = vunpack.c.l.b16 %v4564
    %v4834 = vunpack.c.l.b16 %v4565
    %v4835 = vunpack.c.l.b16 %v4566
    %v4836 = vunpack.c.l.b16 %v4567
    %v4837 = vunpack.c.l.b16 %v4568
    %v4838 = vunpack.c.l.b16 %v4569
    %v4839 = vunpack.c.l.b16 %v4570
    %v4840 = vunpack.c.l.b16 %v4571
    %v4841 = vunpack.c.l.b16 %v4572
    %v4842 = vunpack.c.l.b16 %v4573
    %v4843 = vunpack.c.l.b16 %v4574
    %v4844 = vunpack.c.l.b16 %v4575
    %v4845 = vunpack.c.l.b16 %v4576
    %v4846 = vunpack.c.l.b16 %v4577
    %v4847 = vunpack.c.l.b16 %v4578
    %v4848 = vunpack.c.l.b16 %v4579
    %v4849 = vunpack.c.l.b16 %v4580
    %v4850 = vunpack.c.l.b16 %v4581
    %v4851 = vunpack.c.l.b16 %v4582
    %v4852 = vunpack.c.l.b16 %v4583
    %v4853 = vunpack.c.l.b16 %v4584
    %v4854 = vunpack.c.l.b16 %v4585
    %v4855 = vunpack.c.l.b16 %v4586
    %v4856 = vunpack.c.l.b16 %v4587
    %v4857 = vunpack.c.l.b16 %v4588
    %v4858 = vunpack.c.l.b16 %v4589
    %v4859 = vunpack.c.l.b16 %v4590
    %v4860 = vunpack.c.l.b16 %v4591
    %v4861 = vunpack.c.l.b16 %v4592
    %v4862 = vunpack.c.l.b16 %v4593
    %v4863 = vunpack.c.l.b16 %v4594
    %v4864 = vunpack.c.l.b16 %v4595
    %v4865 = vunpack.c.l.b16 %v4596
    %v4866 = vunpack.c.l.b16 %v4597
    %v4867 = vunpack.c.l.b16 %v4598
    %v4868 = vunpack.c.l.b16 %v4599
    %v4869 = vunpack.c.l.b16 %v4600
    %v4870 = vunpack.c.l.b16 %v4601
    %v4871 = vunpack.c.l.b16 %v4602
    %v4872 = vunpack.c.l.b16 %v4603
    %v4873 = vunpack.c.l.b16 %v4604
    %v4874 = vunpack.c.l.b16 %v4605
    %v4875 = vunpack.c.l.b16 %v4606
    %v4876 = vunpack.c.l.b16 %v4607
    %v4877 = vunpack.c.l.b16 %v4608
    %v4878 = vunpack.c.l.b16 %v4609
    %v4879 = vunpack.c.l.b16 %v4610
    %v4880 = vunpack.c.l.b16 %v4611
    %v4881 = vunpack.c.l.b16 %v4612
    %v4882 = vunpack.c.l.b16 %v4613
    %v4883 = vunpack.c.l.b16 %v4614
    %v4884 = vunpack.c.l.b16 %v4615
    %v4885 = vunpack.c.l.b16 %v4616
    %v4886 = vunpack.c.l.b16 %v4617
    %v4887 = vpack.c.b16 %v4775, %v4774
    %v4888 = vpack.c.b16 %v4777, %v4776
    %v4889 = vpack.c.b16 %v4779, %v4778
    %v4890 = vpack.c.b16 %v4781, %v4780
    %v4891 = vpack.c.b16 %v4783, %v4782
    %v4892 = vpack.c.b16 %v4785, %v4784
    %v4893 = vpack.c.b16 %v4787, %v4786
    %v4894 = vpack.c.b16 %v4789, %v4788
    %v4895 = vpack.c.b16 %v4791, %v4790
    %v4896 = vpack.c.b16 %v4793, %v4792
    %v4897 = vpack.c.b16 %v4795, %v4794
    %v4898 = vpack.c.b16 %v4797, %v4796
    %v4899 = vpack.c.b16 %v4799, %v4798
    %v4900 = vpack.c.b16 %v4801, %v4800
    %v4901 = vpack.c.b16 %v4803, %v4802
    %v4902 = vpack.c.b16 %v4805, %v4804
    %v4903 = vpack.c.b16 %v4807, %v4806
    %v4904 = vpack.c.b16 %v4809, %v4808
    %v4905 = vpack.c.b16 %v4811, %v4810
    %v4906 = vpack.c.b16 %v4813, %v4812
    %v4907 = vpack.c.b16 %v4815, %v4814
    %v4908 = vpack.c.b16 %v4817, %v4816
    %v4909 = vpack.c.b16 %v4819, %v4818
    %v4910 = vpack.c.b16 %v4821, %v4820
    %v4911 = vpack.c.b16 %v4823, %v4822
    %v4912 = vpack.c.b16 %v4825, %v4824
    %v4913 = vpack.c.b16 %v4827, %v4826
    %v4914 = vpack.c.b16 %v4829, %v4828
    %v4915 = vpack.c.b16 %v4831, %v4830
    %v4916 = vpack.c.b16 %v4833, %v4832
    %v4917 = vpack.c.b16 %v4835, %v4834
    %v4918 = vpack.c.b16 %v4837, %v4836
    %v4919 = vpack.c.b16 %v4839, %v4838
    %v4920 = vpack.c.b16 %v4841, %v4840
    %v4921 = vpack.c.b16 %v4843, %v4842
    %v4922 = vpack.c.b16 %v4845, %v4844
    %v4923 = vpack.c.b16 %v4847, %v4846
    %v4924 = vpack.c.b16 %v4849, %v4848
    %v4925 = vpack.c.b16 %v4851, %v4850
    %v4926 = vpack.c.b16 %v4853, %v4852
    %v4927 = vpack.c.b16 %v4855, %v4854
    %v4928 = vpack.c.b16 %v4857, %v4856
    %v4929 = vpack.c.b16 %v4859, %v4858
    %v4930 = vpack.c.b16 %v4861, %v4860
    %v4931 = vpack.c.b16 %v4863, %v4862
    %v4932 = vpack.c.b16 %v4865, %v4864
    %v4933 = vpack.c.b16 %v4867, %v4866
    %v4934 = vpack.c.b16 %v4869, %v4868
    %v4935 = vpack.c.b16 %v4871, %v4870
    %v4936 = vpack.c.b16 %v4873, %v4872
    %v4937 = vpack.c.b16 %v4875, %v4874
    %v4938 = vpack.c.b16 %v4877, %v4876
    %v4939 = vpack.c.b16 %v4879, %v4878
    %v4940 = vpack.c.b16 %v4881, %v4880
    %v4941 = vpack.c.b16 %v4883, %v4882
    %v4942 = vpack.c.b16 %v4885, %v4884
    %v4943 = vpack.c.b16 %v4886, %v4886
    %v5001 = vsel %vm2742, %v4653, 0
    %v5004 = vsel %vm2746, %v4943, 0
    %5006 = vmatprep.subr.bf16.mxu0 0
    %5007 = vmatpush1.bf16.msra.mxu0 %v4894
    %5008 = vmatprep.subr.bf16.mxu0 0
    %5009 = vmatpush1.bf16.msra.mxu0 %v4893
    %5010 = vmatprep.subr.bf16.mxu0 0
    %5011 = vmatpush1.bf16.msra.mxu0 %v4892
    %5012 = vmatprep.subr.bf16.mxu0 0
    %5013 = vmatpush1.bf16.msra.mxu0 %v4891
    %5014 = vmatprep.subr.bf16.mxu0 0
    %5015 = vmatpush1.bf16.msra.mxu0 %v4890
    %5016 = vmatprep.subr.bf16.mxu0 0
    %5017 = vmatpush1.bf16.msra.mxu0 %v4889
    %5018 = vmatprep.subr.bf16.mxu0 0
    %5019 = vmatpush1.bf16.msra.mxu0 %v4888
    %5020 = vmatprep.subr.bf16.mxu0 0
    %5021 = vmatpush1.bf16.msra.mxu0 %v4887
    %5022 = vmatprep.subr.bf16.mxu0 0
    %5023 = vmatpush2.bf16.msra.mxu0 %v4902
    %5024 = vmatprep.subr.bf16.mxu0 0
    %5025 = vmatpush2.bf16.msra.mxu0 %v4901
    %5026 = vmatprep.subr.bf16.mxu0 0
    %5027 = vmatpush2.bf16.msra.mxu0 %v4900
    %5028 = vmatprep.subr.bf16.mxu0 0
    %5029 = vmatpush2.bf16.msra.mxu0 %v4899
    %5030 = vmatprep.subr.bf16.mxu0 0
    %5031 = vmatpush2.bf16.msra.mxu0 %v4898
    %5032 = vmatprep.subr.bf16.mxu0 0
    %5033 = vmatpush2.bf16.msra.mxu0 %v4897
    %5034 = vmatprep.subr.bf16.mxu0 0
    %5035 = vmatpush2.bf16.msra.mxu0 %v4896
    %5036 = vmatprep.subr.bf16.mxu0 0
    %5037 = vmatpush2.bf16.msra.mxu0 %v4895
    %5038 = vmatprep.mubr.bf16.mxu0 %v4635
    %5039 = vmatmul.mubr.bf16.gmra.mxu0 %v4627
    %v5040 = vpop.f32.mrf.mxu0
    %v5041 = vadd.f32 0.0, %v5040
    %v5042 = vpop.f32.mrf.mxu0
    %v5043 = vpop.f32.mrf.mxu0
    %v5044 = vpop.f32.mrf.mxu0
    %5045 = vdwg.mxu0
    %5046 = vmatprep.subr.bf16.mxu0 0
    %5047 = vmatpush1.bf16.msra.mxu0 %v4910
    %5048 = vmatprep.subr.bf16.mxu0 0
    %5049 = vmatpush1.bf16.msra.mxu0 %v4909
    %5050 = vmatprep.subr.bf16.mxu0 0
    %5051 = vmatpush1.bf16.msra.mxu0 %v4908
    %5052 = vmatprep.subr.bf16.mxu0 0
    %5053 = vmatpush1.bf16.msra.mxu0 %v4907
    %5054 = vmatprep.subr.bf16.mxu0 0
    %5055 = vmatpush1.bf16.msra.mxu0 %v4906
    %5056 = vmatprep.subr.bf16.mxu0 0
    %5057 = vmatpush1.bf16.msra.mxu0 %v4905
    %5058 = vmatprep.subr.bf16.mxu0 0
    %5059 = vmatpush1.bf16.msra.mxu0 %v4904
    %5060 = vmatprep.subr.bf16.mxu0 0
    %5061 = vmatpush1.bf16.msra.mxu0 %v4903
    %5062 = vmatprep.subr.bf16.mxu0 0
    %5063 = vmatpush2.bf16.msra.mxu0 %v4918
    %5064 = vmatprep.subr.bf16.mxu0 0
    %5065 = vmatpush2.bf16.msra.mxu0 %v4917
    %5066 = vmatprep.subr.bf16.mxu0 0
    %5067 = vmatpush2.bf16.msra.mxu0 %v4916
    %5068 = vmatprep.subr.bf16.mxu0 0
    %5069 = vmatpush2.bf16.msra.mxu0 %v4915
    %5070 = vmatprep.subr.bf16.mxu0 0
    %5071 = vmatpush2.bf16.msra.mxu0 %v4914
    %5072 = vmatprep.subr.bf16.mxu0 0
    %5073 = vmatpush2.bf16.msra.mxu0 %v4913
    %5074 = vmatprep.subr.bf16.mxu0 0
    %5075 = vmatpush2.bf16.msra.mxu0 %v4912
    %5076 = vmatprep.subr.bf16.mxu0 0
    %5077 = vmatpush2.bf16.msra.mxu0 %v4911
    %5078 = vmatprep.mubr.bf16.mxu0 %v4636
    %5079 = vmatmul.mubr.bf16.gmra.mxu0 %v4634
    %v5080 = vpop.f32.mrf.mxu0
    %v5081 = vadd.f32 %v5041, %v5080
    %v5082 = vpop.f32.mrf.mxu0
    %v5083 = vpop.f32.mrf.mxu0
    %v5084 = vpop.f32.mrf.mxu0
    %5085 = vdwg.mxu0
    %5086 = vmatprep.subr.bf16.mxu0 0
    %5087 = vmatpush1.bf16.msra.mxu0 %v4926
    %5088 = vmatprep.subr.bf16.mxu0 0
    %5089 = vmatpush1.bf16.msra.mxu0 %v4925
    %5090 = vmatprep.subr.bf16.mxu0 0
    %5091 = vmatpush1.bf16.msra.mxu0 %v4924
    %5092 = vmatprep.subr.bf16.mxu0 0
    %5093 = vmatpush1.bf16.msra.mxu0 %v4923
    %5094 = vmatprep.subr.bf16.mxu0 0
    %5095 = vmatpush1.bf16.msra.mxu0 %v4922
    %5096 = vmatprep.subr.bf16.mxu0 0
    %5097 = vmatpush1.bf16.msra.mxu0 %v4921
    %5098 = vmatprep.subr.bf16.mxu0 0
    %5099 = vmatpush1.bf16.msra.mxu0 %v4920
    %5100 = vmatprep.subr.bf16.mxu0 0
    %5101 = vmatpush1.bf16.msra.mxu0 %v4919
    %5102 = vmatprep.subr.bf16.mxu0 0
    %5103 = vmatpush2.bf16.msra.mxu0 %v4934
    %5104 = vmatprep.subr.bf16.mxu0 0
    %5105 = vmatpush2.bf16.msra.mxu0 %v4933
    %5106 = vmatprep.subr.bf16.mxu0 0
    %5107 = vmatpush2.bf16.msra.mxu0 %v4932
    %5108 = vmatprep.subr.bf16.mxu0 0
    %5109 = vmatpush2.bf16.msra.mxu0 %v4931
    %5110 = vmatprep.subr.bf16.mxu0 0
    %5111 = vmatpush2.bf16.msra.mxu0 %v4930
    %5112 = vmatprep.subr.bf16.mxu0 0
    %5113 = vmatpush2.bf16.msra.mxu0 %v4929
    %5114 = vmatprep.subr.bf16.mxu0 0
    %5115 = vmatpush2.bf16.msra.mxu0 %v4928
    %5116 = vmatprep.subr.bf16.mxu0 0
    %5117 = vmatpush2.bf16.msra.mxu0 %v4927
    %5118 = vmatprep.mubr.bf16.mxu0 %v4652
    %5119 = vmatmul.mubr.bf16.gmra.mxu0 %v4644
    %v5120 = vpop.f32.mrf.mxu0
    %v5121 = vadd.f32 %v5081, %v5120
    %v5122 = vpop.f32.mrf.mxu0
    %v5123 = vpop.f32.mrf.mxu0
    %v5124 = vpop.f32.mrf.mxu0
    %5125 = vdwg.mxu0
    %5126 = vmatprep.subr.bf16.mxu0 0
    %5127 = vmatpush1.bf16.msra.mxu0 %v4942
    %5128 = vmatprep.subr.bf16.mxu0 0
    %5129 = vmatpush1.bf16.msra.mxu0 %v4941
    %5130 = vmatprep.subr.bf16.mxu0 0
    %5131 = vmatpush1.bf16.msra.mxu0 %v4940
    %5132 = vmatprep.subr.bf16.mxu0 0
    %5133 = vmatpush1.bf16.msra.mxu0 %v4939
    %5134 = vmatprep.subr.bf16.mxu0 0
    %5135 = vmatpush1.bf16.msra.mxu0 %v4938
    %5136 = vmatprep.subr.bf16.mxu0 0
    %5137 = vmatpush1.bf16.msra.mxu0 %v4937
    %5138 = vmatprep.subr.bf16.mxu0 0
    %5139 = vmatpush1.bf16.msra.mxu0 %v4936
    %5140 = vmatprep.subr.bf16.mxu0 0
    %5141 = vmatpush1.bf16.msra.mxu0 %v4935
    %5142 = vmatprep.subr.bf16.mxu0 0
    %5143 = vmatpush2.bf16.msra.mxu0 0
    %5144 = vmatprep.subr.bf16.mxu0 0
    %5145 = vmatpush2.bf16.msra.mxu0 0
    %5146 = vmatprep.subr.bf16.mxu0 0
    %5147 = vmatpush2.bf16.msra.mxu0 0
    %5148 = vmatprep.subr.bf16.mxu0 0
    %5149 = vmatpush2.bf16.msra.mxu0 0
    %5150 = vmatprep.subr.bf16.mxu0 0
    %5151 = vmatpush2.bf16.msra.mxu0 0
    %5152 = vmatprep.subr.bf16.mxu0 0
    %5153 = vmatpush2.bf16.msra.mxu0 0
    %5154 = vmatprep.subr.bf16.mxu0 0
    %5155 = vmatpush2.bf16.msra.mxu0 0
    %5156 = vmatprep.subr.bf16.mxu0 0
    %5157 = vmatpush2.bf16.msra.mxu0 %v5004
    %5158 = vmatprep.mubr.bf16.mxu0 %v5001
    %5159 = vmatmul.mubr.bf16.gmra.mxu0 %v4651
    %v5160 = vpop.f32.mrf.mxu0
    %v5161 = vadd.f32 %v5121, %v5160
    %v5162 = vpop.f32.mrf.mxu0
    %v5163 = vpop.f32.mrf.mxu0
    %v5164 = vpop.f32.mrf.mxu0
    %5165 = vdwg.mxu0
    %v5166 = vadd.f32 %v4422, %v5161
    %vm5167 = vcmask 125952
    %5168 = vst.msk [vmem:[#allocation2] sm:$0xf] %vm5167, %v5166
    // Predicated region
    $region42: #{tpu_custom_call.1} parent=1 // pred_check
      _
    $region43: #{tpu_custom_call.1} parent=1 // pred_check_branch
      %5170 = sbr.rel (0) target = $region45
    $region44: #{tpu_custom_call.1} parent=1 // pred_region
      %s5172 = ssub.s32 64, 64
      %5173 = vsyncadd [#allocation3], %s5172
      %s5175 = sshll.u32 [#allocation2], 4
      %s5176 = int_to_ptr.vmem [resolvable:$true] %s5175
      %5178 = dma.vmem_to_hbm [thread:$0]  %s5176, 64, %s10, [#allocation3]
    $region45: #{tpu_custom_call.1} parent=1 // pred_fallthru
      _
    // Predicated region
    $region46: #{tpu_custom_call.1} parent=1 // pred_check
      _
    $region47: #{tpu_custom_call.1} parent=1 // pred_check_branch
      %5180 = sbr.rel (0) target = $region49
    $region48: #{tpu_custom_call.1} parent=1 // pred_region
      %5181 = dma.done [#allocation3], 64
    $region49: #{tpu_custom_call.1} parent=1 // pred_fallthru
      _
    %5182 = vsyncpa [#allocation3], 1

</llo_original>
